<compile_context>
chip_gen: v7x
topology: tpu7x:2x2x1
jax: 0.10.0
libtpu: 0.0.40
codegen_flags: <defaults>
</compile_context>

<pallas_src>
import functools

import numpy as np
import jax
import jax.numpy as jnp
from jax.experimental import pallas as pl
from jax.experimental.pallas import tpu as pltpu


# ------------------------- Pallas kernel -------------------------
def _double_conv_kernel(x_ref, w1_ref, w2_ref, mask_ref, o_ref, *,
                        shifts, dpad, coutp, inv_p, eps=1e-5):
    # x_ref:    (1, Dp*Cin,   Lhw)      f32  one sample; rows = dp*Cin + cin, lanes = padded Hp*Wp
    # w1_ref:   (9, Dp*Coutp, Dp*Cin)   bf16 depth-banded conv1 weights, one slab per (kh, kw)
    # w2_ref:   (9, Dp*Coutp, Dp*Coutp) bf16 depth-banded conv2 weights
    # mask_ref: (Dp*Coutp, Lhw)         f32  1.0 on interior voxels, 0.0 on halo / lane padding
    # o_ref:    (1, Dp*Coutp, Lhw)      f32
    mask = mask_ref[...]                       # hoisted once, shared by both conv layers

    def conv_in_relu(inp, w_ref):
        rout, lhw = w_ref.shape[1], inp.shape[-1]
        # Conv: 9 in-plane taps = 9 static lane rolls of the zero-halo volume; the 3 depth taps
        # live in the block-banded weight rows -> 9 accumulated MXU matmuls, no patch buffer,
        # no boundary-mask multiplies (halo rows/cols are genuine zeros).
        y = jnp.zeros((rout, lhw), jnp.float32)
        for t, shift in enumerate(shifts):
            tap = inp if shift == 0 else pltpu.roll(inp, shift, 1)
            y = y + jnp.dot(w_ref[t], tap.astype(jnp.bfloat16),
                            preferred_element_type=jnp.float32)

        # InstanceNorm3d (affine=False) + ReLU; stats over interior voxels only.
        ym = y * mask
        rowsum = jnp.sum(ym, axis=1, keepdims=True)           # (rout, 1) lane reductions
        rowssq = jnp.sum(ym * ym, axis=1, keepdims=True)
        csum, cssq = rowsum[0:coutp], rowssq[0:coutp]          # fold depth rows per channel
        for i in range(1, dpad):                               # (aligned: coutp % 8 == 0)
            csum = csum + rowsum[i * coutp:(i + 1) * coutp]
            cssq = cssq + rowssq[i * coutp:(i + 1) * coutp]
        mean = csum * inv_p                                    # (Coutp, 1)
        var = jnp.maximum(cssq * inv_p - mean * mean, 0.0)     # clamp: f32 cancellation
        inv_std = jax.lax.rsqrt(var + eps)
        mean_r = jnp.concatenate([mean] * dpad, axis=0)        # broadcast back to rows,
        scale_r = jnp.concatenate([inv_std] * dpad, axis=0)    # sublane-aligned concat
        # ReLU + re-zero halo/padding (required: conv2's rolls read these positions).
        return jnp.maximum((ym - mean_r) * scale_r, 0.0) * mask

    y1 = conv_in_relu(x_ref[0], w1_ref)        # conv1 -> IN -> ReLU (stays in VMEM, f32)
    o_ref[0] = conv_in_relu(y1, w2_ref)        # conv2 -> IN -> ReLU


def double_conv(x_rows, wb1, wb2, mask, shifts, dpad, coutp, p_true):
    """x_rows: (N, Dp*Cin, Lhw) f32; wb1/wb2: (9, Dp*Coutp, Dp*C) bf16 banded weights;
       mask: (Dp*Coutp, Lhw) f32  ->  (N, Dp*Coutp, Lhw) f32."""
    N, rin, lhw = x_rows.shape
    rout = wb1.shape[1]
    kernel = functools.partial(_double_conv_kernel, shifts=shifts, dpad=dpad,
                               coutp=coutp, inv_p=1.0 / p_true)
    flops = 2 * N * 9 * lhw * rout * (rin + rout)
    bytes_accessed = (x_rows.size * 4 + N * rout * lhw * 4 +
                      wb1.size * 2 + wb2.size * 2 + mask.size * 4)
    return pl.pallas_call(
        kernel,
        out_shape=jax.ShapeDtypeStruct((N, rout, lhw), jnp.float32),
        grid_spec=pltpu.PrefetchScalarGridSpec(
            num_scalar_prefetch=0,
            grid=(N,),
            in_specs=[
                pl.BlockSpec((1, rin, lhw), lambda n: (n, 0, 0)),
                pl.BlockSpec(wb1.shape, lambda n: (0, 0, 0)),
                pl.BlockSpec(wb2.shape, lambda n: (0, 0, 0)),
                pl.BlockSpec(mask.shape, lambda n: (0, 0)),
            ],
            out_specs=pl.BlockSpec((1, rout, lhw), lambda n: (n, 0, 0)),
        ),
        compiler_params=pltpu.CompilerParams(dimension_semantics=("parallel",)),
        cost_estimate=pl.CostEstimate(
            flops=flops, transcendentals=2 * N * coutp, bytes_accessed=bytes_accessed),
    )(x_rows, wb1, wb2, mask)


# ------------------------- plain-JAX glue -------------------------
def _banded_weights(w, dpad, cin_rows, cout_rows):
    """PyTorch OIDHW (Cout, Cin, 3, 3, 3) -> (9, dpad*cout_rows, dpad*cin_rows) bf16
    block-banded matrices (one per in-plane (kh, kw) tap).  The 3 depth taps become the
    0/+-1 block off-diagonals, so depth zero-padding falls out of the zero halo rows."""
    w_np = np.asarray(jax.device_get(w), np.float32)
    cout, cin = w_np.shape[0], w_np.shape[1]
    wb = np.zeros((3, 3, dpad * cout_rows, dpad * cin_rows), np.float32)
    for kh in range(3):
        for kw in range(3):
            for kd in range(3):
                blk = w_np[:, :, kd, kh, kw]                  # (Cout, Cin)
                for dpo in range(dpad):
                    dpi = dpo + (kd - 1)
                    if 0 <= dpi < dpad:
                        wb[kh, kw,
                           dpo * cout_rows: dpo * cout_rows + cout,
                           dpi * cin_rows: dpi * cin_rows + cin] = blk
    return jnp.asarray(wb.reshape(9, dpad * cout_rows, dpad * cin_rows), jnp.bfloat16)


def input_block_forward(x_ncdhw, w1, b1, w2, b2):
    """Matches InputBlock.forward. x: (N, Cin, D, H, W); weights in PyTorch OIDHW layout.
       b1/b2 accepted but unused: InstanceNorm(affine=False) exactly cancels a per-channel
       constant bias (the reference keeps them to prove this)."""
    del b1, b2
    N, Cin, D, H, W = x_ncdhw.shape
    Cout = w1.shape[0]
    coutp = -(-Cout // 8) * 8                  # output-channel rows padded to the f32 sublane tile
    dpad, hpad, wpad = D + 2, H + 2, W + 2     # 1-voxel zero halo on every spatial dim
    lraw = hpad * wpad
    lhw = -(-lraw // 128) * 128                # lane-dense: padded to a multiple of 128
    p_true = D * H * W

    # Zero-halo pad, flatten (Hp, Wp) into lanes, rows = dp*Cin + cin (depth-major).
    xp = jnp.pad(x_ncdhw, ((0, 0), (0, 0), (1, 1), (1, 1), (1, 1)))
    xp = xp.reshape(N, Cin, dpad, lraw)
    xp = jnp.pad(xp, ((0, 0), (0, 0), (0, 0), (0, lhw - lraw)))
    xp = jnp.transpose(xp, (0, 2, 1, 3)).reshape(N, dpad * Cin, lhw)

    wb1 = _banded_weights(w1, dpad, Cin, coutp)      # (9, dpad*coutp, dpad*Cin)
    wb2 = _banded_weights(w2, dpad, coutp, coutp)    # (9, dpad*coutp, dpad*coutp)

    # Interior mask over the output rows/lanes: 1 on real voxels, 0 on halo + lane padding.
    inner = np.zeros((hpad, wpad), np.float32)
    inner[1:-1, 1:-1] = 1.0
    inner = inner.reshape(-1)
    mask = np.zeros((dpad * coutp, lhw), np.float32)
    for dp_ in range(1, dpad - 1):
        mask[dp_ * coutp:(dp_ + 1) * coutp, :lraw] = inner

    # In-plane tap lane shifts so that rolled[q] = x[q + dh*Wp + dw] (halo supplies the zeros).
    shifts = tuple(int((-(dh * wpad + dw)) % lhw)
                   for dh in (-1, 0, 1) for dw in (-1, 0, 1))

    out = double_conv(xp, wb1, wb2, jnp.asarray(mask), shifts, dpad, coutp, p_true)
    out = out.reshape(N, dpad, coutp, lhw)[:, 1:-1, :Cout, :lraw]    # drop halo depth / pad chans
    out = out.reshape(N, D, Cout, hpad, wpad)[:, :, :, 1:-1, 1:-1]   # drop in-plane halo
    return jnp.transpose(out, (0, 2, 1, 3, 4))                       # (N, Cout, D, H, W)


# ------------------------- pure-JAX reference -------------------------
def _ref_conv_in_relu(x, w, b):
    y = jax.lax.conv_general_dilated(
        x, w, window_strides=(1, 1, 1), padding=[(1, 1)] * 3,
        dimension_numbers=("NCDHW", "OIDHW", "NCDHW"))
    y = y + b.reshape(1, -1, 1, 1, 1)
    mean = jnp.mean(y, axis=(2, 3, 4), keepdims=True)
    var = jnp.mean((y - mean) ** 2, axis=(2, 3, 4), keepdims=True)
    y = (y - mean) * jax.lax.rsqrt(var + 1e-5)
    return jnp.maximum(y, 0.0)


def reference(x, w1, b1, w2, b2):
    return _ref_conv_in_relu(_ref_conv_in_relu(x, w1, b1), w2, b2)


# ------------------------- main -------------------------
if __name__ == "__main__":
    N, Cin, Cout, D, H, W = 2, 4, 8, 8, 8, 8
    key = jax.random.PRNGKey(0)
    k1, k2, k3, k4, k5 = jax.random.split(key, 5)

    x = jax.random.normal(k1, (N, Cin, D, H, W), jnp.float32)
    # Deterministic synthetic parameters (shapes from nn.Conv3d(in, out, 3)):
    w1 = jax.random.normal(k2, (Cout, Cin, 3, 3, 3), jnp.float32) * 0.1
    b1 = jax.random.normal(k3, (Cout,), jnp.float32) * 0.01
    w2 = jax.random.normal(k4, (Cout, Cout, 3, 3, 3), jnp.float32) * 0.1
    b2 = jax.random.normal(k5, (Cout,), jnp.float32) * 0.01

    out = jax.block_until_ready(input_block_forward(x, w1, b1, w2, b2))
    ref = jax.block_until_ready(reference(x, w1, b1, w2, b2))

    assert out.shape == (N, Cout, D, H, W), out.shape
    max_err = float(jnp.max(jnp.abs(out - ref)))
    # bf16 MXU operands (f32 accumulation / normalization) -> looser tolerance than pure f32;
    # still far below the O(1) errors a wrong tap / halo / banded-weight layout would produce.
    assert max_err < 5e-2, f"mismatch vs reference: {max_err}"

    print("KERNEL_OK")
</pallas_src>

<mosaic_0001>
module attributes {stable_mosaic.version = 11 : i64} {
  func.func @_double_conv_kernel(%arg0: i32, %arg1: memref<1x40x128xf32, #tpu.memory_space<vmem>>, %arg2: memref<9x80x40xbf16, #tpu.memory_space<vmem>>, %arg3: memref<9x80x80xbf16, #tpu.memory_space<vmem>>, %arg4: memref<80x128xf32, #tpu.memory_space<vmem>>, %arg5: memref<1x80x128xf32, #tpu.memory_space<vmem>>) attributes {dimension_semantics = [#tpu.dimension_semantics<parallel>], iteration_bounds = array<i64: 2>, scalar_prefetch = 0 : i64, scratch_operands = 0 : i64, tpu.core_type = #tpu.core_type<tc>, window_params = [{transform_indices = @transform_0, window_bounds = array<i64: 1, 40, 128>}, {pipeline_mode = #tpu.pipeline_mode<synchronous>, transform_indices = @transform_1, window_bounds = array<i64: 9, 80, 40>}, {pipeline_mode = #tpu.pipeline_mode<synchronous>, transform_indices = @transform_2, window_bounds = array<i64: 9, 80, 80>}, {pipeline_mode = #tpu.pipeline_mode<synchronous>, transform_indices = @transform_3, window_bounds = array<i64: 80, 128>}, {transform_indices = @transform_4, window_bounds = array<i64: 1, 80, 128>}]} {
    %c0 = arith.constant 0 : index
    %c0_0 = arith.constant 0 : index
    %0 = vector.load %arg4[%c0, %c0_0] : memref<80x128xf32, #tpu.memory_space<vmem>>, vector<80x128xf32>
    %c0_1 = arith.constant 0 : index
    %c0_2 = arith.constant 0 : index
    %c0_3 = arith.constant 0 : index
    %1 = vector.load %arg1[%c0_1, %c0_2, %c0_3] : memref<1x40x128xf32, #tpu.memory_space<vmem>>, vector<1x40x128xf32>
    %2 = vector.shape_cast %1 : vector<1x40x128xf32> to vector<40x128xf32>
    %cst = arith.constant 0.000000e+00 : f32
    %3 = vector.broadcast %cst : f32 to vector<80x128xf32>
    %c11_i32 = arith.constant 11 : i32
    %4 = tpu.dynamic_rotate %2 by %c11_i32 dim 1 : vector<40x128xf32>, i32 -> vector<40x128xf32>
    %c0_4 = arith.constant 0 : index
    %c0_5 = arith.constant 0 : index
    %c0_6 = arith.constant 0 : index
    %5 = vector.load %arg2[%c0_4, %c0_5, %c0_6] : memref<9x80x40xbf16, #tpu.memory_space<vmem>>, vector<1x80x40xbf16>
    %6 = vector.shape_cast %5 : vector<1x80x40xbf16> to vector<80x40xbf16>
    %7 = arith.truncf %4 : vector<40x128xf32> to vector<40x128xbf16>
    %cst_7 = arith.constant dense<0.000000e+00> : vector<80x128xf32>
    %8 = tpu.matmul %6, %7, %cst_7 {dimension_numbers = #tpu.dot_dimension_numbers<[1], [0], [0], [1], [0, 0, 1, 1], [], []>} : vector<80x40xbf16>, vector<40x128xbf16>, vector<80x128xf32> -> vector<80x128xf32>
    %9 = arith.addf %3, %8 : vector<80x128xf32>
    %c10_i32 = arith.constant 10 : i32
    %10 = tpu.dynamic_rotate %2 by %c10_i32 dim 1 : vector<40x128xf32>, i32 -> vector<40x128xf32>
    %c1 = arith.constant 1 : index
    %c0_8 = arith.constant 0 : index
    %c0_9 = arith.constant 0 : index
    %11 = vector.load %arg2[%c1, %c0_8, %c0_9] : memref<9x80x40xbf16, #tpu.memory_space<vmem>>, vector<1x80x40xbf16>
    %12 = vector.shape_cast %11 : vector<1x80x40xbf16> to vector<80x40xbf16>
    %13 = arith.truncf %10 : vector<40x128xf32> to vector<40x128xbf16>
    %cst_10 = arith.constant dense<0.000000e+00> : vector<80x128xf32>
    %14 = tpu.matmul %12, %13, %cst_10 {dimension_numbers = #tpu.dot_dimension_numbers<[1], [0], [0], [1], [0, 0, 1, 1], [], []>} : vector<80x40xbf16>, vector<40x128xbf16>, vector<80x128xf32> -> vector<80x128xf32>
    %15 = arith.addf %9, %14 : vector<80x128xf32>
    %c9_i32 = arith.constant 9 : i32
    %16 = tpu.dynamic_rotate %2 by %c9_i32 dim 1 : vector<40x128xf32>, i32 -> vector<40x128xf32>
    %c2 = arith.constant 2 : index
    %c0_11 = arith.constant 0 : index
    %c0_12 = arith.constant 0 : index
    %17 = vector.load %arg2[%c2, %c0_11, %c0_12] : memref<9x80x40xbf16, #tpu.memory_space<vmem>>, vector<1x80x40xbf16>
    %18 = vector.shape_cast %17 : vector<1x80x40xbf16> to vector<80x40xbf16>
    %19 = arith.truncf %16 : vector<40x128xf32> to vector<40x128xbf16>
    %cst_13 = arith.constant dense<0.000000e+00> : vector<80x128xf32>
    %20 = tpu.matmul %18, %19, %cst_13 {dimension_numbers = #tpu.dot_dimension_numbers<[1], [0], [0], [1], [0, 0, 1, 1], [], []>} : vector<80x40xbf16>, vector<40x128xbf16>, vector<80x128xf32> -> vector<80x128xf32>
    %21 = arith.addf %15, %20 : vector<80x128xf32>
    %c1_i32 = arith.constant 1 : i32
    %22 = tpu.dynamic_rotate %2 by %c1_i32 dim 1 : vector<40x128xf32>, i32 -> vector<40x128xf32>
    %c3 = arith.constant 3 : index
    %c0_14 = arith.constant 0 : index
    %c0_15 = arith.constant 0 : index
    %23 = vector.load %arg2[%c3, %c0_14, %c0_15] : memref<9x80x40xbf16, #tpu.memory_space<vmem>>, vector<1x80x40xbf16>
    %24 = vector.shape_cast %23 : vector<1x80x40xbf16> to vector<80x40xbf16>
    %25 = arith.truncf %22 : vector<40x128xf32> to vector<40x128xbf16>
    %cst_16 = arith.constant dense<0.000000e+00> : vector<80x128xf32>
    %26 = tpu.matmul %24, %25, %cst_16 {dimension_numbers = #tpu.dot_dimension_numbers<[1], [0], [0], [1], [0, 0, 1, 1], [], []>} : vector<80x40xbf16>, vector<40x128xbf16>, vector<80x128xf32> -> vector<80x128xf32>
    %27 = arith.addf %21, %26 : vector<80x128xf32>
    %c4 = arith.constant 4 : index
    %c0_17 = arith.constant 0 : index
    %c0_18 = arith.constant 0 : index
    %28 = vector.load %arg2[%c4, %c0_17, %c0_18] : memref<9x80x40xbf16, #tpu.memory_space<vmem>>, vector<1x80x40xbf16>
    %29 = vector.shape_cast %28 : vector<1x80x40xbf16> to vector<80x40xbf16>
    %30 = arith.truncf %2 : vector<40x128xf32> to vector<40x128xbf16>
    %cst_19 = arith.constant dense<0.000000e+00> : vector<80x128xf32>
    %31 = tpu.matmul %29, %30, %cst_19 {dimension_numbers = #tpu.dot_dimension_numbers<[1], [0], [0], [1], [0, 0, 1, 1], [], []>} : vector<80x40xbf16>, vector<40x128xbf16>, vector<80x128xf32> -> vector<80x128xf32>
    %32 = arith.addf %27, %31 : vector<80x128xf32>
    %c127_i32 = arith.constant 127 : i32
    %33 = tpu.dynamic_rotate %2 by %c127_i32 dim 1 : vector<40x128xf32>, i32 -> vector<40x128xf32>
    %c5 = arith.constant 5 : index
    %c0_20 = arith.constant 0 : index
    %c0_21 = arith.constant 0 : index
    %34 = vector.load %arg2[%c5, %c0_20, %c0_21] : memref<9x80x40xbf16, #tpu.memory_space<vmem>>, vector<1x80x40xbf16>
    %35 = vector.shape_cast %34 : vector<1x80x40xbf16> to vector<80x40xbf16>
    %36 = arith.truncf %33 : vector<40x128xf32> to vector<40x128xbf16>
    %cst_22 = arith.constant dense<0.000000e+00> : vector<80x128xf32>
    %37 = tpu.matmul %35, %36, %cst_22 {dimension_numbers = #tpu.dot_dimension_numbers<[1], [0], [0], [1], [0, 0, 1, 1], [], []>} : vector<80x40xbf16>, vector<40x128xbf16>, vector<80x128xf32> -> vector<80x128xf32>
    %38 = arith.addf %32, %37 : vector<80x128xf32>
    %c119_i32 = arith.constant 119 : i32
    %39 = tpu.dynamic_rotate %2 by %c119_i32 dim 1 : vector<40x128xf32>, i32 -> vector<40x128xf32>
    %c6 = arith.constant 6 : index
    %c0_23 = arith.constant 0 : index
    %c0_24 = arith.constant 0 : index
    %40 = vector.load %arg2[%c6, %c0_23, %c0_24] : memref<9x80x40xbf16, #tpu.memory_space<vmem>>, vector<1x80x40xbf16>
    %41 = vector.shape_cast %40 : vector<1x80x40xbf16> to vector<80x40xbf16>
    %42 = arith.truncf %39 : vector<40x128xf32> to vector<40x128xbf16>
    %cst_25 = arith.constant dense<0.000000e+00> : vector<80x128xf32>
    %43 = tpu.matmul %41, %42, %cst_25 {dimension_numbers = #tpu.dot_dimension_numbers<[1], [0], [0], [1], [0, 0, 1, 1], [], []>} : vector<80x40xbf16>, vector<40x128xbf16>, vector<80x128xf32> -> vector<80x128xf32>
    %44 = arith.addf %38, %43 : vector<80x128xf32>
    %c118_i32 = arith.constant 118 : i32
    %45 = tpu.dynamic_rotate %2 by %c118_i32 dim 1 : vector<40x128xf32>, i32 -> vector<40x128xf32>
    %c7 = arith.constant 7 : index
    %c0_26 = arith.constant 0 : index
    %c0_27 = arith.constant 0 : index
    %46 = vector.load %arg2[%c7, %c0_26, %c0_27] : memref<9x80x40xbf16, #tpu.memory_space<vmem>>, vector<1x80x40xbf16>
    %47 = vector.shape_cast %46 : vector<1x80x40xbf16> to vector<80x40xbf16>
    %48 = arith.truncf %45 : vector<40x128xf32> to vector<40x128xbf16>
    %cst_28 = arith.constant dense<0.000000e+00> : vector<80x128xf32>
    %49 = tpu.matmul %47, %48, %cst_28 {dimension_numbers = #tpu.dot_dimension_numbers<[1], [0], [0], [1], [0, 0, 1, 1], [], []>} : vector<80x40xbf16>, vector<40x128xbf16>, vector<80x128xf32> -> vector<80x128xf32>
    %50 = arith.addf %44, %49 : vector<80x128xf32>
    %c117_i32 = arith.constant 117 : i32
    %51 = tpu.dynamic_rotate %2 by %c117_i32 dim 1 : vector<40x128xf32>, i32 -> vector<40x128xf32>
    %c8 = arith.constant 8 : index
    %c0_29 = arith.constant 0 : index
    %c0_30 = arith.constant 0 : index
    %52 = vector.load %arg2[%c8, %c0_29, %c0_30] : memref<9x80x40xbf16, #tpu.memory_space<vmem>>, vector<1x80x40xbf16>
    %53 = vector.shape_cast %52 : vector<1x80x40xbf16> to vector<80x40xbf16>
    %54 = arith.truncf %51 : vector<40x128xf32> to vector<40x128xbf16>
    %cst_31 = arith.constant dense<0.000000e+00> : vector<80x128xf32>
    %55 = tpu.matmul %53, %54, %cst_31 {dimension_numbers = #tpu.dot_dimension_numbers<[1], [0], [0], [1], [0, 0, 1, 1], [], []>} : vector<80x40xbf16>, vector<40x128xbf16>, vector<80x128xf32> -> vector<80x128xf32>
    %56 = arith.addf %50, %55 : vector<80x128xf32>
    %57 = arith.mulf %56, %0 : vector<80x128xf32>
    %cst_32 = arith.constant dense<0.000000e+00> : vector<80xf32>
    %58 = vector.multi_reduction <add>, %57, %cst_32 [1] : vector<80x128xf32> to vector<80xf32>
    %59 = vector.shape_cast %58 : vector<80xf32> to vector<80x1xf32>
    %60 = arith.mulf %57, %57 : vector<80x128xf32>
    %cst_33 = arith.constant dense<0.000000e+00> : vector<80xf32>
    %61 = vector.multi_reduction <add>, %60, %cst_33 [1] : vector<80x128xf32> to vector<80xf32>
    %62 = vector.shape_cast %61 : vector<80xf32> to vector<80x1xf32>
    %63 = vector.extract_strided_slice %59 {offsets = [0, 0], sizes = [8, 1], strides = [1, 1]} : vector<80x1xf32> to vector<8x1xf32>
    %64 = vector.extract_strided_slice %62 {offsets = [0, 0], sizes = [8, 1], strides = [1, 1]} : vector<80x1xf32> to vector<8x1xf32>
    %65 = vector.extract_strided_slice %59 {offsets = [8, 0], sizes = [8, 1], strides = [1, 1]} : vector<80x1xf32> to vector<8x1xf32>
    %66 = arith.addf %63, %65 : vector<8x1xf32>
    %67 = vector.extract_strided_slice %62 {offsets = [8, 0], sizes = [8, 1], strides = [1, 1]} : vector<80x1xf32> to vector<8x1xf32>
    %68 = arith.addf %64, %67 : vector<8x1xf32>
    %69 = vector.extract_strided_slice %59 {offsets = [16, 0], sizes = [8, 1], strides = [1, 1]} : vector<80x1xf32> to vector<8x1xf32>
    %70 = arith.addf %66, %69 : vector<8x1xf32>
    %71 = vector.extract_strided_slice %62 {offsets = [16, 0], sizes = [8, 1], strides = [1, 1]} : vector<80x1xf32> to vector<8x1xf32>
    %72 = arith.addf %68, %71 : vector<8x1xf32>
    %73 = vector.extract_strided_slice %59 {offsets = [24, 0], sizes = [8, 1], strides = [1, 1]} : vector<80x1xf32> to vector<8x1xf32>
    %74 = arith.addf %70, %73 : vector<8x1xf32>
    %75 = vector.extract_strided_slice %62 {offsets = [24, 0], sizes = [8, 1], strides = [1, 1]} : vector<80x1xf32> to vector<8x1xf32>
    %76 = arith.addf %72, %75 : vector<8x1xf32>
    %77 = vector.extract_strided_slice %59 {offsets = [32, 0], sizes = [8, 1], strides = [1, 1]} : vector<80x1xf32> to vector<8x1xf32>
    %78 = arith.addf %74, %77 : vector<8x1xf32>
    %79 = vector.extract_strided_slice %62 {offsets = [32, 0], sizes = [8, 1], strides = [1, 1]} : vector<80x1xf32> to vector<8x1xf32>
    %80 = arith.addf %76, %79 : vector<8x1xf32>
    %81 = vector.extract_strided_slice %59 {offsets = [40, 0], sizes = [8, 1], strides = [1, 1]} : vector<80x1xf32> to vector<8x1xf32>
    %82 = arith.addf %78, %81 : vector<8x1xf32>
    %83 = vector.extract_strided_slice %62 {offsets = [40, 0], sizes = [8, 1], strides = [1, 1]} : vector<80x1xf32> to vector<8x1xf32>
    %84 = arith.addf %80, %83 : vector<8x1xf32>
    %85 = vector.extract_strided_slice %59 {offsets = [48, 0], sizes = [8, 1], strides = [1, 1]} : vector<80x1xf32> to vector<8x1xf32>
    %86 = arith.addf %82, %85 : vector<8x1xf32>
    %87 = vector.extract_strided_slice %62 {offsets = [48, 0], sizes = [8, 1], strides = [1, 1]} : vector<80x1xf32> to vector<8x1xf32>
    %88 = arith.addf %84, %87 : vector<8x1xf32>
    %89 = vector.extract_strided_slice %59 {offsets = [56, 0], sizes = [8, 1], strides = [1, 1]} : vector<80x1xf32> to vector<8x1xf32>
    %90 = arith.addf %86, %89 : vector<8x1xf32>
    %91 = vector.extract_strided_slice %62 {offsets = [56, 0], sizes = [8, 1], strides = [1, 1]} : vector<80x1xf32> to vector<8x1xf32>
    %92 = arith.addf %88, %91 : vector<8x1xf32>
    %93 = vector.extract_strided_slice %59 {offsets = [64, 0], sizes = [8, 1], strides = [1, 1]} : vector<80x1xf32> to vector<8x1xf32>
    %94 = arith.addf %90, %93 : vector<8x1xf32>
    %95 = vector.extract_strided_slice %62 {offsets = [64, 0], sizes = [8, 1], strides = [1, 1]} : vector<80x1xf32> to vector<8x1xf32>
    %96 = arith.addf %92, %95 : vector<8x1xf32>
    %97 = vector.extract_strided_slice %59 {offsets = [72, 0], sizes = [8, 1], strides = [1, 1]} : vector<80x1xf32> to vector<8x1xf32>
    %98 = arith.addf %94, %97 : vector<8x1xf32>
    %99 = vector.extract_strided_slice %62 {offsets = [72, 0], sizes = [8, 1], strides = [1, 1]} : vector<80x1xf32> to vector<8x1xf32>
    %100 = arith.addf %96, %99 : vector<8x1xf32>
    %cst_34 = arith.constant 0.001953125 : f32
    %101 = vector.broadcast %cst_34 : f32 to vector<8x1xf32>
    %102 = arith.mulf %98, %101 : vector<8x1xf32>
    %cst_35 = arith.constant 0.001953125 : f32
    %103 = vector.broadcast %cst_35 : f32 to vector<8x1xf32>
    %104 = arith.mulf %100, %103 : vector<8x1xf32>
    %105 = arith.mulf %102, %102 : vector<8x1xf32>
    %106 = arith.subf %104, %105 : vector<8x1xf32>
    %cst_36 = arith.constant 0.000000e+00 : f32
    %107 = vector.broadcast %cst_36 : f32 to vector<8x1xf32>
    %108 = arith.maximumf %106, %107 : vector<8x1xf32>
    %cst_37 = arith.constant 9.99999974E-6 : f32
    %109 = vector.broadcast %cst_37 : f32 to vector<8x1xf32>
    %110 = arith.addf %108, %109 : vector<8x1xf32>
    %111 = math.rsqrt %110 : vector<8x1xf32>
    %112 = tpu.concatenate %102, %102, %102, %102, %102, %102, %102, %102, %102, %102 in 0 : vector<8x1xf32>, vector<8x1xf32>, vector<8x1xf32>, vector<8x1xf32>, vector<8x1xf32>, vector<8x1xf32>, vector<8x1xf32>, vector<8x1xf32>, vector<8x1xf32>, vector<8x1xf32> -> vector<80x1xf32>
    %113 = tpu.concatenate %111, %111, %111, %111, %111, %111, %111, %111, %111, %111 in 0 : vector<8x1xf32>, vector<8x1xf32>, vector<8x1xf32>, vector<8x1xf32>, vector<8x1xf32>, vector<8x1xf32>, vector<8x1xf32>, vector<8x1xf32>, vector<8x1xf32>, vector<8x1xf32> -> vector<80x1xf32>
    %114 = vector.broadcast %112 : vector<80x1xf32> to vector<80x128xf32>
    %115 = arith.subf %57, %114 : vector<80x128xf32>
    %116 = vector.broadcast %113 : vector<80x1xf32> to vector<80x128xf32>
    %117 = arith.mulf %115, %116 : vector<80x128xf32>
    %cst_38 = arith.constant 0.000000e+00 : f32
    %118 = vector.broadcast %cst_38 : f32 to vector<80x128xf32>
    %119 = arith.maximumf %117, %118 : vector<80x128xf32>
    %120 = arith.mulf %119, %0 : vector<80x128xf32>
    %cst_39 = arith.constant 0.000000e+00 : f32
    %121 = vector.broadcast %cst_39 : f32 to vector<80x128xf32>
    %c11_i32_40 = arith.constant 11 : i32
    %122 = tpu.dynamic_rotate %120 by %c11_i32_40 dim 1 : vector<80x128xf32>, i32 -> vector<80x128xf32>
    %c0_41 = arith.constant 0 : index
    %c0_42 = arith.constant 0 : index
    %c0_43 = arith.constant 0 : index
    %123 = vector.load %arg3[%c0_41, %c0_42, %c0_43] : memref<9x80x80xbf16, #tpu.memory_space<vmem>>, vector<1x80x80xbf16>
    %124 = vector.shape_cast %123 : vector<1x80x80xbf16> to vector<80x80xbf16>
    %125 = arith.truncf %122 : vector<80x128xf32> to vector<80x128xbf16>
    %cst_44 = arith.constant dense<0.000000e+00> : vector<80x128xf32>
    %126 = tpu.matmul %124, %125, %cst_44 {dimension_numbers = #tpu.dot_dimension_numbers<[1], [0], [0], [1], [0, 0, 1, 1], [], []>} : vector<80x80xbf16>, vector<80x128xbf16>, vector<80x128xf32> -> vector<80x128xf32>
    %127 = arith.addf %121, %126 : vector<80x128xf32>
    %c10_i32_45 = arith.constant 10 : i32
    %128 = tpu.dynamic_rotate %120 by %c10_i32_45 dim 1 : vector<80x128xf32>, i32 -> vector<80x128xf32>
    %c1_46 = arith.constant 1 : index
    %c0_47 = arith.constant 0 : index
    %c0_48 = arith.constant 0 : index
    %129 = vector.load %arg3[%c1_46, %c0_47, %c0_48] : memref<9x80x80xbf16, #tpu.memory_space<vmem>>, vector<1x80x80xbf16>
    %130 = vector.shape_cast %129 : vector<1x80x80xbf16> to vector<80x80xbf16>
    %131 = arith.truncf %128 : vector<80x128xf32> to vector<80x128xbf16>
    %cst_49 = arith.constant dense<0.000000e+00> : vector<80x128xf32>
    %132 = tpu.matmul %130, %131, %cst_49 {dimension_numbers = #tpu.dot_dimension_numbers<[1], [0], [0], [1], [0, 0, 1, 1], [], []>} : vector<80x80xbf16>, vector<80x128xbf16>, vector<80x128xf32> -> vector<80x128xf32>
    %133 = arith.addf %127, %132 : vector<80x128xf32>
    %c9_i32_50 = arith.constant 9 : i32
    %134 = tpu.dynamic_rotate %120 by %c9_i32_50 dim 1 : vector<80x128xf32>, i32 -> vector<80x128xf32>
    %c2_51 = arith.constant 2 : index
    %c0_52 = arith.constant 0 : index
    %c0_53 = arith.constant 0 : index
    %135 = vector.load %arg3[%c2_51, %c0_52, %c0_53] : memref<9x80x80xbf16, #tpu.memory_space<vmem>>, vector<1x80x80xbf16>
    %136 = vector.shape_cast %135 : vector<1x80x80xbf16> to vector<80x80xbf16>
    %137 = arith.truncf %134 : vector<80x128xf32> to vector<80x128xbf16>
    %cst_54 = arith.constant dense<0.000000e+00> : vector<80x128xf32>
    %138 = tpu.matmul %136, %137, %cst_54 {dimension_numbers = #tpu.dot_dimension_numbers<[1], [0], [0], [1], [0, 0, 1, 1], [], []>} : vector<80x80xbf16>, vector<80x128xbf16>, vector<80x128xf32> -> vector<80x128xf32>
    %139 = arith.addf %133, %138 : vector<80x128xf32>
    %c1_i32_55 = arith.constant 1 : i32
    %140 = tpu.dynamic_rotate %120 by %c1_i32_55 dim 1 : vector<80x128xf32>, i32 -> vector<80x128xf32>
    %c3_56 = arith.constant 3 : index
    %c0_57 = arith.constant 0 : index
    %c0_58 = arith.constant 0 : index
    %141 = vector.load %arg3[%c3_56, %c0_57, %c0_58] : memref<9x80x80xbf16, #tpu.memory_space<vmem>>, vector<1x80x80xbf16>
    %142 = vector.shape_cast %141 : vector<1x80x80xbf16> to vector<80x80xbf16>
    %143 = arith.truncf %140 : vector<80x128xf32> to vector<80x128xbf16>
    %cst_59 = arith.constant dense<0.000000e+00> : vector<80x128xf32>
    %144 = tpu.matmul %142, %143, %cst_59 {dimension_numbers = #tpu.dot_dimension_numbers<[1], [0], [0], [1], [0, 0, 1, 1], [], []>} : vector<80x80xbf16>, vector<80x128xbf16>, vector<80x128xf32> -> vector<80x128xf32>
    %145 = arith.addf %139, %144 : vector<80x128xf32>
    %c4_60 = arith.constant 4 : index
    %c0_61 = arith.constant 0 : index
    %c0_62 = arith.constant 0 : index
    %146 = vector.load %arg3[%c4_60, %c0_61, %c0_62] : memref<9x80x80xbf16, #tpu.memory_space<vmem>>, vector<1x80x80xbf16>
    %147 = vector.shape_cast %146 : vector<1x80x80xbf16> to vector<80x80xbf16>
    %148 = arith.truncf %120 : vector<80x128xf32> to vector<80x128xbf16>
    %cst_63 = arith.constant dense<0.000000e+00> : vector<80x128xf32>
    %149 = tpu.matmul %147, %148, %cst_63 {dimension_numbers = #tpu.dot_dimension_numbers<[1], [0], [0], [1], [0, 0, 1, 1], [], []>} : vector<80x80xbf16>, vector<80x128xbf16>, vector<80x128xf32> -> vector<80x128xf32>
    %150 = arith.addf %145, %149 : vector<80x128xf32>
    %c127_i32_64 = arith.constant 127 : i32
    %151 = tpu.dynamic_rotate %120 by %c127_i32_64 dim 1 : vector<80x128xf32>, i32 -> vector<80x128xf32>
    %c5_65 = arith.constant 5 : index
    %c0_66 = arith.constant 0 : index
    %c0_67 = arith.constant 0 : index
    %152 = vector.load %arg3[%c5_65, %c0_66, %c0_67] : memref<9x80x80xbf16, #tpu.memory_space<vmem>>, vector<1x80x80xbf16>
    %153 = vector.shape_cast %152 : vector<1x80x80xbf16> to vector<80x80xbf16>
    %154 = arith.truncf %151 : vector<80x128xf32> to vector<80x128xbf16>
    %cst_68 = arith.constant dense<0.000000e+00> : vector<80x128xf32>
    %155 = tpu.matmul %153, %154, %cst_68 {dimension_numbers = #tpu.dot_dimension_numbers<[1], [0], [0], [1], [0, 0, 1, 1], [], []>} : vector<80x80xbf16>, vector<80x128xbf16>, vector<80x128xf32> -> vector<80x128xf32>
    %156 = arith.addf %150, %155 : vector<80x128xf32>
    %c119_i32_69 = arith.constant 119 : i32
    %157 = tpu.dynamic_rotate %120 by %c119_i32_69 dim 1 : vector<80x128xf32>, i32 -> vector<80x128xf32>
    %c6_70 = arith.constant 6 : index
    %c0_71 = arith.constant 0 : index
    %c0_72 = arith.constant 0 : index
    %158 = vector.load %arg3[%c6_70, %c0_71, %c0_72] : memref<9x80x80xbf16, #tpu.memory_space<vmem>>, vector<1x80x80xbf16>
    %159 = vector.shape_cast %158 : vector<1x80x80xbf16> to vector<80x80xbf16>
    %160 = arith.truncf %157 : vector<80x128xf32> to vector<80x128xbf16>
    %cst_73 = arith.constant dense<0.000000e+00> : vector<80x128xf32>
    %161 = tpu.matmul %159, %160, %cst_73 {dimension_numbers = #tpu.dot_dimension_numbers<[1], [0], [0], [1], [0, 0, 1, 1], [], []>} : vector<80x80xbf16>, vector<80x128xbf16>, vector<80x128xf32> -> vector<80x128xf32>
    %162 = arith.addf %156, %161 : vector<80x128xf32>
    %c118_i32_74 = arith.constant 118 : i32
    %163 = tpu.dynamic_rotate %120 by %c118_i32_74 dim 1 : vector<80x128xf32>, i32 -> vector<80x128xf32>
    %c7_75 = arith.constant 7 : index
    %c0_76 = arith.constant 0 : index
    %c0_77 = arith.constant 0 : index
    %164 = vector.load %arg3[%c7_75, %c0_76, %c0_77] : memref<9x80x80xbf16, #tpu.memory_space<vmem>>, vector<1x80x80xbf16>
    %165 = vector.shape_cast %164 : vector<1x80x80xbf16> to vector<80x80xbf16>
    %166 = arith.truncf %163 : vector<80x128xf32> to vector<80x128xbf16>
    %cst_78 = arith.constant dense<0.000000e+00> : vector<80x128xf32>
    %167 = tpu.matmul %165, %166, %cst_78 {dimension_numbers = #tpu.dot_dimension_numbers<[1], [0], [0], [1], [0, 0, 1, 1], [], []>} : vector<80x80xbf16>, vector<80x128xbf16>, vector<80x128xf32> -> vector<80x128xf32>
    %168 = arith.addf %162, %167 : vector<80x128xf32>
    %c117_i32_79 = arith.constant 117 : i32
    %169 = tpu.dynamic_rotate %120 by %c117_i32_79 dim 1 : vector<80x128xf32>, i32 -> vector<80x128xf32>
    %c8_80 = arith.constant 8 : index
    %c0_81 = arith.constant 0 : index
    %c0_82 = arith.constant 0 : index
    %170 = vector.load %arg3[%c8_80, %c0_81, %c0_82] : memref<9x80x80xbf16, #tpu.memory_space<vmem>>, vector<1x80x80xbf16>
    %171 = vector.shape_cast %170 : vector<1x80x80xbf16> to vector<80x80xbf16>
    %172 = arith.truncf %169 : vector<80x128xf32> to vector<80x128xbf16>
    %cst_83 = arith.constant dense<0.000000e+00> : vector<80x128xf32>
    %173 = tpu.matmul %171, %172, %cst_83 {dimension_numbers = #tpu.dot_dimension_numbers<[1], [0], [0], [1], [0, 0, 1, 1], [], []>} : vector<80x80xbf16>, vector<80x128xbf16>, vector<80x128xf32> -> vector<80x128xf32>
    %174 = arith.addf %168, %173 : vector<80x128xf32>
    %175 = arith.mulf %174, %0 : vector<80x128xf32>
    %cst_84 = arith.constant dense<0.000000e+00> : vector<80xf32>
    %176 = vector.multi_reduction <add>, %175, %cst_84 [1] : vector<80x128xf32> to vector<80xf32>
    %177 = vector.shape_cast %176 : vector<80xf32> to vector<80x1xf32>
    %178 = arith.mulf %175, %175 : vector<80x128xf32>
    %cst_85 = arith.constant dense<0.000000e+00> : vector<80xf32>
    %179 = vector.multi_reduction <add>, %178, %cst_85 [1] : vector<80x128xf32> to vector<80xf32>
    %180 = vector.shape_cast %179 : vector<80xf32> to vector<80x1xf32>
    %181 = vector.extract_strided_slice %177 {offsets = [0, 0], sizes = [8, 1], strides = [1, 1]} : vector<80x1xf32> to vector<8x1xf32>
    %182 = vector.extract_strided_slice %180 {offsets = [0, 0], sizes = [8, 1], strides = [1, 1]} : vector<80x1xf32> to vector<8x1xf32>
    %183 = vector.extract_strided_slice %177 {offsets = [8, 0], sizes = [8, 1], strides = [1, 1]} : vector<80x1xf32> to vector<8x1xf32>
    %184 = arith.addf %181, %183 : vector<8x1xf32>
    %185 = vector.extract_strided_slice %180 {offsets = [8, 0], sizes = [8, 1], strides = [1, 1]} : vector<80x1xf32> to vector<8x1xf32>
    %186 = arith.addf %182, %185 : vector<8x1xf32>
    %187 = vector.extract_strided_slice %177 {offsets = [16, 0], sizes = [8, 1], strides = [1, 1]} : vector<80x1xf32> to vector<8x1xf32>
    %188 = arith.addf %184, %187 : vector<8x1xf32>
    %189 = vector.extract_strided_slice %180 {offsets = [16, 0], sizes = [8, 1], strides = [1, 1]} : vector<80x1xf32> to vector<8x1xf32>
    %190 = arith.addf %186, %189 : vector<8x1xf32>
    %191 = vector.extract_strided_slice %177 {offsets = [24, 0], sizes = [8, 1], strides = [1, 1]} : vector<80x1xf32> to vector<8x1xf32>
    %192 = arith.addf %188, %191 : vector<8x1xf32>
    %193 = vector.extract_strided_slice %180 {offsets = [24, 0], sizes = [8, 1], strides = [1, 1]} : vector<80x1xf32> to vector<8x1xf32>
    %194 = arith.addf %190, %193 : vector<8x1xf32>
    %195 = vector.extract_strided_slice %177 {offsets = [32, 0], sizes = [8, 1], strides = [1, 1]} : vector<80x1xf32> to vector<8x1xf32>
    %196 = arith.addf %192, %195 : vector<8x1xf32>
    %197 = vector.extract_strided_slice %180 {offsets = [32, 0], sizes = [8, 1], strides = [1, 1]} : vector<80x1xf32> to vector<8x1xf32>
    %198 = arith.addf %194, %197 : vector<8x1xf32>
    %199 = vector.extract_strided_slice %177 {offsets = [40, 0], sizes = [8, 1], strides = [1, 1]} : vector<80x1xf32> to vector<8x1xf32>
    %200 = arith.addf %196, %199 : vector<8x1xf32>
    %201 = vector.extract_strided_slice %180 {offsets = [40, 0], sizes = [8, 1], strides = [1, 1]} : vector<80x1xf32> to vector<8x1xf32>
    %202 = arith.addf %198, %201 : vector<8x1xf32>
    %203 = vector.extract_strided_slice %177 {offsets = [48, 0], sizes = [8, 1], strides = [1, 1]} : vector<80x1xf32> to vector<8x1xf32>
    %204 = arith.addf %200, %203 : vector<8x1xf32>
    %205 = vector.extract_strided_slice %180 {offsets = [48, 0], sizes = [8, 1], strides = [1, 1]} : vector<80x1xf32> to vector<8x1xf32>
    %206 = arith.addf %202, %205 : vector<8x1xf32>
    %207 = vector.extract_strided_slice %177 {offsets = [56, 0], sizes = [8, 1], strides = [1, 1]} : vector<80x1xf32> to vector<8x1xf32>
    %208 = arith.addf %204, %207 : vector<8x1xf32>
    %209 = vector.extract_strided_slice %180 {offsets = [56, 0], sizes = [8, 1], strides = [1, 1]} : vector<80x1xf32> to vector<8x1xf32>
    %210 = arith.addf %206, %209 : vector<8x1xf32>
    %211 = vector.extract_strided_slice %177 {offsets = [64, 0], sizes = [8, 1], strides = [1, 1]} : vector<80x1xf32> to vector<8x1xf32>
    %212 = arith.addf %208, %211 : vector<8x1xf32>
    %213 = vector.extract_strided_slice %180 {offsets = [64, 0], sizes = [8, 1], strides = [1, 1]} : vector<80x1xf32> to vector<8x1xf32>
    %214 = arith.addf %210, %213 : vector<8x1xf32>
    %215 = vector.extract_strided_slice %177 {offsets = [72, 0], sizes = [8, 1], strides = [1, 1]} : vector<80x1xf32> to vector<8x1xf32>
    %216 = arith.addf %212, %215 : vector<8x1xf32>
    %217 = vector.extract_strided_slice %180 {offsets = [72, 0], sizes = [8, 1], strides = [1, 1]} : vector<80x1xf32> to vector<8x1xf32>
    %218 = arith.addf %214, %217 : vector<8x1xf32>
    %cst_86 = arith.constant 0.001953125 : f32
    %219 = vector.broadcast %cst_86 : f32 to vector<8x1xf32>
    %220 = arith.mulf %216, %219 : vector<8x1xf32>
    %cst_87 = arith.constant 0.001953125 : f32
    %221 = vector.broadcast %cst_87 : f32 to vector<8x1xf32>
    %222 = arith.mulf %218, %221 : vector<8x1xf32>
    %223 = arith.mulf %220, %220 : vector<8x1xf32>
    %224 = arith.subf %222, %223 : vector<8x1xf32>
    %cst_88 = arith.constant 0.000000e+00 : f32
    %225 = vector.broadcast %cst_88 : f32 to vector<8x1xf32>
    %226 = arith.maximumf %224, %225 : vector<8x1xf32>
    %cst_89 = arith.constant 9.99999974E-6 : f32
    %227 = vector.broadcast %cst_89 : f32 to vector<8x1xf32>
    %228 = arith.addf %226, %227 : vector<8x1xf32>
    %229 = math.rsqrt %228 : vector<8x1xf32>
    %230 = tpu.concatenate %220, %220, %220, %220, %220, %220, %220, %220, %220, %220 in 0 : vector<8x1xf32>, vector<8x1xf32>, vector<8x1xf32>, vector<8x1xf32>, vector<8x1xf32>, vector<8x1xf32>, vector<8x1xf32>, vector<8x1xf32>, vector<8x1xf32>, vector<8x1xf32> -> vector<80x1xf32>
    %231 = tpu.concatenate %229, %229, %229, %229, %229, %229, %229, %229, %229, %229 in 0 : vector<8x1xf32>, vector<8x1xf32>, vector<8x1xf32>, vector<8x1xf32>, vector<8x1xf32>, vector<8x1xf32>, vector<8x1xf32>, vector<8x1xf32>, vector<8x1xf32>, vector<8x1xf32> -> vector<80x1xf32>
    %232 = vector.broadcast %230 : vector<80x1xf32> to vector<80x128xf32>
    %233 = arith.subf %175, %232 : vector<80x128xf32>
    %234 = vector.broadcast %231 : vector<80x1xf32> to vector<80x128xf32>
    %235 = arith.mulf %233, %234 : vector<80x128xf32>
    %cst_90 = arith.constant 0.000000e+00 : f32
    %236 = vector.broadcast %cst_90 : f32 to vector<80x128xf32>
    %237 = arith.maximumf %235, %236 : vector<80x128xf32>
    %238 = arith.mulf %237, %0 : vector<80x128xf32>
    %c0_91 = arith.constant 0 : index
    %c0_92 = arith.constant 0 : index
    %c0_93 = arith.constant 0 : index
    %239 = vector.load %arg5[%c0_91, %c0_92, %c0_93] : memref<1x80x128xf32, #tpu.memory_space<vmem>>, vector<1x80x128xf32>
    %240 = vector.shape_cast %239 : vector<1x80x128xf32> to vector<80x128xf32>
    %241 = vector.shape_cast %238 : vector<80x128xf32> to vector<1x80x128xf32>
    tpu.vector_store %arg5[%c0_91, %c0_92, %c0_93], %241 {strides = array<i32>} : memref<1x80x128xf32, #tpu.memory_space<vmem>>, vector<1x80x128xf32>,
    return
  }
  func.func @transform_0(%arg0: i32) -> (i32, i32, i32) {
    %c0_i32 = arith.constant 0 : i32
    %c0_i32_0 = arith.constant 0 : i32
    %c0_i32_1 = arith.constant 0 : i32
    return %arg0, %c0_i32, %c0_i32_0 : i32, i32, i32
  }
  func.func @transform_1(%arg0: i32) -> (i32, i32, i32) {
    %c0_i32 = arith.constant 0 : i32
    %c0_i32_0 = arith.constant 0 : i32
    %c0_i32_1 = arith.constant 0 : i32
    %c0_i32_2 = arith.constant 0 : i32
    return %c0_i32, %c0_i32_0, %c0_i32_1 : i32, i32, i32
  }
  func.func @transform_2(%arg0: i32) -> (i32, i32, i32) {
    %c0_i32 = arith.constant 0 : i32
    %c0_i32_0 = arith.constant 0 : i32
    %c0_i32_1 = arith.constant 0 : i32
    %c0_i32_2 = arith.constant 0 : i32
    return %c0_i32, %c0_i32_0, %c0_i32_1 : i32, i32, i32
  }
  func.func @transform_3(%arg0: i32) -> (i32, i32) {
    %c0_i32 = arith.constant 0 : i32
    %c0_i32_0 = arith.constant 0 : i32
    %c0_i32_1 = arith.constant 0 : i32
    return %c0_i32, %c0_i32_0 : i32, i32
  }
  func.func @transform_4(%arg0: i32) -> (i32, i32, i32) {
    %c0_i32 = arith.constant 0 : i32
    %c0_i32_0 = arith.constant 0 : i32
    %c0_i32_1 = arith.constant 0 : i32
    return %arg0, %c0_i32, %c0_i32_0 : i32, i32, i32
  }
}

</mosaic_0001>

<llo_original>
// kernel: tpu_custom_call.1
$region0: #{tpu_custom_call.1}
  #allocation0 [shape = 'u32[]', space=smem, size = 0x4, offset = 0x4, fixed_abs, tag = 'smem constant byte address 0x4 - core index']
  #allocation1 [shape = 'u32[144,128]{1,0:T(1,128)}', space=vmem, size = 0x12000, scoped, tag = 'internal scratch']
  %s0 = inlined_call_operand.vmem [shape: f32[2,40,128], index: 0, kind: input, shape index: {}]
  %s1 = inlined_call_operand.vmem [shape: bf16[9,80,40], index: 1, kind: input, shape index: {}]
  %s2 = inlined_call_operand.vmem [shape: bf16[9,80,80], index: 2, kind: input, shape index: {}]
  %s3 = inlined_call_operand.vmem [shape: f32[80,128], index: 3, kind: input, shape index: {}]
  %s4 = inlined_call_operand.hbm [shape: f32[2,80,128], index: 4, kind: output, shape index: {}]
  %s5 = sld [smem:[#allocation0]]
  $region49: #{tpu_custom_call.1} parent=0
    _
  %s7 = ssub.s32 1, %s5
  %s8 = scalar_select 0, %s7, %s5
  $region1: #{tpu_custom_call.1} parent=0
    #allocation2 [shape = 'u8[81920]{0}', space=vmem, size = 0x14000, scoped, tag = 'output window, operand 0']
    #allocation3 [shape = 's32[2]{0}', space=sflag, size = 0x8, scoped, tag = 'scoped memory for tpu_custom_call.1']
    %9 = vsyncpa [#allocation3], 0
    %s10 = scalar_lea.sflag [#allocation3], 1
    %11 = vsyncpa %s10, 0
    loop: start=0, step=1, limit=4
    $region2: #{tpu_custom_call.1} parent=1 // loop_pre_header
      _
    $region3: #{tpu_custom_call.1} parent=1 // loop_header
      %s13 = sphi 0, %s17
      %p14 = scmp.ge.s32.totalorder %s13, 4
      %s23 = sphi 0, %s25
      %s26 = sphi 0, %s23
      %s27 = sphi 0, %s26
      %s43 = sphi 0, %s27
      %s47 = sphi 0, %s47
      %s49 = sphi 0, %s47
      %s50 = sphi 0, %s49
      %s64 = sphi 0, %s50
      %s68 = sphi 0, %s68
      %s70 = sphi 0, %s68
      %s71 = sphi 0, %s70
      %s85 = sphi 0, %s71
      %s89 = sphi 0, %s89
      %s91 = sphi 0, %s89
      %s92 = sphi 0, %s91
      %s106 = sphi 0, %s92
      %s112 = sphi 0, %s114
      %s115 = sphi 0, %s112
      %s116 = sphi 0, %s115
      %s132 = sphi 0, %s116
    $region4: #{tpu_custom_call.1} parent=1 // loop_header_branch
      %16 = sbr.rel (%p14) target = $region8
    $region5: #{tpu_custom_call.1} parent=1 // loop_body
      %s18 = ssub.s32 %s13, 1
      %s19 = ssub.s32 %s13, 2
      %s20 = sadd.s32 %s13, 1
      %s21 = ssub.s32 %s13, %s20
      %p22 = scmp.eq.s32.totalorder %s21, 0
      %s24 = sadd.s32 %s23, 1
      %s25 = scalar_select %p22, %s23, %s24
      %p28 = pneg %p22
      %p29 = scmp.eq.s32.totalorder %s13, 1
      %p30 = por %p28, %p29
      %p31 = scmp.ne.s32.totalorder %s23, %s26
      %p32 = scmp.eq.s32.totalorder %s13, 0
      %p33 = por %p31, %p32
      %p34 = scmp.ne.s32.totalorder %s23, %s26
      %p35 = scmp.eq.s32.totalorder %s18, 1
      %p36 = por %p34, %p35
      %p37 = scmp.ne.s32.totalorder %s26, %s27
      %p38 = scmp.eq.s32.totalorder %s18, 0
      %p39 = por %p37, %p38
      %p40 = scmp.ne.s32.totalorder %s26, %s27
      %p41 = scmp.eq.s32.totalorder %s19, 1
      %p42 = por %p40, %p41
      %p44 = scmp.ne.s32.totalorder %s27, %s43
      %p45 = scmp.eq.s32.totalorder %s19, 0
      %p46 = por %p44, %p45
      %s48 = sadd.s32 %s47, 1
      %p51 = scmp.eq.s32.totalorder %s13, 1
      %p52 = scmp.ne.s32.totalorder %s47, %s49
      %p53 = scmp.eq.s32.totalorder %s13, 0
      %p54 = por %p52, %p53
      %p55 = scmp.ne.s32.totalorder %s47, %s49
      %p56 = scmp.eq.s32.totalorder %s18, 1
      %p57 = por %p55, %p56
      %p58 = scmp.ne.s32.totalorder %s49, %s50
      %p59 = scmp.eq.s32.totalorder %s18, 0
      %p60 = por %p58, %p59
      %p61 = scmp.ne.s32.totalorder %s49, %s50
      %p62 = scmp.eq.s32.totalorder %s19, 1
      %p63 = por %p61, %p62
      %p65 = scmp.ne.s32.totalorder %s50, %s64
      %p66 = scmp.eq.s32.totalorder %s19, 0
      %p67 = por %p65, %p66
      %s69 = sadd.s32 %s68, 1
      %p72 = scmp.eq.s32.totalorder %s13, 1
      %p73 = scmp.ne.s32.totalorder %s68, %s70
      %p74 = scmp.eq.s32.totalorder %s13, 0
      %p75 = por %p73, %p74
      %p76 = scmp.ne.s32.totalorder %s68, %s70
      %p77 = scmp.eq.s32.totalorder %s18, 1
      %p78 = por %p76, %p77
      %p79 = scmp.ne.s32.totalorder %s70, %s71
      %p80 = scmp.eq.s32.totalorder %s18, 0
      %p81 = por %p79, %p80
      %p82 = scmp.ne.s32.totalorder %s70, %s71
      %p83 = scmp.eq.s32.totalorder %s19, 1
      %p84 = por %p82, %p83
      %p86 = scmp.ne.s32.totalorder %s71, %s85
      %p87 = scmp.eq.s32.totalorder %s19, 0
      %p88 = por %p86, %p87
      %s90 = sadd.s32 %s89, 1
      %p93 = scmp.eq.s32.totalorder %s13, 1
      %p94 = scmp.ne.s32.totalorder %s89, %s91
      %p95 = scmp.eq.s32.totalorder %s13, 0
      %p96 = por %p94, %p95
      %p97 = scmp.ne.s32.totalorder %s89, %s91
      %p98 = scmp.eq.s32.totalorder %s18, 1
      %p99 = por %p97, %p98
      %p100 = scmp.ne.s32.totalorder %s91, %s92
      %p101 = scmp.eq.s32.totalorder %s18, 0
      %p102 = por %p100, %p101
      %p103 = scmp.ne.s32.totalorder %s91, %s92
      %p104 = scmp.eq.s32.totalorder %s19, 1
      %p105 = por %p103, %p104
      %p107 = scmp.ne.s32.totalorder %s92, %s106
      %p108 = scmp.eq.s32.totalorder %s19, 0
      %p109 = por %p107, %p108
      %s110 = ssub.s32 %s13, %s20
      %p111 = scmp.eq.s32.totalorder %s110, 0
      %s113 = sadd.s32 %s112, 1
      %s114 = scalar_select %p111, %s112, %s113
      %p117 = pneg %p111
      %p118 = scmp.eq.s32.totalorder %s13, 1
      %p119 = por %p117, %p118
      %p120 = scmp.ne.s32.totalorder %s112, %s115
      %p121 = scmp.eq.s32.totalorder %s13, 0
      %p122 = por %p120, %p121
      %p123 = scmp.ne.s32.totalorder %s112, %s115
      %p124 = scmp.eq.s32.totalorder %s18, 1
      %p125 = por %p123, %p124
      %p126 = scmp.ne.s32.totalorder %s115, %s116
      %p127 = scmp.eq.s32.totalorder %s18, 0
      %p128 = por %p126, %p127
      %p129 = scmp.ne.s32.totalorder %s115, %s116
      %p130 = scmp.eq.s32.totalorder %s19, 1
      %p131 = por %p129, %p130
      %p133 = scmp.ne.s32.totalorder %s116, %s132
      %p134 = scmp.eq.s32.totalorder %s19, 0
      %p135 = por %p133, %p134
      %p136 = scmp.le.s32.totalorder 1, %s13
      %p137 = scmp.lt.s32.totalorder %s13, 3
      %p138 = pnand %p136, %p137
      %p139 = pneg %p138
      // Predicated region
      $region9: #{tpu_custom_call.1} parent=5 // pred_check
        _
      $region10: #{tpu_custom_call.1} parent=5 // pred_check_branch
        %141 = sbr.rel (%p138) target = $region12
      $region11: #{tpu_custom_call.1} parent=5 // pred_region
        %s142 = ssub.s32 %s13, 1
        // Predicated region
        $region13: #{tpu_custom_call.1} parent=11 // pred_check
          %p143 = pneg %p60
        $region14: #{tpu_custom_call.1} parent=11 // pred_check_branch
          %145 = sbr.rel (%p143) target = $region16
        $region15: #{tpu_custom_call.1} parent=11 // pred_region
          _
        $region16: #{tpu_custom_call.1} parent=11 // pred_fallthru
          _
        // Predicated region
        $region17: #{tpu_custom_call.1} parent=11 // pred_check
          %p146 = pneg %p81
        $region18: #{tpu_custom_call.1} parent=11 // pred_check_branch
          %148 = sbr.rel (%p146) target = $region20
        $region19: #{tpu_custom_call.1} parent=11 // pred_region
          _
        $region20: #{tpu_custom_call.1} parent=11 // pred_fallthru
          _
        // Predicated region
        $region21: #{tpu_custom_call.1} parent=11 // pred_check
          %p149 = pneg %p102
        $region22: #{tpu_custom_call.1} parent=11 // pred_check_branch
          %151 = sbr.rel (%p149) target = $region24
        $region23: #{tpu_custom_call.1} parent=11 // pred_region
          _
        $region24: #{tpu_custom_call.1} parent=11 // pred_fallthru
          _
      $region12: #{tpu_custom_call.1} parent=5 // pred_fallthru
        _
      %p152 = scmp.lt.s32.totalorder %s13, 2
      // Predicated region
      $region25: #{tpu_custom_call.1} parent=5 // pred_check
        %p153 = pneg %p152
      $region26: #{tpu_custom_call.1} parent=5 // pred_check_branch
        %155 = sbr.rel (%p153) target = $region28
      $region27: #{tpu_custom_call.1} parent=5 // pred_region
        // Predicated region
        $region29: #{tpu_custom_call.1} parent=27 // pred_check
          %p156 = pneg %p33
        $region30: #{tpu_custom_call.1} parent=27 // pred_check_branch
          %158 = sbr.rel (%p156) target = $region32
        $region31: #{tpu_custom_call.1} parent=27 // pred_region
          %p159 = scmp.lt.s32.totalorder %s13, 1
          %s160 = scalar_select %p159, %s13, 1
          %s161 = smul.addr %s160, 5
          %s162 = smul.addr %s161, 8
          %s163 = scalar_lea.vmem %s0, %s162
        $region32: #{tpu_custom_call.1} parent=27 // pred_fallthru
          _
      $region28: #{tpu_custom_call.1} parent=5 // pred_fallthru
        _
      %p164 = scmp.le.s32.totalorder 1, %s13
      %p165 = scmp.lt.s32.totalorder %s13, 3
      %p166 = pnand %p164, %p165
      %p167 = pneg %p166
      // Predicated region
      $region33: #{tpu_custom_call.1} parent=5 // pred_check
        _
      $region34: #{tpu_custom_call.1} parent=5 // pred_check_branch
        %169 = sbr.rel (%p166) target = $region36
      $region35: #{tpu_custom_call.1} parent=5 // pred_region
        %s170 = ssub.s32 %s13, 1
        %p171 = scmp.lt.s32.totalorder %s18, 1
        %s172 = scalar_select %p171, %s18, 1
        %s173 = smul.addr %s172, 5
        %s174 = smul.addr %s173, 8
        %s175 = scalar_lea.vmem %s0, %s174
        %p176 = pneg %p39
        %p177 = pneg %p36
        %p178 = pneg %p60
        %p179 = pneg %p57
        %p180 = pneg %p81
        %p181 = pneg %p78
        %p182 = pneg %p102
        %p183 = pneg %p99
        %p184 = pneg %p128
        %p185 = pneg %p125
        %s186 = sand.u32 %s115, 1
        %s187 = scalar_lea.sflag [#allocation3], %s186
        %s188 = sand.u32 %s115, 1
        %s189 = smul.addr %s188, 80
        %s190 = scalar_lea.vmem [#allocation2], %s189
        %p191 = scmp.lt.s32.totalorder %s18, 1
        %s192 = scalar_select %p191, %s18, 1
        %s193 = smul.addr %s192, 5
        %s194 = smul.addr %s193, 8
        %s195 = scalar_lea.vmem %s0, %s194
        %v197 = vld [vmem:[%s3] sm:$0xff]
        %v198 = vld [vmem:[%s3 + $0x8] sm:$0xff]
        %v199 = vld [vmem:[%s3 + $0x10] sm:$0xff]
        %v200 = vld [vmem:[%s3 + $0x18] sm:$0xff]
        %v201 = vld [vmem:[%s3 + $0x20] sm:$0xff]
        %v202 = vld [vmem:[%s3 + $0x28] sm:$0xff]
        %v203 = vld [vmem:[%s3 + $0x30] sm:$0xff]
        %v204 = vld [vmem:[%s3 + $0x38] sm:$0xff]
        %v205 = vld [vmem:[%s3 + $0x40] sm:$0xff]
        %v206 = vld [vmem:[%s3 + $0x48] sm:$0xff]
        %v207 = vld [vmem:[%s195] sm:$0xff]
        %v208 = vld [vmem:[%s195 + $0x8] sm:$0xff]
        %v209 = vld [vmem:[%s195 + $0x10] sm:$0xff]
        %v210 = vld [vmem:[%s195 + $0x18] sm:$0xff]
        %v211 = vld [vmem:[%s195 + $0x20] sm:$0xff]
        %212 = vrot.lane.b32.xlu0 %v207, 11
        %v213 = vpop.permute.xlu0 %212
        %214 = vrot.lane.b32.xlu0 %v208, 11
        %v215 = vpop.permute.xlu0 %214
        %216 = vrot.lane.b32.xlu0 %v209, 11
        %v217 = vpop.permute.xlu0 %216
        %218 = vrot.lane.b32.xlu0 %v210, 11
        %v219 = vpop.permute.xlu0 %218
        %220 = vrot.lane.b32.xlu0 %v211, 11
        %v221 = vpop.permute.xlu0 %220
        %v222 = vld [vmem:[%s1] sm:$0xf]
        %v223 = vld [vmem:[%s1 + $0x4] sm:$0xf]
        %v224 = vld [vmem:[%s1 + $0x8] sm:$0xf]
        %v225 = vld [vmem:[%s1 + $0xc] sm:$0xf]
        %v226 = vld [vmem:[%s1 + $0x10] sm:$0xf]
        %v227 = vld [vmem:[%s1 + $0x14] sm:$0xf]
        %v228 = vld [vmem:[%s1 + $0x18] sm:$0xf]
        %v229 = vld [vmem:[%s1 + $0x1c] sm:$0xf]
        %v230 = vld [vmem:[%s1 + $0x20] sm:$0xf]
        %v231 = vld [vmem:[%s1 + $0x24] sm:$0xf]
        %v232 = vpack.c.bf16 %v215, %v213
        %v233 = vpack.c.bf16 %v219, %v217
        %v234 = vpack.c.bf16 %v221, %v221
        %235 = vrot.lane.b32.xlu0 %v207, 10
        %v236 = vpop.permute.xlu0 %235
        %237 = vrot.lane.b32.xlu0 %v208, 10
        %v238 = vpop.permute.xlu0 %237
        %239 = vrot.lane.b32.xlu0 %v209, 10
        %v240 = vpop.permute.xlu0 %239
        %241 = vrot.lane.b32.xlu0 %v210, 10
        %v242 = vpop.permute.xlu0 %241
        %243 = vrot.lane.b32.xlu0 %v211, 10
        %v244 = vpop.permute.xlu0 %243
        %s245 = scalar_lea.vmem %s1, 40
        %v246 = vld [vmem:[%s245] sm:$0xf]
        %v247 = vld [vmem:[%s245 + $0x4] sm:$0xf]
        %v248 = vld [vmem:[%s245 + $0x8] sm:$0xf]
        %v249 = vld [vmem:[%s245 + $0xc] sm:$0xf]
        %v250 = vld [vmem:[%s245 + $0x10] sm:$0xf]
        %v251 = vld [vmem:[%s245 + $0x14] sm:$0xf]
        %v252 = vld [vmem:[%s245 + $0x18] sm:$0xf]
        %v253 = vld [vmem:[%s245 + $0x1c] sm:$0xf]
        %v254 = vld [vmem:[%s245 + $0x20] sm:$0xf]
        %v255 = vld [vmem:[%s245 + $0x24] sm:$0xf]
        %v256 = vpack.c.bf16 %v238, %v236
        %v257 = vpack.c.bf16 %v242, %v240
        %v258 = vpack.c.bf16 %v244, %v244
        %v269 = vunpack.c.l.b16 %v246
        %v270 = vunpack.c.l.b16 %v247
        %v271 = vunpack.c.l.b16 %v248
        %v272 = vunpack.c.l.b16 %v249
        %v273 = vunpack.c.l.b16 %v250
        %v274 = vunpack.c.l.b16 %v251
        %v275 = vunpack.c.l.b16 %v252
        %v276 = vunpack.c.l.b16 %v253
        %v277 = vunpack.c.l.b16 %v254
        %v278 = vunpack.c.l.b16 %v255
        %v279 = vpack.c.b16 %v270, %v269
        %v280 = vpack.c.b16 %v272, %v271
        %v281 = vpack.c.b16 %v274, %v273
        %v282 = vpack.c.b16 %v276, %v275
        %v283 = vpack.c.b16 %v278, %v277
        %vm284 = vcmask 326656
        %v286 = vsel %vm284, %v279, 0
        %v289 = vsel %vm284, %v280, 0
        %v292 = vsel %vm284, %v281, 0
        %v295 = vsel %vm284, %v282, 0
        %v298 = vsel %vm284, %v283, 0
        %vm300 = vcmask 1043456
        %v302 = vsel %vm300, %v258, 0
        %304 = vmatprep.subr.bf16.mxu0 0
        %305 = vmatpush1.bf16.msra.mxu0 %v256
        %306 = vmatprep.subr.bf16.mxu0 0
        %307 = vmatpush1.bf16.msra.mxu0 %v257
        %308 = vmatprep.subr.bf16.mxu0 0
        %309 = vmatpush1.bf16.msra.mxu0 %v302
        %310 = vmatprep.subr.bf16.mxu0 0
        %311 = vmatpush1.bf16.msra.mxu0 0
        %312 = vmatprep.subr.bf16.mxu0 0
        %313 = vmatpush1.bf16.msra.mxu0 0
        %314 = vmatprep.subr.bf16.mxu0 0
        %315 = vmatpush1.bf16.msra.mxu0 0
        %316 = vmatprep.subr.bf16.mxu0 0
        %317 = vmatpush1.bf16.msra.mxu0 0
        %318 = vmatprep.subr.bf16.mxu0 0
        %319 = vmatpush1.bf16.msra.mxu0 0
        %320 = vmatprep.subr.bf16.mxu0 0
        %321 = vmatpush1.bf16.msra.mxu0 0
        %322 = vmatprep.subr.bf16.mxu0 0
        %323 = vmatpush1.bf16.msra.mxu0 0
        %324 = vmatprep.subr.bf16.mxu0 0
        %325 = vmatpush1.bf16.msra.mxu0 0
        %326 = vmatprep.subr.bf16.mxu0 0
        %327 = vmatpush1.bf16.msra.mxu0 0
        %328 = vmatprep.subr.bf16.mxu0 0
        %329 = vmatpush1.bf16.msra.mxu0 0
        %330 = vmatprep.subr.bf16.mxu0 0
        %331 = vmatpush1.bf16.msra.mxu0 0
        %332 = vmatprep.subr.bf16.mxu0 0
        %333 = vmatpush1.bf16.msra.mxu0 0
        %334 = vmatprep.subr.bf16.mxu0 0
        %335 = vmatpush1.bf16.msra.mxu0 0
        %336 = vmatprep.mubr.bf16.mxu0 0
        %337 = vmatmul.mubr.bf16.gmra.mrb[0].mxu0 %v286
        %v338 = vpop.f32.mrb[0].mxu0
        %v339 = vadd.f32 0.0, %v338
        %v340 = vpop.f32.mrb[0].mxu0
        %v341 = vpop.f32.mrb[0].mxu0
        %v342 = vadd.f32 0.0, %v341
        %v343 = vpop.f32.mrb[0].mxu0
        %344 = vmatprep.mubr.bf16.mxu0 0
        %345 = vmatmul.mubr.bf16.gmra.mrb[0].mxu0 %v289
        %v346 = vpop.f32.mrb[0].mxu0
        %v347 = vadd.f32 0.0, %v346
        %v348 = vpop.f32.mrb[0].mxu0
        %v349 = vpop.f32.mrb[0].mxu0
        %v350 = vadd.f32 0.0, %v349
        %v351 = vpop.f32.mrb[0].mxu0
        %352 = vmatprep.mubr.bf16.mxu0 0
        %353 = vmatmul.mubr.bf16.gmra.mrb[0].mxu0 %v292
        %v354 = vpop.f32.mrb[0].mxu0
        %v355 = vadd.f32 0.0, %v354
        %v356 = vpop.f32.mrb[0].mxu0
        %v357 = vpop.f32.mrb[0].mxu0
        %v358 = vadd.f32 0.0, %v357
        %v359 = vpop.f32.mrb[0].mxu0
        %360 = vmatprep.mubr.bf16.mxu0 0
        %361 = vmatmul.mubr.bf16.gmra.mrb[0].mxu0 %v295
        %v362 = vpop.f32.mrb[0].mxu0
        %v363 = vadd.f32 0.0, %v362
        %v364 = vpop.f32.mrb[0].mxu0
        %v365 = vpop.f32.mrb[0].mxu0
        %v366 = vadd.f32 0.0, %v365
        %v367 = vpop.f32.mrb[0].mxu0
        %368 = vmatprep.mubr.bf16.mxu0 0
        %369 = vmatmul.mubr.bf16.gmra.mrb[0].mxu0 %v298
        %v370 = vpop.f32.mrb[0].mxu0
        %v371 = vadd.f32 0.0, %v370
        %v372 = vpop.f32.mrb[0].mxu0
        %v373 = vpop.f32.mrb[0].mxu0
        %v374 = vadd.f32 0.0, %v373
        %v375 = vpop.f32.mrb[0].mxu0
        %376 = vdwg.mxu0
        %v387 = vunpack.c.l.b16 %v222
        %v388 = vunpack.c.l.b16 %v223
        %v389 = vunpack.c.l.b16 %v224
        %v390 = vunpack.c.l.b16 %v225
        %v391 = vunpack.c.l.b16 %v226
        %v392 = vunpack.c.l.b16 %v227
        %v393 = vunpack.c.l.b16 %v228
        %v394 = vunpack.c.l.b16 %v229
        %v395 = vunpack.c.l.b16 %v230
        %v396 = vunpack.c.l.b16 %v231
        %v397 = vpack.c.b16 %v388, %v387
        %v398 = vpack.c.b16 %v390, %v389
        %v399 = vpack.c.b16 %v392, %v391
        %v400 = vpack.c.b16 %v394, %v393
        %v401 = vpack.c.b16 %v396, %v395
        %v403 = vsel %vm284, %v397, 0
        %v406 = vsel %vm284, %v398, 0
        %v409 = vsel %vm284, %v399, 0
        %v412 = vsel %vm284, %v400, 0
        %v415 = vsel %vm284, %v401, 0
        %v418 = vsel %vm300, %v234, 0
        %420 = vmatprep.subr.bf16.mxu0 0
        %421 = vmatpush1.bf16.msra.mxu0 %v232
        %422 = vmatprep.subr.bf16.mxu0 0
        %423 = vmatpush1.bf16.msra.mxu0 %v233
        %424 = vmatprep.subr.bf16.mxu0 0
        %425 = vmatpush1.bf16.msra.mxu0 %v418
        %426 = vmatprep.subr.bf16.mxu0 0
        %427 = vmatpush1.bf16.msra.mxu0 0
        %428 = vmatprep.subr.bf16.mxu0 0
        %429 = vmatpush1.bf16.msra.mxu0 0
        %430 = vmatprep.subr.bf16.mxu0 0
        %431 = vmatpush1.bf16.msra.mxu0 0
        %432 = vmatprep.subr.bf16.mxu0 0
        %433 = vmatpush1.bf16.msra.mxu0 0
        %434 = vmatprep.subr.bf16.mxu0 0
        %435 = vmatpush1.bf16.msra.mxu0 0
        %436 = vmatprep.subr.bf16.mxu0 0
        %437 = vmatpush1.bf16.msra.mxu0 0
        %438 = vmatprep.subr.bf16.mxu0 0
        %439 = vmatpush1.bf16.msra.mxu0 0
        %440 = vmatprep.subr.bf16.mxu0 0
        %441 = vmatpush1.bf16.msra.mxu0 0
        %442 = vmatprep.subr.bf16.mxu0 0
        %443 = vmatpush1.bf16.msra.mxu0 0
        %444 = vmatprep.subr.bf16.mxu0 0
        %445 = vmatpush1.bf16.msra.mxu0 0
        %446 = vmatprep.subr.bf16.mxu0 0
        %447 = vmatpush1.bf16.msra.mxu0 0
        %448 = vmatprep.subr.bf16.mxu0 0
        %449 = vmatpush1.bf16.msra.mxu0 0
        %450 = vmatprep.subr.bf16.mxu0 0
        %451 = vmatpush1.bf16.msra.mxu0 0
        %452 = vmatprep.mubr.bf16.mxu0 0
        %453 = vmatmul.mubr.bf16.gmra.mrb[0].mxu0 %v403
        %v454 = vpop.f32.mrb[0].mxu0
        %v455 = vadd.f32 %v339, %v454
        %v456 = vpop.f32.mrb[0].mxu0
        %v457 = vpop.f32.mrb[0].mxu0
        %v458 = vadd.f32 %v342, %v457
        %v459 = vpop.f32.mrb[0].mxu0
        %460 = vmatprep.mubr.bf16.mxu0 0
        %461 = vmatmul.mubr.bf16.gmra.mrb[0].mxu0 %v406
        %v462 = vpop.f32.mrb[0].mxu0
        %v463 = vadd.f32 %v347, %v462
        %v464 = vpop.f32.mrb[0].mxu0
        %v465 = vpop.f32.mrb[0].mxu0
        %v466 = vadd.f32 %v350, %v465
        %v467 = vpop.f32.mrb[0].mxu0
        %468 = vmatprep.mubr.bf16.mxu0 0
        %469 = vmatmul.mubr.bf16.gmra.mrb[0].mxu0 %v409
        %v470 = vpop.f32.mrb[0].mxu0
        %v471 = vadd.f32 %v355, %v470
        %v472 = vpop.f32.mrb[0].mxu0
        %v473 = vpop.f32.mrb[0].mxu0
        %v474 = vadd.f32 %v358, %v473
        %v475 = vpop.f32.mrb[0].mxu0
        %476 = vmatprep.mubr.bf16.mxu0 0
        %477 = vmatmul.mubr.bf16.gmra.mrb[0].mxu0 %v412
        %v478 = vpop.f32.mrb[0].mxu0
        %v479 = vadd.f32 %v363, %v478
        %v480 = vpop.f32.mrb[0].mxu0
        %v481 = vpop.f32.mrb[0].mxu0
        %v482 = vadd.f32 %v366, %v481
        %v483 = vpop.f32.mrb[0].mxu0
        %484 = vmatprep.mubr.bf16.mxu0 0
        %485 = vmatmul.mubr.bf16.gmra.mrb[0].mxu0 %v415
        %v486 = vpop.f32.mrb[0].mxu0
        %v487 = vadd.f32 %v371, %v486
        %v488 = vpop.f32.mrb[0].mxu0
        %v489 = vpop.f32.mrb[0].mxu0
        %v490 = vadd.f32 %v374, %v489
        %v491 = vpop.f32.mrb[0].mxu0
        %492 = vdwg.mxu0
        %493 = vrot.lane.b32.xlu0 %v207, 9
        %v494 = vpop.permute.xlu0 %493
        %495 = vrot.lane.b32.xlu0 %v208, 9
        %v496 = vpop.permute.xlu0 %495
        %497 = vrot.lane.b32.xlu0 %v209, 9
        %v498 = vpop.permute.xlu0 %497
        %499 = vrot.lane.b32.xlu0 %v210, 9
        %v500 = vpop.permute.xlu0 %499
        %501 = vrot.lane.b32.xlu0 %v211, 9
        %v502 = vpop.permute.xlu0 %501
        %s503 = scalar_lea.vmem %s1, 80
        %v504 = vld [vmem:[%s503] sm:$0xf]
        %v505 = vld [vmem:[%s503 + $0x4] sm:$0xf]
        %v506 = vld [vmem:[%s503 + $0x8] sm:$0xf]
        %v507 = vld [vmem:[%s503 + $0xc] sm:$0xf]
        %v508 = vld [vmem:[%s503 + $0x10] sm:$0xf]
        %v509 = vld [vmem:[%s503 + $0x14] sm:$0xf]
        %v510 = vld [vmem:[%s503 + $0x18] sm:$0xf]
        %v511 = vld [vmem:[%s503 + $0x1c] sm:$0xf]
        %v512 = vld [vmem:[%s503 + $0x20] sm:$0xf]
        %v513 = vld [vmem:[%s503 + $0x24] sm:$0xf]
        %v514 = vpack.c.bf16 %v496, %v494
        %v515 = vpack.c.bf16 %v500, %v498
        %v516 = vpack.c.bf16 %v502, %v502
        %v527 = vunpack.c.l.b16 %v504
        %v528 = vunpack.c.l.b16 %v505
        %v529 = vunpack.c.l.b16 %v506
        %v530 = vunpack.c.l.b16 %v507
        %v531 = vunpack.c.l.b16 %v508
        %v532 = vunpack.c.l.b16 %v509
        %v533 = vunpack.c.l.b16 %v510
        %v534 = vunpack.c.l.b16 %v511
        %v535 = vunpack.c.l.b16 %v512
        %v536 = vunpack.c.l.b16 %v513
        %v537 = vpack.c.b16 %v528, %v527
        %v538 = vpack.c.b16 %v530, %v529
        %v539 = vpack.c.b16 %v532, %v531
        %v540 = vpack.c.b16 %v534, %v533
        %v541 = vpack.c.b16 %v536, %v535
        %v543 = vsel %vm284, %v537, 0
        %v546 = vsel %vm284, %v538, 0
        %v549 = vsel %vm284, %v539, 0
        %v552 = vsel %vm284, %v540, 0
        %v555 = vsel %vm284, %v541, 0
        %v558 = vsel %vm300, %v516, 0
        %560 = vmatprep.subr.bf16.mxu0 0
        %561 = vmatpush1.bf16.msra.mxu0 %v514
        %562 = vmatprep.subr.bf16.mxu0 0
        %563 = vmatpush1.bf16.msra.mxu0 %v515
        %564 = vmatprep.subr.bf16.mxu0 0
        %565 = vmatpush1.bf16.msra.mxu0 %v558
        %566 = vmatprep.subr.bf16.mxu0 0
        %567 = vmatpush1.bf16.msra.mxu0 0
        %568 = vmatprep.subr.bf16.mxu0 0
        %569 = vmatpush1.bf16.msra.mxu0 0
        %570 = vmatprep.subr.bf16.mxu0 0
        %571 = vmatpush1.bf16.msra.mxu0 0
        %572 = vmatprep.subr.bf16.mxu0 0
        %573 = vmatpush1.bf16.msra.mxu0 0
        %574 = vmatprep.subr.bf16.mxu0 0
        %575 = vmatpush1.bf16.msra.mxu0 0
        %576 = vmatprep.subr.bf16.mxu0 0
        %577 = vmatpush1.bf16.msra.mxu0 0
        %578 = vmatprep.subr.bf16.mxu0 0
        %579 = vmatpush1.bf16.msra.mxu0 0
        %580 = vmatprep.subr.bf16.mxu0 0
        %581 = vmatpush1.bf16.msra.mxu0 0
        %582 = vmatprep.subr.bf16.mxu0 0
        %583 = vmatpush1.bf16.msra.mxu0 0
        %584 = vmatprep.subr.bf16.mxu0 0
        %585 = vmatpush1.bf16.msra.mxu0 0
        %586 = vmatprep.subr.bf16.mxu0 0
        %587 = vmatpush1.bf16.msra.mxu0 0
        %588 = vmatprep.subr.bf16.mxu0 0
        %589 = vmatpush1.bf16.msra.mxu0 0
        %590 = vmatprep.subr.bf16.mxu0 0
        %591 = vmatpush1.bf16.msra.mxu0 0
        %592 = vmatprep.mubr.bf16.mxu0 0
        %593 = vmatmul.mubr.bf16.gmra.mrb[0].mxu0 %v543
        %v594 = vpop.f32.mrb[0].mxu0
        %v595 = vadd.f32 0.0, %v594
        %v596 = vpop.f32.mrb[0].mxu0
        %v597 = vpop.f32.mrb[0].mxu0
        %v598 = vadd.f32 0.0, %v597
        %v599 = vpop.f32.mrb[0].mxu0
        %600 = vmatprep.mubr.bf16.mxu0 0
        %601 = vmatmul.mubr.bf16.gmra.mrb[0].mxu0 %v546
        %v602 = vpop.f32.mrb[0].mxu0
        %v603 = vadd.f32 0.0, %v602
        %v604 = vpop.f32.mrb[0].mxu0
        %v605 = vpop.f32.mrb[0].mxu0
        %v606 = vadd.f32 0.0, %v605
        %v607 = vpop.f32.mrb[0].mxu0
        %608 = vmatprep.mubr.bf16.mxu0 0
        %609 = vmatmul.mubr.bf16.gmra.mrb[0].mxu0 %v549
        %v610 = vpop.f32.mrb[0].mxu0
        %v611 = vadd.f32 0.0, %v610
        %v612 = vpop.f32.mrb[0].mxu0
        %v613 = vpop.f32.mrb[0].mxu0
        %v614 = vadd.f32 0.0, %v613
        %v615 = vpop.f32.mrb[0].mxu0
        %616 = vmatprep.mubr.bf16.mxu0 0
        %617 = vmatmul.mubr.bf16.gmra.mrb[0].mxu0 %v552
        %v618 = vpop.f32.mrb[0].mxu0
        %v619 = vadd.f32 0.0, %v618
        %v620 = vpop.f32.mrb[0].mxu0
        %v621 = vpop.f32.mrb[0].mxu0
        %v622 = vadd.f32 0.0, %v621
        %v623 = vpop.f32.mrb[0].mxu0
        %624 = vmatprep.mubr.bf16.mxu0 0
        %625 = vmatmul.mubr.bf16.gmra.mrb[0].mxu0 %v555
        %v626 = vpop.f32.mrb[0].mxu0
        %v627 = vadd.f32 0.0, %v626
        %v628 = vpop.f32.mrb[0].mxu0
        %v629 = vpop.f32.mrb[0].mxu0
        %v630 = vadd.f32 0.0, %v629
        %v631 = vpop.f32.mrb[0].mxu0
        %632 = vdwg.mxu0
        %v633 = vadd.f32 %v455, %v595
        %v634 = vadd.f32 %v458, %v598
        %v635 = vadd.f32 %v463, %v603
        %v636 = vadd.f32 %v466, %v606
        %v637 = vadd.f32 %v471, %v611
        %v638 = vadd.f32 %v474, %v614
        %v639 = vadd.f32 %v479, %v619
        %v640 = vadd.f32 %v482, %v622
        %v641 = vadd.f32 %v487, %v627
        %v642 = vadd.f32 %v490, %v630
        %643 = vrot.lane.b32.xlu0 %v207, 1
        %v644 = vpop.permute.xlu0 %643
        %645 = vrot.lane.b32.xlu0 %v208, 1
        %v646 = vpop.permute.xlu0 %645
        %647 = vrot.lane.b32.xlu0 %v209, 1
        %v648 = vpop.permute.xlu0 %647
        %649 = vrot.lane.b32.xlu0 %v210, 1
        %v650 = vpop.permute.xlu0 %649
        %651 = vrot.lane.b32.xlu0 %v211, 1
        %v652 = vpop.permute.xlu0 %651
        %s653 = scalar_lea.vmem %s1, 120
        %v654 = vld [vmem:[%s653] sm:$0xf]
        %v655 = vld [vmem:[%s653 + $0x4] sm:$0xf]
        %v656 = vld [vmem:[%s653 + $0x8] sm:$0xf]
        %v657 = vld [vmem:[%s653 + $0xc] sm:$0xf]
        %v658 = vld [vmem:[%s653 + $0x10] sm:$0xf]
        %v659 = vld [vmem:[%s653 + $0x14] sm:$0xf]
        %v660 = vld [vmem:[%s653 + $0x18] sm:$0xf]
        %v661 = vld [vmem:[%s653 + $0x1c] sm:$0xf]
        %v662 = vld [vmem:[%s653 + $0x20] sm:$0xf]
        %v663 = vld [vmem:[%s653 + $0x24] sm:$0xf]
        %v664 = vpack.c.bf16 %v646, %v644
        %v665 = vpack.c.bf16 %v650, %v648
        %v666 = vpack.c.bf16 %v652, %v652
        %v677 = vunpack.c.l.b16 %v654
        %v678 = vunpack.c.l.b16 %v655
        %v679 = vunpack.c.l.b16 %v656
        %v680 = vunpack.c.l.b16 %v657
        %v681 = vunpack.c.l.b16 %v658
        %v682 = vunpack.c.l.b16 %v659
        %v683 = vunpack.c.l.b16 %v660
        %v684 = vunpack.c.l.b16 %v661
        %v685 = vunpack.c.l.b16 %v662
        %v686 = vunpack.c.l.b16 %v663
        %v687 = vpack.c.b16 %v678, %v677
        %v688 = vpack.c.b16 %v680, %v679
        %v689 = vpack.c.b16 %v682, %v681
        %v690 = vpack.c.b16 %v684, %v683
        %v691 = vpack.c.b16 %v686, %v685
        %v693 = vsel %vm284, %v687, 0
        %v696 = vsel %vm284, %v688, 0
        %v699 = vsel %vm284, %v689, 0
        %v702 = vsel %vm284, %v690, 0
        %v705 = vsel %vm284, %v691, 0
        %v708 = vsel %vm300, %v666, 0
        %710 = vmatprep.subr.bf16.mxu0 0
        %711 = vmatpush1.bf16.msra.mxu0 %v664
        %712 = vmatprep.subr.bf16.mxu0 0
        %713 = vmatpush1.bf16.msra.mxu0 %v665
        %714 = vmatprep.subr.bf16.mxu0 0
        %715 = vmatpush1.bf16.msra.mxu0 %v708
        %716 = vmatprep.subr.bf16.mxu0 0
        %717 = vmatpush1.bf16.msra.mxu0 0
        %718 = vmatprep.subr.bf16.mxu0 0
        %719 = vmatpush1.bf16.msra.mxu0 0
        %720 = vmatprep.subr.bf16.mxu0 0
        %721 = vmatpush1.bf16.msra.mxu0 0
        %722 = vmatprep.subr.bf16.mxu0 0
        %723 = vmatpush1.bf16.msra.mxu0 0
        %724 = vmatprep.subr.bf16.mxu0 0
        %725 = vmatpush1.bf16.msra.mxu0 0
        %726 = vmatprep.subr.bf16.mxu0 0
        %727 = vmatpush1.bf16.msra.mxu0 0
        %728 = vmatprep.subr.bf16.mxu0 0
        %729 = vmatpush1.bf16.msra.mxu0 0
        %730 = vmatprep.subr.bf16.mxu0 0
        %731 = vmatpush1.bf16.msra.mxu0 0
        %732 = vmatprep.subr.bf16.mxu0 0
        %733 = vmatpush1.bf16.msra.mxu0 0
        %734 = vmatprep.subr.bf16.mxu0 0
        %735 = vmatpush1.bf16.msra.mxu0 0
        %736 = vmatprep.subr.bf16.mxu0 0
        %737 = vmatpush1.bf16.msra.mxu0 0
        %738 = vmatprep.subr.bf16.mxu0 0
        %739 = vmatpush1.bf16.msra.mxu0 0
        %740 = vmatprep.subr.bf16.mxu0 0
        %741 = vmatpush1.bf16.msra.mxu0 0
        %742 = vmatprep.mubr.bf16.mxu0 0
        %743 = vmatmul.mubr.bf16.gmra.mrb[0].mxu0 %v693
        %v744 = vpop.f32.mrb[0].mxu0
        %v745 = vadd.f32 0.0, %v744
        %v746 = vpop.f32.mrb[0].mxu0
        %v747 = vpop.f32.mrb[0].mxu0
        %v748 = vadd.f32 0.0, %v747
        %v749 = vpop.f32.mrb[0].mxu0
        %750 = vmatprep.mubr.bf16.mxu0 0
        %751 = vmatmul.mubr.bf16.gmra.mrb[0].mxu0 %v696
        %v752 = vpop.f32.mrb[0].mxu0
        %v753 = vadd.f32 0.0, %v752
        %v754 = vpop.f32.mrb[0].mxu0
        %v755 = vpop.f32.mrb[0].mxu0
        %v756 = vadd.f32 0.0, %v755
        %v757 = vpop.f32.mrb[0].mxu0
        %758 = vmatprep.mubr.bf16.mxu0 0
        %759 = vmatmul.mubr.bf16.gmra.mrb[0].mxu0 %v699
        %v760 = vpop.f32.mrb[0].mxu0
        %v761 = vadd.f32 0.0, %v760
        %v762 = vpop.f32.mrb[0].mxu0
        %v763 = vpop.f32.mrb[0].mxu0
        %v764 = vadd.f32 0.0, %v763
        %v765 = vpop.f32.mrb[0].mxu0
        %766 = vmatprep.mubr.bf16.mxu0 0
        %767 = vmatmul.mubr.bf16.gmra.mrb[0].mxu0 %v702
        %v768 = vpop.f32.mrb[0].mxu0
        %v769 = vadd.f32 0.0, %v768
        %v770 = vpop.f32.mrb[0].mxu0
        %v771 = vpop.f32.mrb[0].mxu0
        %v772 = vadd.f32 0.0, %v771
        %v773 = vpop.f32.mrb[0].mxu0
        %774 = vmatprep.mubr.bf16.mxu0 0
        %775 = vmatmul.mubr.bf16.gmra.mrb[0].mxu0 %v705
        %v776 = vpop.f32.mrb[0].mxu0
        %v777 = vadd.f32 0.0, %v776
        %v778 = vpop.f32.mrb[0].mxu0
        %v779 = vpop.f32.mrb[0].mxu0
        %v780 = vadd.f32 0.0, %v779
        %v781 = vpop.f32.mrb[0].mxu0
        %782 = vdwg.mxu0
        %v783 = vadd.f32 %v633, %v745
        %v784 = vadd.f32 %v634, %v748
        %v785 = vadd.f32 %v635, %v753
        %v786 = vadd.f32 %v636, %v756
        %v787 = vadd.f32 %v637, %v761
        %v788 = vadd.f32 %v638, %v764
        %v789 = vadd.f32 %v639, %v769
        %v790 = vadd.f32 %v640, %v772
        %v791 = vadd.f32 %v641, %v777
        %v792 = vadd.f32 %v642, %v780
        %s793 = scalar_lea.vmem %s1, 160
        %v794 = vld [vmem:[%s793] sm:$0xf]
        %v795 = vld [vmem:[%s793 + $0x4] sm:$0xf]
        %v796 = vld [vmem:[%s793 + $0x8] sm:$0xf]
        %v797 = vld [vmem:[%s793 + $0xc] sm:$0xf]
        %v798 = vld [vmem:[%s793 + $0x10] sm:$0xf]
        %v799 = vld [vmem:[%s793 + $0x14] sm:$0xf]
        %v800 = vld [vmem:[%s793 + $0x18] sm:$0xf]
        %v801 = vld [vmem:[%s793 + $0x1c] sm:$0xf]
        %v802 = vld [vmem:[%s793 + $0x20] sm:$0xf]
        %v803 = vld [vmem:[%s793 + $0x24] sm:$0xf]
        %v804 = vpack.c.bf16 %v208, %v207
        %v805 = vpack.c.bf16 %v210, %v209
        %v806 = vpack.c.bf16 %v211, %v211
        %v817 = vunpack.c.l.b16 %v794
        %v818 = vunpack.c.l.b16 %v795
        %v819 = vunpack.c.l.b16 %v796
        %v820 = vunpack.c.l.b16 %v797
        %v821 = vunpack.c.l.b16 %v798
        %v822 = vunpack.c.l.b16 %v799
        %v823 = vunpack.c.l.b16 %v800
        %v824 = vunpack.c.l.b16 %v801
        %v825 = vunpack.c.l.b16 %v802
        %v826 = vunpack.c.l.b16 %v803
        %v827 = vpack.c.b16 %v818, %v817
        %v828 = vpack.c.b16 %v820, %v819
        %v829 = vpack.c.b16 %v822, %v821
        %v830 = vpack.c.b16 %v824, %v823
        %v831 = vpack.c.b16 %v826, %v825
        %v833 = vsel %vm284, %v827, 0
        %v836 = vsel %vm284, %v828, 0
        %v839 = vsel %vm284, %v829, 0
        %v842 = vsel %vm284, %v830, 0
        %v845 = vsel %vm284, %v831, 0
        %v848 = vsel %vm300, %v806, 0
        %850 = vmatprep.subr.bf16.mxu0 0
        %851 = vmatpush1.bf16.msra.mxu0 %v804
        %852 = vmatprep.subr.bf16.mxu0 0
        %853 = vmatpush1.bf16.msra.mxu0 %v805
        %854 = vmatprep.subr.bf16.mxu0 0
        %855 = vmatpush1.bf16.msra.mxu0 %v848
        %856 = vmatprep.subr.bf16.mxu0 0
        %857 = vmatpush1.bf16.msra.mxu0 0
        %858 = vmatprep.subr.bf16.mxu0 0
        %859 = vmatpush1.bf16.msra.mxu0 0
        %860 = vmatprep.subr.bf16.mxu0 0
        %861 = vmatpush1.bf16.msra.mxu0 0
        %862 = vmatprep.subr.bf16.mxu0 0
        %863 = vmatpush1.bf16.msra.mxu0 0
        %864 = vmatprep.subr.bf16.mxu0 0
        %865 = vmatpush1.bf16.msra.mxu0 0
        %866 = vmatprep.subr.bf16.mxu0 0
        %867 = vmatpush1.bf16.msra.mxu0 0
        %868 = vmatprep.subr.bf16.mxu0 0
        %869 = vmatpush1.bf16.msra.mxu0 0
        %870 = vmatprep.subr.bf16.mxu0 0
        %871 = vmatpush1.bf16.msra.mxu0 0
        %872 = vmatprep.subr.bf16.mxu0 0
        %873 = vmatpush1.bf16.msra.mxu0 0
        %874 = vmatprep.subr.bf16.mxu0 0
        %875 = vmatpush1.bf16.msra.mxu0 0
        %876 = vmatprep.subr.bf16.mxu0 0
        %877 = vmatpush1.bf16.msra.mxu0 0
        %878 = vmatprep.subr.bf16.mxu0 0
        %879 = vmatpush1.bf16.msra.mxu0 0
        %880 = vmatprep.subr.bf16.mxu0 0
        %881 = vmatpush1.bf16.msra.mxu0 0
        %882 = vmatprep.mubr.bf16.mxu0 0
        %883 = vmatmul.mubr.bf16.gmra.mrb[0].mxu0 %v833
        %v884 = vpop.f32.mrb[0].mxu0
        %v885 = vadd.f32 0.0, %v884
        %v886 = vpop.f32.mrb[0].mxu0
        %v887 = vpop.f32.mrb[0].mxu0
        %v888 = vadd.f32 0.0, %v887
        %v889 = vpop.f32.mrb[0].mxu0
        %890 = vmatprep.mubr.bf16.mxu0 0
        %891 = vmatmul.mubr.bf16.gmra.mrb[0].mxu0 %v836
        %v892 = vpop.f32.mrb[0].mxu0
        %v893 = vadd.f32 0.0, %v892
        %v894 = vpop.f32.mrb[0].mxu0
        %v895 = vpop.f32.mrb[0].mxu0
        %v896 = vadd.f32 0.0, %v895
        %v897 = vpop.f32.mrb[0].mxu0
        %898 = vmatprep.mubr.bf16.mxu0 0
        %899 = vmatmul.mubr.bf16.gmra.mrb[0].mxu0 %v839
        %v900 = vpop.f32.mrb[0].mxu0
        %v901 = vadd.f32 0.0, %v900
        %v902 = vpop.f32.mrb[0].mxu0
        %v903 = vpop.f32.mrb[0].mxu0
        %v904 = vadd.f32 0.0, %v903
        %v905 = vpop.f32.mrb[0].mxu0
        %906 = vmatprep.mubr.bf16.mxu0 0
        %907 = vmatmul.mubr.bf16.gmra.mrb[0].mxu0 %v842
        %v908 = vpop.f32.mrb[0].mxu0
        %v909 = vadd.f32 0.0, %v908
        %v910 = vpop.f32.mrb[0].mxu0
        %v911 = vpop.f32.mrb[0].mxu0
        %v912 = vadd.f32 0.0, %v911
        %v913 = vpop.f32.mrb[0].mxu0
        %914 = vmatprep.mubr.bf16.mxu0 0
        %915 = vmatmul.mubr.bf16.gmra.mrb[0].mxu0 %v845
        %v916 = vpop.f32.mrb[0].mxu0
        %v917 = vadd.f32 0.0, %v916
        %v918 = vpop.f32.mrb[0].mxu0
        %v919 = vpop.f32.mrb[0].mxu0
        %v920 = vadd.f32 0.0, %v919
        %v921 = vpop.f32.mrb[0].mxu0
        %922 = vdwg.mxu0
        %v923 = vadd.f32 %v783, %v885
        %v924 = vadd.f32 %v784, %v888
        %v925 = vadd.f32 %v785, %v893
        %v926 = vadd.f32 %v786, %v896
        %v927 = vadd.f32 %v787, %v901
        %v928 = vadd.f32 %v788, %v904
        %v929 = vadd.f32 %v789, %v909
        %v930 = vadd.f32 %v790, %v912
        %v931 = vadd.f32 %v791, %v917
        %v932 = vadd.f32 %v792, %v920
        %933 = vrot.lane.b32.xlu0 %v207, 127
        %v934 = vpop.permute.xlu0 %933
        %935 = vrot.lane.b32.xlu0 %v208, 127
        %v936 = vpop.permute.xlu0 %935
        %937 = vrot.lane.b32.xlu0 %v209, 127
        %v938 = vpop.permute.xlu0 %937
        %939 = vrot.lane.b32.xlu0 %v210, 127
        %v940 = vpop.permute.xlu0 %939
        %941 = vrot.lane.b32.xlu0 %v211, 127
        %v942 = vpop.permute.xlu0 %941
        %s943 = scalar_lea.vmem %s1, 200
        %v944 = vld [vmem:[%s943] sm:$0xf]
        %v945 = vld [vmem:[%s943 + $0x4] sm:$0xf]
        %v946 = vld [vmem:[%s943 + $0x8] sm:$0xf]
        %v947 = vld [vmem:[%s943 + $0xc] sm:$0xf]
        %v948 = vld [vmem:[%s943 + $0x10] sm:$0xf]
        %v949 = vld [vmem:[%s943 + $0x14] sm:$0xf]
        %v950 = vld [vmem:[%s943 + $0x18] sm:$0xf]
        %v951 = vld [vmem:[%s943 + $0x1c] sm:$0xf]
        %v952 = vld [vmem:[%s943 + $0x20] sm:$0xf]
        %v953 = vld [vmem:[%s943 + $0x24] sm:$0xf]
        %v954 = vpack.c.bf16 %v936, %v934
        %v955 = vpack.c.bf16 %v940, %v938
        %v956 = vpack.c.bf16 %v942, %v942
        %v967 = vunpack.c.l.b16 %v944
        %v968 = vunpack.c.l.b16 %v945
        %v969 = vunpack.c.l.b16 %v946
        %v970 = vunpack.c.l.b16 %v947
        %v971 = vunpack.c.l.b16 %v948
        %v972 = vunpack.c.l.b16 %v949
        %v973 = vunpack.c.l.b16 %v950
        %v974 = vunpack.c.l.b16 %v951
        %v975 = vunpack.c.l.b16 %v952
        %v976 = vunpack.c.l.b16 %v953
        %v977 = vpack.c.b16 %v968, %v967
        %v978 = vpack.c.b16 %v970, %v969
        %v979 = vpack.c.b16 %v972, %v971
        %v980 = vpack.c.b16 %v974, %v973
        %v981 = vpack.c.b16 %v976, %v975
        %v983 = vsel %vm284, %v977, 0
        %v986 = vsel %vm284, %v978, 0
        %v989 = vsel %vm284, %v979, 0
        %v992 = vsel %vm284, %v980, 0
        %v995 = vsel %vm284, %v981, 0
        %v998 = vsel %vm300, %v956, 0
        %1000 = vmatprep.subr.bf16.mxu0 0
        %1001 = vmatpush1.bf16.msra.mxu0 %v954
        %1002 = vmatprep.subr.bf16.mxu0 0
        %1003 = vmatpush1.bf16.msra.mxu0 %v955
        %1004 = vmatprep.subr.bf16.mxu0 0
        %1005 = vmatpush1.bf16.msra.mxu0 %v998
        %1006 = vmatprep.subr.bf16.mxu0 0
        %1007 = vmatpush1.bf16.msra.mxu0 0
        %1008 = vmatprep.subr.bf16.mxu0 0
        %1009 = vmatpush1.bf16.msra.mxu0 0
        %1010 = vmatprep.subr.bf16.mxu0 0
        %1011 = vmatpush1.bf16.msra.mxu0 0
        %1012 = vmatprep.subr.bf16.mxu0 0
        %1013 = vmatpush1.bf16.msra.mxu0 0
        %1014 = vmatprep.subr.bf16.mxu0 0
        %1015 = vmatpush1.bf16.msra.mxu0 0
        %1016 = vmatprep.subr.bf16.mxu0 0
        %1017 = vmatpush1.bf16.msra.mxu0 0
        %1018 = vmatprep.subr.bf16.mxu0 0
        %1019 = vmatpush1.bf16.msra.mxu0 0
        %1020 = vmatprep.subr.bf16.mxu0 0
        %1021 = vmatpush1.bf16.msra.mxu0 0
        %1022 = vmatprep.subr.bf16.mxu0 0
        %1023 = vmatpush1.bf16.msra.mxu0 0
        %1024 = vmatprep.subr.bf16.mxu0 0
        %1025 = vmatpush1.bf16.msra.mxu0 0
        %1026 = vmatprep.subr.bf16.mxu0 0
        %1027 = vmatpush1.bf16.msra.mxu0 0
        %1028 = vmatprep.subr.bf16.mxu0 0
        %1029 = vmatpush1.bf16.msra.mxu0 0
        %1030 = vmatprep.subr.bf16.mxu0 0
        %1031 = vmatpush1.bf16.msra.mxu0 0
        %1032 = vmatprep.mubr.bf16.mxu0 0
        %1033 = vmatmul.mubr.bf16.gmra.mrb[0].mxu0 %v983
        %v1034 = vpop.f32.mrb[0].mxu0
        %v1035 = vadd.f32 0.0, %v1034
        %v1036 = vpop.f32.mrb[0].mxu0
        %v1037 = vpop.f32.mrb[0].mxu0
        %v1038 = vadd.f32 0.0, %v1037
        %v1039 = vpop.f32.mrb[0].mxu0
        %1040 = vmatprep.mubr.bf16.mxu0 0
        %1041 = vmatmul.mubr.bf16.gmra.mrb[0].mxu0 %v986
        %v1042 = vpop.f32.mrb[0].mxu0
        %v1043 = vadd.f32 0.0, %v1042
        %v1044 = vpop.f32.mrb[0].mxu0
        %v1045 = vpop.f32.mrb[0].mxu0
        %v1046 = vadd.f32 0.0, %v1045
        %v1047 = vpop.f32.mrb[0].mxu0
        %1048 = vmatprep.mubr.bf16.mxu0 0
        %1049 = vmatmul.mubr.bf16.gmra.mrb[0].mxu0 %v989
        %v1050 = vpop.f32.mrb[0].mxu0
        %v1051 = vadd.f32 0.0, %v1050
        %v1052 = vpop.f32.mrb[0].mxu0
        %v1053 = vpop.f32.mrb[0].mxu0
        %v1054 = vadd.f32 0.0, %v1053
        %v1055 = vpop.f32.mrb[0].mxu0
        %1056 = vmatprep.mubr.bf16.mxu0 0
        %1057 = vmatmul.mubr.bf16.gmra.mrb[0].mxu0 %v992
        %v1058 = vpop.f32.mrb[0].mxu0
        %v1059 = vadd.f32 0.0, %v1058
        %v1060 = vpop.f32.mrb[0].mxu0
        %v1061 = vpop.f32.mrb[0].mxu0
        %v1062 = vadd.f32 0.0, %v1061
        %v1063 = vpop.f32.mrb[0].mxu0
        %1064 = vmatprep.mubr.bf16.mxu0 0
        %1065 = vmatmul.mubr.bf16.gmra.mrb[0].mxu0 %v995
        %v1066 = vpop.f32.mrb[0].mxu0
        %v1067 = vadd.f32 0.0, %v1066
        %v1068 = vpop.f32.mrb[0].mxu0
        %v1069 = vpop.f32.mrb[0].mxu0
        %v1070 = vadd.f32 0.0, %v1069
        %v1071 = vpop.f32.mrb[0].mxu0
        %1072 = vdwg.mxu0
        %v1073 = vadd.f32 %v923, %v1035
        %v1074 = vadd.f32 %v924, %v1038
        %v1075 = vadd.f32 %v925, %v1043
        %v1076 = vadd.f32 %v926, %v1046
        %v1077 = vadd.f32 %v927, %v1051
        %v1078 = vadd.f32 %v928, %v1054
        %v1079 = vadd.f32 %v929, %v1059
        %v1080 = vadd.f32 %v930, %v1062
        %v1081 = vadd.f32 %v931, %v1067
        %v1082 = vadd.f32 %v932, %v1070
        %1083 = vrot.lane.b32.xlu0 %v207, 119
        %v1084 = vpop.permute.xlu0 %1083
        %1085 = vrot.lane.b32.xlu0 %v208, 119
        %v1086 = vpop.permute.xlu0 %1085
        %1087 = vrot.lane.b32.xlu0 %v209, 119
        %v1088 = vpop.permute.xlu0 %1087
        %1089 = vrot.lane.b32.xlu0 %v210, 119
        %v1090 = vpop.permute.xlu0 %1089
        %1091 = vrot.lane.b32.xlu0 %v211, 119
        %v1092 = vpop.permute.xlu0 %1091
        %s1093 = scalar_lea.vmem %s1, 240
        %v1094 = vld [vmem:[%s1093] sm:$0xf]
        %v1095 = vld [vmem:[%s1093 + $0x4] sm:$0xf]
        %v1096 = vld [vmem:[%s1093 + $0x8] sm:$0xf]
        %v1097 = vld [vmem:[%s1093 + $0xc] sm:$0xf]
        %v1098 = vld [vmem:[%s1093 + $0x10] sm:$0xf]
        %v1099 = vld [vmem:[%s1093 + $0x14] sm:$0xf]
        %v1100 = vld [vmem:[%s1093 + $0x18] sm:$0xf]
        %v1101 = vld [vmem:[%s1093 + $0x1c] sm:$0xf]
        %v1102 = vld [vmem:[%s1093 + $0x20] sm:$0xf]
        %v1103 = vld [vmem:[%s1093 + $0x24] sm:$0xf]
        %v1104 = vpack.c.bf16 %v1086, %v1084
        %v1105 = vpack.c.bf16 %v1090, %v1088
        %v1106 = vpack.c.bf16 %v1092, %v1092
        %v1117 = vunpack.c.l.b16 %v1094
        %v1118 = vunpack.c.l.b16 %v1095
        %v1119 = vunpack.c.l.b16 %v1096
        %v1120 = vunpack.c.l.b16 %v1097
        %v1121 = vunpack.c.l.b16 %v1098
        %v1122 = vunpack.c.l.b16 %v1099
        %v1123 = vunpack.c.l.b16 %v1100
        %v1124 = vunpack.c.l.b16 %v1101
        %v1125 = vunpack.c.l.b16 %v1102
        %v1126 = vunpack.c.l.b16 %v1103
        %v1127 = vpack.c.b16 %v1118, %v1117
        %v1128 = vpack.c.b16 %v1120, %v1119
        %v1129 = vpack.c.b16 %v1122, %v1121
        %v1130 = vpack.c.b16 %v1124, %v1123
        %v1131 = vpack.c.b16 %v1126, %v1125
        %v1133 = vsel %vm284, %v1127, 0
        %v1136 = vsel %vm284, %v1128, 0
        %v1139 = vsel %vm284, %v1129, 0
        %v1142 = vsel %vm284, %v1130, 0
        %v1145 = vsel %vm284, %v1131, 0
        %v1148 = vsel %vm300, %v1106, 0
        %1150 = vmatprep.subr.bf16.mxu0 0
        %1151 = vmatpush1.bf16.msra.mxu0 %v1104
        %1152 = vmatprep.subr.bf16.mxu0 0
        %1153 = vmatpush1.bf16.msra.mxu0 %v1105
        %1154 = vmatprep.subr.bf16.mxu0 0
        %1155 = vmatpush1.bf16.msra.mxu0 %v1148
        %1156 = vmatprep.subr.bf16.mxu0 0
        %1157 = vmatpush1.bf16.msra.mxu0 0
        %1158 = vmatprep.subr.bf16.mxu0 0
        %1159 = vmatpush1.bf16.msra.mxu0 0
        %1160 = vmatprep.subr.bf16.mxu0 0
        %1161 = vmatpush1.bf16.msra.mxu0 0
        %1162 = vmatprep.subr.bf16.mxu0 0
        %1163 = vmatpush1.bf16.msra.mxu0 0
        %1164 = vmatprep.subr.bf16.mxu0 0
        %1165 = vmatpush1.bf16.msra.mxu0 0
        %1166 = vmatprep.subr.bf16.mxu0 0
        %1167 = vmatpush1.bf16.msra.mxu0 0
        %1168 = vmatprep.subr.bf16.mxu0 0
        %1169 = vmatpush1.bf16.msra.mxu0 0
        %1170 = vmatprep.subr.bf16.mxu0 0
        %1171 = vmatpush1.bf16.msra.mxu0 0
        %1172 = vmatprep.subr.bf16.mxu0 0
        %1173 = vmatpush1.bf16.msra.mxu0 0
        %1174 = vmatprep.subr.bf16.mxu0 0
        %1175 = vmatpush1.bf16.msra.mxu0 0
        %1176 = vmatprep.subr.bf16.mxu0 0
        %1177 = vmatpush1.bf16.msra.mxu0 0
        %1178 = vmatprep.subr.bf16.mxu0 0
        %1179 = vmatpush1.bf16.msra.mxu0 0
        %1180 = vmatprep.subr.bf16.mxu0 0
        %1181 = vmatpush1.bf16.msra.mxu0 0
        %1182 = vmatprep.mubr.bf16.mxu0 0
        %1183 = vmatmul.mubr.bf16.gmra.mrb[0].mxu0 %v1133
        %v1184 = vpop.f32.mrb[0].mxu0
        %v1185 = vadd.f32 0.0, %v1184
        %v1186 = vpop.f32.mrb[0].mxu0
        %v1187 = vpop.f32.mrb[0].mxu0
        %v1188 = vadd.f32 0.0, %v1187
        %v1189 = vpop.f32.mrb[0].mxu0
        %1190 = vmatprep.mubr.bf16.mxu0 0
        %1191 = vmatmul.mubr.bf16.gmra.mrb[0].mxu0 %v1136
        %v1192 = vpop.f32.mrb[0].mxu0
        %v1193 = vadd.f32 0.0, %v1192
        %v1194 = vpop.f32.mrb[0].mxu0
        %v1195 = vpop.f32.mrb[0].mxu0
        %v1196 = vadd.f32 0.0, %v1195
        %v1197 = vpop.f32.mrb[0].mxu0
        %1198 = vmatprep.mubr.bf16.mxu0 0
        %1199 = vmatmul.mubr.bf16.gmra.mrb[0].mxu0 %v1139
        %v1200 = vpop.f32.mrb[0].mxu0
        %v1201 = vadd.f32 0.0, %v1200
        %v1202 = vpop.f32.mrb[0].mxu0
        %v1203 = vpop.f32.mrb[0].mxu0
        %v1204 = vadd.f32 0.0, %v1203
        %v1205 = vpop.f32.mrb[0].mxu0
        %1206 = vmatprep.mubr.bf16.mxu0 0
        %1207 = vmatmul.mubr.bf16.gmra.mrb[0].mxu0 %v1142
        %v1208 = vpop.f32.mrb[0].mxu0
        %v1209 = vadd.f32 0.0, %v1208
        %v1210 = vpop.f32.mrb[0].mxu0
        %v1211 = vpop.f32.mrb[0].mxu0
        %v1212 = vadd.f32 0.0, %v1211
        %v1213 = vpop.f32.mrb[0].mxu0
        %1214 = vmatprep.mubr.bf16.mxu0 0
        %1215 = vmatmul.mubr.bf16.gmra.mrb[0].mxu0 %v1145
        %v1216 = vpop.f32.mrb[0].mxu0
        %v1217 = vadd.f32 0.0, %v1216
        %v1218 = vpop.f32.mrb[0].mxu0
        %v1219 = vpop.f32.mrb[0].mxu0
        %v1220 = vadd.f32 0.0, %v1219
        %v1221 = vpop.f32.mrb[0].mxu0
        %1222 = vdwg.mxu0
        %v1223 = vadd.f32 %v1073, %v1185
        %v1224 = vadd.f32 %v1074, %v1188
        %v1225 = vadd.f32 %v1075, %v1193
        %v1226 = vadd.f32 %v1076, %v1196
        %v1227 = vadd.f32 %v1077, %v1201
        %v1228 = vadd.f32 %v1078, %v1204
        %v1229 = vadd.f32 %v1079, %v1209
        %v1230 = vadd.f32 %v1080, %v1212
        %v1231 = vadd.f32 %v1081, %v1217
        %v1232 = vadd.f32 %v1082, %v1220
        %1233 = vrot.lane.b32.xlu0 %v207, 118
        %v1234 = vpop.permute.xlu0 %1233
        %1235 = vrot.lane.b32.xlu0 %v208, 118
        %v1236 = vpop.permute.xlu0 %1235
        %1237 = vrot.lane.b32.xlu0 %v209, 118
        %v1238 = vpop.permute.xlu0 %1237
        %1239 = vrot.lane.b32.xlu0 %v210, 118
        %v1240 = vpop.permute.xlu0 %1239
        %1241 = vrot.lane.b32.xlu0 %v211, 118
        %v1242 = vpop.permute.xlu0 %1241
        %s1243 = scalar_lea.vmem %s1, 280
        %v1244 = vld [vmem:[%s1243] sm:$0xf]
        %v1245 = vld [vmem:[%s1243 + $0x4] sm:$0xf]
        %v1246 = vld [vmem:[%s1243 + $0x8] sm:$0xf]
        %v1247 = vld [vmem:[%s1243 + $0xc] sm:$0xf]
        %v1248 = vld [vmem:[%s1243 + $0x10] sm:$0xf]
        %v1249 = vld [vmem:[%s1243 + $0x14] sm:$0xf]
        %v1250 = vld [vmem:[%s1243 + $0x18] sm:$0xf]
        %v1251 = vld [vmem:[%s1243 + $0x1c] sm:$0xf]
        %v1252 = vld [vmem:[%s1243 + $0x20] sm:$0xf]
        %v1253 = vld [vmem:[%s1243 + $0x24] sm:$0xf]
        %v1254 = vpack.c.bf16 %v1236, %v1234
        %v1255 = vpack.c.bf16 %v1240, %v1238
        %v1256 = vpack.c.bf16 %v1242, %v1242
        %v1267 = vunpack.c.l.b16 %v1244
        %v1268 = vunpack.c.l.b16 %v1245
        %v1269 = vunpack.c.l.b16 %v1246
        %v1270 = vunpack.c.l.b16 %v1247
        %v1271 = vunpack.c.l.b16 %v1248
        %v1272 = vunpack.c.l.b16 %v1249
        %v1273 = vunpack.c.l.b16 %v1250
        %v1274 = vunpack.c.l.b16 %v1251
        %v1275 = vunpack.c.l.b16 %v1252
        %v1276 = vunpack.c.l.b16 %v1253
        %v1277 = vpack.c.b16 %v1268, %v1267
        %v1278 = vpack.c.b16 %v1270, %v1269
        %v1279 = vpack.c.b16 %v1272, %v1271
        %v1280 = vpack.c.b16 %v1274, %v1273
        %v1281 = vpack.c.b16 %v1276, %v1275
        %v1283 = vsel %vm284, %v1277, 0
        %v1286 = vsel %vm284, %v1278, 0
        %v1289 = vsel %vm284, %v1279, 0
        %v1292 = vsel %vm284, %v1280, 0
        %v1295 = vsel %vm284, %v1281, 0
        %v1298 = vsel %vm300, %v1256, 0
        %1300 = vmatprep.subr.bf16.mxu0 0
        %1301 = vmatpush1.bf16.msra.mxu0 %v1254
        %1302 = vmatprep.subr.bf16.mxu0 0
        %1303 = vmatpush1.bf16.msra.mxu0 %v1255
        %1304 = vmatprep.subr.bf16.mxu0 0
        %1305 = vmatpush1.bf16.msra.mxu0 %v1298
        %1306 = vmatprep.subr.bf16.mxu0 0
        %1307 = vmatpush1.bf16.msra.mxu0 0
        %1308 = vmatprep.subr.bf16.mxu0 0
        %1309 = vmatpush1.bf16.msra.mxu0 0
        %1310 = vmatprep.subr.bf16.mxu0 0
        %1311 = vmatpush1.bf16.msra.mxu0 0
        %1312 = vmatprep.subr.bf16.mxu0 0
        %1313 = vmatpush1.bf16.msra.mxu0 0
        %1314 = vmatprep.subr.bf16.mxu0 0
        %1315 = vmatpush1.bf16.msra.mxu0 0
        %1316 = vmatprep.subr.bf16.mxu0 0
        %1317 = vmatpush1.bf16.msra.mxu0 0
        %1318 = vmatprep.subr.bf16.mxu0 0
        %1319 = vmatpush1.bf16.msra.mxu0 0
        %1320 = vmatprep.subr.bf16.mxu0 0
        %1321 = vmatpush1.bf16.msra.mxu0 0
        %1322 = vmatprep.subr.bf16.mxu0 0
        %1323 = vmatpush1.bf16.msra.mxu0 0
        %1324 = vmatprep.subr.bf16.mxu0 0
        %1325 = vmatpush1.bf16.msra.mxu0 0
        %1326 = vmatprep.subr.bf16.mxu0 0
        %1327 = vmatpush1.bf16.msra.mxu0 0
        %1328 = vmatprep.subr.bf16.mxu0 0
        %1329 = vmatpush1.bf16.msra.mxu0 0
        %1330 = vmatprep.subr.bf16.mxu0 0
        %1331 = vmatpush1.bf16.msra.mxu0 0
        %1332 = vmatprep.mubr.bf16.mxu0 0
        %1333 = vmatmul.mubr.bf16.gmra.mrb[0].mxu0 %v1283
        %v1334 = vpop.f32.mrb[0].mxu0
        %v1335 = vadd.f32 0.0, %v1334
        %v1336 = vpop.f32.mrb[0].mxu0
        %v1337 = vpop.f32.mrb[0].mxu0
        %v1338 = vadd.f32 0.0, %v1337
        %v1339 = vpop.f32.mrb[0].mxu0
        %1340 = vmatprep.mubr.bf16.mxu0 0
        %1341 = vmatmul.mubr.bf16.gmra.mrb[0].mxu0 %v1286
        %v1342 = vpop.f32.mrb[0].mxu0
        %v1343 = vadd.f32 0.0, %v1342
        %v1344 = vpop.f32.mrb[0].mxu0
        %v1345 = vpop.f32.mrb[0].mxu0
        %v1346 = vadd.f32 0.0, %v1345
        %v1347 = vpop.f32.mrb[0].mxu0
        %1348 = vmatprep.mubr.bf16.mxu0 0
        %1349 = vmatmul.mubr.bf16.gmra.mrb[0].mxu0 %v1289
        %v1350 = vpop.f32.mrb[0].mxu0
        %v1351 = vadd.f32 0.0, %v1350
        %v1352 = vpop.f32.mrb[0].mxu0
        %v1353 = vpop.f32.mrb[0].mxu0
        %v1354 = vadd.f32 0.0, %v1353
        %v1355 = vpop.f32.mrb[0].mxu0
        %1356 = vmatprep.mubr.bf16.mxu0 0
        %1357 = vmatmul.mubr.bf16.gmra.mrb[0].mxu0 %v1292
        %v1358 = vpop.f32.mrb[0].mxu0
        %v1359 = vadd.f32 0.0, %v1358
        %v1360 = vpop.f32.mrb[0].mxu0
        %v1361 = vpop.f32.mrb[0].mxu0
        %v1362 = vadd.f32 0.0, %v1361
        %v1363 = vpop.f32.mrb[0].mxu0
        %1364 = vmatprep.mubr.bf16.mxu0 0
        %1365 = vmatmul.mubr.bf16.gmra.mrb[0].mxu0 %v1295
        %v1366 = vpop.f32.mrb[0].mxu0
        %v1367 = vadd.f32 0.0, %v1366
        %v1368 = vpop.f32.mrb[0].mxu0
        %v1369 = vpop.f32.mrb[0].mxu0
        %v1370 = vadd.f32 0.0, %v1369
        %v1371 = vpop.f32.mrb[0].mxu0
        %1372 = vdwg.mxu0
        %v1373 = vadd.f32 %v1223, %v1335
        %v1374 = vadd.f32 %v1224, %v1338
        %v1375 = vadd.f32 %v1225, %v1343
        %v1376 = vadd.f32 %v1226, %v1346
        %v1377 = vadd.f32 %v1227, %v1351
        %v1378 = vadd.f32 %v1228, %v1354
        %v1379 = vadd.f32 %v1229, %v1359
        %v1380 = vadd.f32 %v1230, %v1362
        %v1381 = vadd.f32 %v1231, %v1367
        %v1382 = vadd.f32 %v1232, %v1370
        %1383 = vrot.lane.b32.xlu0 %v207, 117
        %v1384 = vpop.permute.xlu0 %1383
        %1385 = vrot.lane.b32.xlu0 %v208, 117
        %v1386 = vpop.permute.xlu0 %1385
        %1387 = vrot.lane.b32.xlu0 %v209, 117
        %v1388 = vpop.permute.xlu0 %1387
        %1389 = vrot.lane.b32.xlu0 %v210, 117
        %v1390 = vpop.permute.xlu0 %1389
        %1391 = vrot.lane.b32.xlu0 %v211, 117
        %v1392 = vpop.permute.xlu0 %1391
        %s1393 = scalar_lea.vmem %s1, 320
        %v1394 = vld [vmem:[%s1393] sm:$0xf]
        %v1395 = vld [vmem:[%s1393 + $0x4] sm:$0xf]
        %v1396 = vld [vmem:[%s1393 + $0x8] sm:$0xf]
        %v1397 = vld [vmem:[%s1393 + $0xc] sm:$0xf]
        %v1398 = vld [vmem:[%s1393 + $0x10] sm:$0xf]
        %v1399 = vld [vmem:[%s1393 + $0x14] sm:$0xf]
        %v1400 = vld [vmem:[%s1393 + $0x18] sm:$0xf]
        %v1401 = vld [vmem:[%s1393 + $0x1c] sm:$0xf]
        %v1402 = vld [vmem:[%s1393 + $0x20] sm:$0xf]
        %v1403 = vld [vmem:[%s1393 + $0x24] sm:$0xf]
        %v1404 = vpack.c.bf16 %v1386, %v1384
        %v1405 = vpack.c.bf16 %v1390, %v1388
        %v1406 = vpack.c.bf16 %v1392, %v1392
        %v1417 = vunpack.c.l.b16 %v1394
        %v1418 = vunpack.c.l.b16 %v1395
        %v1419 = vunpack.c.l.b16 %v1396
        %v1420 = vunpack.c.l.b16 %v1397
        %v1421 = vunpack.c.l.b16 %v1398
        %v1422 = vunpack.c.l.b16 %v1399
        %v1423 = vunpack.c.l.b16 %v1400
        %v1424 = vunpack.c.l.b16 %v1401
        %v1425 = vunpack.c.l.b16 %v1402
        %v1426 = vunpack.c.l.b16 %v1403
        %v1427 = vpack.c.b16 %v1418, %v1417
        %v1428 = vpack.c.b16 %v1420, %v1419
        %v1429 = vpack.c.b16 %v1422, %v1421
        %v1430 = vpack.c.b16 %v1424, %v1423
        %v1431 = vpack.c.b16 %v1426, %v1425
        %v1433 = vsel %vm284, %v1427, 0
        %v1436 = vsel %vm284, %v1428, 0
        %v1439 = vsel %vm284, %v1429, 0
        %v1442 = vsel %vm284, %v1430, 0
        %v1445 = vsel %vm284, %v1431, 0
        %v1448 = vsel %vm300, %v1406, 0
        %1450 = vmatprep.subr.bf16.mxu0 0
        %1451 = vmatpush1.bf16.msra.mxu0 %v1404
        %1452 = vmatprep.subr.bf16.mxu0 0
        %1453 = vmatpush1.bf16.msra.mxu0 %v1405
        %1454 = vmatprep.subr.bf16.mxu0 0
        %1455 = vmatpush1.bf16.msra.mxu0 %v1448
        %1456 = vmatprep.subr.bf16.mxu0 0
        %1457 = vmatpush1.bf16.msra.mxu0 0
        %1458 = vmatprep.subr.bf16.mxu0 0
        %1459 = vmatpush1.bf16.msra.mxu0 0
        %1460 = vmatprep.subr.bf16.mxu0 0
        %1461 = vmatpush1.bf16.msra.mxu0 0
        %1462 = vmatprep.subr.bf16.mxu0 0
        %1463 = vmatpush1.bf16.msra.mxu0 0
        %1464 = vmatprep.subr.bf16.mxu0 0
        %1465 = vmatpush1.bf16.msra.mxu0 0
        %1466 = vmatprep.subr.bf16.mxu0 0
        %1467 = vmatpush1.bf16.msra.mxu0 0
        %1468 = vmatprep.subr.bf16.mxu0 0
        %1469 = vmatpush1.bf16.msra.mxu0 0
        %1470 = vmatprep.subr.bf16.mxu0 0
        %1471 = vmatpush1.bf16.msra.mxu0 0
        %1472 = vmatprep.subr.bf16.mxu0 0
        %1473 = vmatpush1.bf16.msra.mxu0 0
        %1474 = vmatprep.subr.bf16.mxu0 0
        %1475 = vmatpush1.bf16.msra.mxu0 0
        %1476 = vmatprep.subr.bf16.mxu0 0
        %1477 = vmatpush1.bf16.msra.mxu0 0
        %1478 = vmatprep.subr.bf16.mxu0 0
        %1479 = vmatpush1.bf16.msra.mxu0 0
        %1480 = vmatprep.subr.bf16.mxu0 0
        %1481 = vmatpush1.bf16.msra.mxu0 0
        %1482 = vmatprep.mubr.bf16.mxu0 0
        %1483 = vmatmul.mubr.bf16.gmra.mrb[0].mxu0 %v1433
        %v1484 = vpop.f32.mrb[0].mxu0
        %v1485 = vadd.f32 0.0, %v1484
        %v1486 = vpop.f32.mrb[0].mxu0
        %v1487 = vpop.f32.mrb[0].mxu0
        %v1488 = vadd.f32 0.0, %v1487
        %v1489 = vpop.f32.mrb[0].mxu0
        %1490 = vmatprep.mubr.bf16.mxu0 0
        %1491 = vmatmul.mubr.bf16.gmra.mrb[0].mxu0 %v1436
        %v1492 = vpop.f32.mrb[0].mxu0
        %v1493 = vadd.f32 0.0, %v1492
        %v1494 = vpop.f32.mrb[0].mxu0
        %v1495 = vpop.f32.mrb[0].mxu0
        %v1496 = vadd.f32 0.0, %v1495
        %v1497 = vpop.f32.mrb[0].mxu0
        %1498 = vmatprep.mubr.bf16.mxu0 0
        %1499 = vmatmul.mubr.bf16.gmra.mrb[0].mxu0 %v1439
        %v1500 = vpop.f32.mrb[0].mxu0
        %v1501 = vadd.f32 0.0, %v1500
        %v1502 = vpop.f32.mrb[0].mxu0
        %v1503 = vpop.f32.mrb[0].mxu0
        %v1504 = vadd.f32 0.0, %v1503
        %v1505 = vpop.f32.mrb[0].mxu0
        %1506 = vmatprep.mubr.bf16.mxu0 0
        %1507 = vmatmul.mubr.bf16.gmra.mrb[0].mxu0 %v1442
        %v1508 = vpop.f32.mrb[0].mxu0
        %v1509 = vadd.f32 0.0, %v1508
        %v1510 = vpop.f32.mrb[0].mxu0
        %v1511 = vpop.f32.mrb[0].mxu0
        %v1512 = vadd.f32 0.0, %v1511
        %v1513 = vpop.f32.mrb[0].mxu0
        %1514 = vmatprep.mubr.bf16.mxu0 0
        %1515 = vmatmul.mubr.bf16.gmra.mrb[0].mxu0 %v1445
        %v1516 = vpop.f32.mrb[0].mxu0
        %v1517 = vadd.f32 0.0, %v1516
        %v1518 = vpop.f32.mrb[0].mxu0
        %v1519 = vpop.f32.mrb[0].mxu0
        %v1520 = vadd.f32 0.0, %v1519
        %v1521 = vpop.f32.mrb[0].mxu0
        %1522 = vdwg.mxu0
        %v1523 = vadd.f32 %v1373, %v1485
        %v1524 = vadd.f32 %v1374, %v1488
        %v1525 = vadd.f32 %v1375, %v1493
        %v1526 = vadd.f32 %v1376, %v1496
        %v1527 = vadd.f32 %v1377, %v1501
        %v1528 = vadd.f32 %v1378, %v1504
        %v1529 = vadd.f32 %v1379, %v1509
        %v1530 = vadd.f32 %v1380, %v1512
        %v1531 = vadd.f32 %v1381, %v1517
        %v1532 = vadd.f32 %v1382, %v1520
        %v1533 = vmul.f32 %v1523, %v197
        %v1534 = vmul.f32 %v1524, %v198
        %v1535 = vmul.f32 %v1525, %v199
        %v1536 = vmul.f32 %v1526, %v200
        %v1537 = vmul.f32 %v1527, %v201
        %v1538 = vmul.f32 %v1528, %v202
        %v1539 = vmul.f32 %v1529, %v203
        %v1540 = vmul.f32 %v1530, %v204
        %v1541 = vmul.f32 %v1531, %v205
        %v1542 = vmul.f32 %v1532, %v206
        %1543 = vadd.xlane.f32.xlu0 %v1533
        %v1544 = vpop.xlane.xlu0 %1543
        %1545 = vadd.xlane.f32.xlu0 %v1534
        %v1546 = vpop.xlane.xlu0 %1545
        %1547 = vadd.xlane.f32.xlu0 %v1535
        %v1548 = vpop.xlane.xlu0 %1547
        %1549 = vadd.xlane.f32.xlu0 %v1536
        %v1550 = vpop.xlane.xlu0 %1549
        %1551 = vadd.xlane.f32.xlu0 %v1537
        %v1552 = vpop.xlane.xlu0 %1551
        %1553 = vadd.xlane.f32.xlu0 %v1538
        %v1554 = vpop.xlane.xlu0 %1553
        %1555 = vadd.xlane.f32.xlu0 %v1539
        %v1556 = vpop.xlane.xlu0 %1555
        %1557 = vadd.xlane.f32.xlu0 %v1540
        %v1558 = vpop.xlane.xlu0 %1557
        %1559 = vadd.xlane.f32.xlu0 %v1541
        %v1560 = vpop.xlane.xlu0 %1559
        %1561 = vadd.xlane.f32.xlu0 %v1542
        %v1562 = vpop.xlane.xlu0 %1561
        %v1563 = vmul.f32 %v1533, %v1533
        %v1564 = vmul.f32 %v1534, %v1534
        %v1565 = vmul.f32 %v1535, %v1535
        %v1566 = vmul.f32 %v1536, %v1536
        %v1567 = vmul.f32 %v1537, %v1537
        %v1568 = vmul.f32 %v1538, %v1538
        %v1569 = vmul.f32 %v1539, %v1539
        %v1570 = vmul.f32 %v1540, %v1540
        %v1571 = vmul.f32 %v1541, %v1541
        %v1572 = vmul.f32 %v1542, %v1542
        %1573 = vadd.xlane.f32.xlu0 %v1563
        %v1574 = vpop.xlane.xlu0 %1573
        %1575 = vadd.xlane.f32.xlu0 %v1564
        %v1576 = vpop.xlane.xlu0 %1575
        %1577 = vadd.xlane.f32.xlu0 %v1565
        %v1578 = vpop.xlane.xlu0 %1577
        %1579 = vadd.xlane.f32.xlu0 %v1566
        %v1580 = vpop.xlane.xlu0 %1579
        %1581 = vadd.xlane.f32.xlu0 %v1567
        %v1582 = vpop.xlane.xlu0 %1581
        %1583 = vadd.xlane.f32.xlu0 %v1568
        %v1584 = vpop.xlane.xlu0 %1583
        %1585 = vadd.xlane.f32.xlu0 %v1569
        %v1586 = vpop.xlane.xlu0 %1585
        %1587 = vadd.xlane.f32.xlu0 %v1570
        %v1588 = vpop.xlane.xlu0 %1587
        %1589 = vadd.xlane.f32.xlu0 %v1571
        %v1590 = vpop.xlane.xlu0 %1589
        %1591 = vadd.xlane.f32.xlu0 %v1572
        %v1592 = vpop.xlane.xlu0 %1591
        %v1593 = vadd.f32 %v1544, %v1546
        %v1594 = vadd.f32 %v1574, %v1576
        %v1595 = vadd.f32 %v1593, %v1548
        %v1596 = vadd.f32 %v1594, %v1578
        %v1597 = vadd.f32 %v1595, %v1550
        %v1598 = vadd.f32 %v1596, %v1580
        %v1599 = vadd.f32 %v1597, %v1552
        %v1600 = vadd.f32 %v1598, %v1582
        %v1601 = vadd.f32 %v1599, %v1554
        %v1602 = vadd.f32 %v1600, %v1584
        %v1603 = vadd.f32 %v1601, %v1556
        %v1604 = vadd.f32 %v1602, %v1586
        %v1605 = vadd.f32 %v1603, %v1558
        %v1606 = vadd.f32 %v1604, %v1588
        %v1607 = vadd.f32 %v1605, %v1560
        %v1608 = vadd.f32 %v1606, %v1590
        %v1609 = vadd.f32 %v1607, %v1562
        %v1610 = vadd.f32 %v1608, %v1592
        %v1611 = vmul.f32 %v1609, 0.001953125
        %v1612 = vmul.f32 %v1610, 0.001953125
        %v1613 = vmul.f32 %v1611, %v1611
        %v1614 = vsub.f32 %v1612, %v1613
        %v1615 = vmax.f32 %v1614, 0.0
        %v1616 = vadd.f32 %v1615, 1e-05
        %v1617 = vrsqrt.pop %v1616
        %1619 = vset.pattern.permute.xlu0 0
        %1620 = vperm.xlu0 %1619, %v1611
        %v1621 = vpop.permute.xlu0 %1620
        %v1623 = vsub.f32 %v1533, %v1621
        %v1624 = vsub.f32 %v1534, %v1621
        %v1625 = vsub.f32 %v1535, %v1621
        %v1626 = vsub.f32 %v1536, %v1621
        %v1627 = vsub.f32 %v1537, %v1621
        %v1628 = vsub.f32 %v1538, %v1621
        %v1629 = vsub.f32 %v1539, %v1621
        %v1630 = vsub.f32 %v1540, %v1621
        %v1631 = vsub.f32 %v1541, %v1621
        %v1632 = vsub.f32 %v1542, %v1621
        %1634 = vset.pattern.permute.xlu0 0
        %1635 = vperm.xlu0 %1634, %v1617
        %v1636 = vpop.permute.xlu0 %1635
        %v1638 = vmul.f32 %v1623, %v1636
        %v1639 = vmul.f32 %v1624, %v1636
        %v1640 = vmul.f32 %v1625, %v1636
        %v1641 = vmul.f32 %v1626, %v1636
        %v1642 = vmul.f32 %v1627, %v1636
        %v1643 = vmul.f32 %v1628, %v1636
        %v1644 = vmul.f32 %v1629, %v1636
        %v1645 = vmul.f32 %v1630, %v1636
        %v1646 = vmul.f32 %v1631, %v1636
        %v1647 = vmul.f32 %v1632, %v1636
        %v1648 = vmax.f32 %v1638, 0.0
        %v1649 = vmax.f32 %v1639, 0.0
        %v1650 = vmax.f32 %v1640, 0.0
        %v1651 = vmax.f32 %v1641, 0.0
        %v1652 = vmax.f32 %v1642, 0.0
        %v1653 = vmax.f32 %v1643, 0.0
        %v1654 = vmax.f32 %v1644, 0.0
        %v1655 = vmax.f32 %v1645, 0.0
        %v1656 = vmax.f32 %v1646, 0.0
        %v1657 = vmax.f32 %v1647, 0.0
        %v1658 = vmul.f32 %v1648, %v197
        %v1659 = vmul.f32 %v1649, %v198
        %v1660 = vmul.f32 %v1650, %v199
        %v1661 = vmul.f32 %v1651, %v200
        %v1662 = vmul.f32 %v1652, %v201
        %v1663 = vmul.f32 %v1653, %v202
        %v1664 = vmul.f32 %v1654, %v203
        %v1665 = vmul.f32 %v1655, %v204
        %v1666 = vmul.f32 %v1656, %v205
        %v1667 = vmul.f32 %v1657, %v206
        %1668 = vrot.lane.b32.xlu0 %v1658, 11
        %v1669 = vpop.permute.xlu0 %1668
        %1670 = vrot.lane.b32.xlu0 %v1659, 11
        %v1671 = vpop.permute.xlu0 %1670
        %1672 = vrot.lane.b32.xlu0 %v1660, 11
        %v1673 = vpop.permute.xlu0 %1672
        %1674 = vrot.lane.b32.xlu0 %v1661, 11
        %v1675 = vpop.permute.xlu0 %1674
        %1676 = vrot.lane.b32.xlu0 %v1662, 11
        %v1677 = vpop.permute.xlu0 %1676
        %1678 = vrot.lane.b32.xlu0 %v1663, 11
        %v1679 = vpop.permute.xlu0 %1678
        %1680 = vrot.lane.b32.xlu0 %v1664, 11
        %v1681 = vpop.permute.xlu0 %1680
        %1682 = vrot.lane.b32.xlu0 %v1665, 11
        %v1683 = vpop.permute.xlu0 %1682
        %1684 = vrot.lane.b32.xlu0 %v1666, 11
        %v1685 = vpop.permute.xlu0 %1684
        %1686 = vrot.lane.b32.xlu0 %v1667, 11
        %v1687 = vpop.permute.xlu0 %1686
        %v1688 = vld [vmem:[%s2] sm:$0xf]
        %v1689 = vld [vmem:[%s2 + $0x4] sm:$0xf]
        %v1690 = vld [vmem:[%s2 + $0x8] sm:$0xf]
        %v1691 = vld [vmem:[%s2 + $0xc] sm:$0xf]
        %v1692 = vld [vmem:[%s2 + $0x10] sm:$0xf]
        %v1693 = vld [vmem:[%s2 + $0x14] sm:$0xf]
        %v1694 = vld [vmem:[%s2 + $0x18] sm:$0xf]
        %v1695 = vld [vmem:[%s2 + $0x1c] sm:$0xf]
        %v1696 = vld [vmem:[%s2 + $0x20] sm:$0xf]
        %v1697 = vld [vmem:[%s2 + $0x24] sm:$0xf]
        %v1698 = vpack.c.bf16 %v1671, %v1669
        %v1699 = vpack.c.bf16 %v1675, %v1673
        %v1700 = vpack.c.bf16 %v1679, %v1677
        %v1701 = vpack.c.bf16 %v1683, %v1681
        %v1702 = vpack.c.bf16 %v1687, %v1685
        %1703 = vrot.lane.b32.xlu0 %v1658, 10
        %v1704 = vpop.permute.xlu0 %1703
        %1705 = vrot.lane.b32.xlu0 %v1659, 10
        %v1706 = vpop.permute.xlu0 %1705
        %1707 = vrot.lane.b32.xlu0 %v1660, 10
        %v1708 = vpop.permute.xlu0 %1707
        %1709 = vrot.lane.b32.xlu0 %v1661, 10
        %v1710 = vpop.permute.xlu0 %1709
        %1711 = vrot.lane.b32.xlu0 %v1662, 10
        %v1712 = vpop.permute.xlu0 %1711
        %1713 = vrot.lane.b32.xlu0 %v1663, 10
        %v1714 = vpop.permute.xlu0 %1713
        %1715 = vrot.lane.b32.xlu0 %v1664, 10
        %v1716 = vpop.permute.xlu0 %1715
        %1717 = vrot.lane.b32.xlu0 %v1665, 10
        %v1718 = vpop.permute.xlu0 %1717
        %1719 = vrot.lane.b32.xlu0 %v1666, 10
        %v1720 = vpop.permute.xlu0 %1719
        %1721 = vrot.lane.b32.xlu0 %v1667, 10
        %v1722 = vpop.permute.xlu0 %1721
        %s1723 = scalar_lea.vmem %s2, 40
        %v1724 = vld [vmem:[%s1723] sm:$0xf]
        %v1725 = vld [vmem:[%s1723 + $0x4] sm:$0xf]
        %v1726 = vld [vmem:[%s1723 + $0x8] sm:$0xf]
        %v1727 = vld [vmem:[%s1723 + $0xc] sm:$0xf]
        %v1728 = vld [vmem:[%s1723 + $0x10] sm:$0xf]
        %v1729 = vld [vmem:[%s1723 + $0x14] sm:$0xf]
        %v1730 = vld [vmem:[%s1723 + $0x18] sm:$0xf]
        %v1731 = vld [vmem:[%s1723 + $0x1c] sm:$0xf]
        %v1732 = vld [vmem:[%s1723 + $0x20] sm:$0xf]
        %v1733 = vld [vmem:[%s1723 + $0x24] sm:$0xf]
        %v1734 = vpack.c.bf16 %v1706, %v1704
        %v1735 = vpack.c.bf16 %v1710, %v1708
        %v1736 = vpack.c.bf16 %v1714, %v1712
        %v1737 = vpack.c.bf16 %v1718, %v1716
        %v1738 = vpack.c.bf16 %v1722, %v1720
        %v1749 = vunpack.c.l.b16 %v1724
        %v1750 = vunpack.c.l.b16 %v1725
        %v1751 = vunpack.c.l.b16 %v1726
        %v1752 = vunpack.c.l.b16 %v1727
        %v1753 = vunpack.c.l.b16 %v1728
        %v1754 = vunpack.c.l.b16 %v1729
        %v1755 = vunpack.c.l.b16 %v1730
        %v1756 = vunpack.c.l.b16 %v1731
        %v1757 = vunpack.c.l.b16 %v1732
        %v1758 = vunpack.c.l.b16 %v1733
        %v1759 = vpack.c.b16 %v1750, %v1749
        %v1760 = vpack.c.b16 %v1752, %v1751
        %v1761 = vpack.c.b16 %v1754, %v1753
        %v1762 = vpack.c.b16 %v1756, %v1755
        %v1763 = vpack.c.b16 %v1758, %v1757
        %vm1764 = vcmask 654336
        %v1766 = vsel %vm1764, %v1759, 0
        %v1769 = vsel %vm1764, %v1760, 0
        %v1772 = vsel %vm1764, %v1761, 0
        %v1775 = vsel %vm1764, %v1762, 0
        %v1778 = vsel %vm1764, %v1763, 0
        %1780 = vmatprep.subr.bf16.mxu0 0
        %1781 = vmatpush1.bf16.msra.mxu0 %v1734
        %1782 = vmatprep.subr.bf16.mxu0 0
        %1783 = vmatpush1.bf16.msra.mxu0 %v1735
        %1784 = vmatprep.subr.bf16.mxu0 0
        %1785 = vmatpush1.bf16.msra.mxu0 %v1736
        %1786 = vmatprep.subr.bf16.mxu0 0
        %1787 = vmatpush1.bf16.msra.mxu0 %v1737
        %1788 = vmatprep.subr.bf16.mxu0 0
        %1789 = vmatpush1.bf16.msra.mxu0 %v1738
        %1790 = vmatprep.subr.bf16.mxu0 0
        %1791 = vmatpush1.bf16.msra.mxu0 0
        %1792 = vmatprep.subr.bf16.mxu0 0
        %1793 = vmatpush1.bf16.msra.mxu0 0
        %1794 = vmatprep.subr.bf16.mxu0 0
        %1795 = vmatpush1.bf16.msra.mxu0 0
        %1796 = vmatprep.subr.bf16.mxu0 0
        %1797 = vmatpush1.bf16.msra.mxu0 0
        %1798 = vmatprep.subr.bf16.mxu0 0
        %1799 = vmatpush1.bf16.msra.mxu0 0
        %1800 = vmatprep.subr.bf16.mxu0 0
        %1801 = vmatpush1.bf16.msra.mxu0 0
        %1802 = vmatprep.subr.bf16.mxu0 0
        %1803 = vmatpush1.bf16.msra.mxu0 0
        %1804 = vmatprep.subr.bf16.mxu0 0
        %1805 = vmatpush1.bf16.msra.mxu0 0
        %1806 = vmatprep.subr.bf16.mxu0 0
        %1807 = vmatpush1.bf16.msra.mxu0 0
        %1808 = vmatprep.subr.bf16.mxu0 0
        %1809 = vmatpush1.bf16.msra.mxu0 0
        %1810 = vmatprep.subr.bf16.mxu0 0
        %1811 = vmatpush1.bf16.msra.mxu0 0
        %1812 = vmatprep.mubr.bf16.mxu0 0
        %1813 = vmatmul.mubr.bf16.gmra.mrb[0].mxu0 %v1766
        %v1814 = vpop.f32.mrb[0].mxu0
        %v1815 = vadd.f32 0.0, %v1814
        %v1816 = vpop.f32.mrb[0].mxu0
        %v1817 = vpop.f32.mrb[0].mxu0
        %v1818 = vadd.f32 0.0, %v1817
        %v1819 = vpop.f32.mrb[0].mxu0
        %1820 = vmatprep.mubr.bf16.mxu0 0
        %1821 = vmatmul.mubr.bf16.gmra.mrb[0].mxu0 %v1769
        %v1822 = vpop.f32.mrb[0].mxu0
        %v1823 = vadd.f32 0.0, %v1822
        %v1824 = vpop.f32.mrb[0].mxu0
        %v1825 = vpop.f32.mrb[0].mxu0
        %v1826 = vadd.f32 0.0, %v1825
        %v1827 = vpop.f32.mrb[0].mxu0
        %1828 = vmatprep.mubr.bf16.mxu0 0
        %1829 = vmatmul.mubr.bf16.gmra.mrb[0].mxu0 %v1772
        %v1830 = vpop.f32.mrb[0].mxu0
        %v1831 = vadd.f32 0.0, %v1830
        %v1832 = vpop.f32.mrb[0].mxu0
        %v1833 = vpop.f32.mrb[0].mxu0
        %v1834 = vadd.f32 0.0, %v1833
        %v1835 = vpop.f32.mrb[0].mxu0
        %1836 = vmatprep.mubr.bf16.mxu0 0
        %1837 = vmatmul.mubr.bf16.gmra.mrb[0].mxu0 %v1775
        %v1838 = vpop.f32.mrb[0].mxu0
        %v1839 = vadd.f32 0.0, %v1838
        %v1840 = vpop.f32.mrb[0].mxu0
        %v1841 = vpop.f32.mrb[0].mxu0
        %v1842 = vadd.f32 0.0, %v1841
        %v1843 = vpop.f32.mrb[0].mxu0
        %1844 = vmatprep.mubr.bf16.mxu0 0
        %1845 = vmatmul.mubr.bf16.gmra.mrb[0].mxu0 %v1778
        %v1846 = vpop.f32.mrb[0].mxu0
        %v1847 = vadd.f32 0.0, %v1846
        %v1848 = vpop.f32.mrb[0].mxu0
        %v1849 = vpop.f32.mrb[0].mxu0
        %v1850 = vadd.f32 0.0, %v1849
        %v1851 = vpop.f32.mrb[0].mxu0
        %1852 = vdwg.mxu0
        %v1863 = vunpack.c.l.b16 %v1688
        %v1864 = vunpack.c.l.b16 %v1689
        %v1865 = vunpack.c.l.b16 %v1690
        %v1866 = vunpack.c.l.b16 %v1691
        %v1867 = vunpack.c.l.b16 %v1692
        %v1868 = vunpack.c.l.b16 %v1693
        %v1869 = vunpack.c.l.b16 %v1694
        %v1870 = vunpack.c.l.b16 %v1695
        %v1871 = vunpack.c.l.b16 %v1696
        %v1872 = vunpack.c.l.b16 %v1697
        %v1873 = vpack.c.b16 %v1864, %v1863
        %v1874 = vpack.c.b16 %v1866, %v1865
        %v1875 = vpack.c.b16 %v1868, %v1867
        %v1876 = vpack.c.b16 %v1870, %v1869
        %v1877 = vpack.c.b16 %v1872, %v1871
        %v1879 = vsel %vm1764, %v1873, 0
        %v1882 = vsel %vm1764, %v1874, 0
        %v1885 = vsel %vm1764, %v1875, 0
        %v1888 = vsel %vm1764, %v1876, 0
        %v1891 = vsel %vm1764, %v1877, 0
        %1893 = vmatprep.subr.bf16.mxu0 0
        %1894 = vmatpush1.bf16.msra.mxu0 %v1698
        %1895 = vmatprep.subr.bf16.mxu0 0
        %1896 = vmatpush1.bf16.msra.mxu0 %v1699
        %1897 = vmatprep.subr.bf16.mxu0 0
        %1898 = vmatpush1.bf16.msra.mxu0 %v1700
        %1899 = vmatprep.subr.bf16.mxu0 0
        %1900 = vmatpush1.bf16.msra.mxu0 %v1701
        %1901 = vmatprep.subr.bf16.mxu0 0
        %1902 = vmatpush1.bf16.msra.mxu0 %v1702
        %1903 = vmatprep.subr.bf16.mxu0 0
        %1904 = vmatpush1.bf16.msra.mxu0 0
        %1905 = vmatprep.subr.bf16.mxu0 0
        %1906 = vmatpush1.bf16.msra.mxu0 0
        %1907 = vmatprep.subr.bf16.mxu0 0
        %1908 = vmatpush1.bf16.msra.mxu0 0
        %1909 = vmatprep.subr.bf16.mxu0 0
        %1910 = vmatpush1.bf16.msra.mxu0 0
        %1911 = vmatprep.subr.bf16.mxu0 0
        %1912 = vmatpush1.bf16.msra.mxu0 0
        %1913 = vmatprep.subr.bf16.mxu0 0
        %1914 = vmatpush1.bf16.msra.mxu0 0
        %1915 = vmatprep.subr.bf16.mxu0 0
        %1916 = vmatpush1.bf16.msra.mxu0 0
        %1917 = vmatprep.subr.bf16.mxu0 0
        %1918 = vmatpush1.bf16.msra.mxu0 0
        %1919 = vmatprep.subr.bf16.mxu0 0
        %1920 = vmatpush1.bf16.msra.mxu0 0
        %1921 = vmatprep.subr.bf16.mxu0 0
        %1922 = vmatpush1.bf16.msra.mxu0 0
        %1923 = vmatprep.subr.bf16.mxu0 0
        %1924 = vmatpush1.bf16.msra.mxu0 0
        %1925 = vmatprep.mubr.bf16.mxu0 0
        %1926 = vmatmul.mubr.bf16.gmra.mrb[0].mxu0 %v1879
        %v1927 = vpop.f32.mrb[0].mxu0
        %v1928 = vadd.f32 %v1815, %v1927
        %v1929 = vpop.f32.mrb[0].mxu0
        %v1930 = vpop.f32.mrb[0].mxu0
        %v1931 = vadd.f32 %v1818, %v1930
        %v1932 = vpop.f32.mrb[0].mxu0
        %1933 = vmatprep.mubr.bf16.mxu0 0
        %1934 = vmatmul.mubr.bf16.gmra.mrb[0].mxu0 %v1882
        %v1935 = vpop.f32.mrb[0].mxu0
        %v1936 = vadd.f32 %v1823, %v1935
        %v1937 = vpop.f32.mrb[0].mxu0
        %v1938 = vpop.f32.mrb[0].mxu0
        %v1939 = vadd.f32 %v1826, %v1938
        %v1940 = vpop.f32.mrb[0].mxu0
        %1941 = vmatprep.mubr.bf16.mxu0 0
        %1942 = vmatmul.mubr.bf16.gmra.mrb[0].mxu0 %v1885
        %v1943 = vpop.f32.mrb[0].mxu0
        %v1944 = vadd.f32 %v1831, %v1943
        %v1945 = vpop.f32.mrb[0].mxu0
        %v1946 = vpop.f32.mrb[0].mxu0
        %v1947 = vadd.f32 %v1834, %v1946
        %v1948 = vpop.f32.mrb[0].mxu0
        %1949 = vmatprep.mubr.bf16.mxu0 0
        %1950 = vmatmul.mubr.bf16.gmra.mrb[0].mxu0 %v1888
        %v1951 = vpop.f32.mrb[0].mxu0
        %v1952 = vadd.f32 %v1839, %v1951
        %v1953 = vpop.f32.mrb[0].mxu0
        %v1954 = vpop.f32.mrb[0].mxu0
        %v1955 = vadd.f32 %v1842, %v1954
        %v1956 = vpop.f32.mrb[0].mxu0
        %1957 = vmatprep.mubr.bf16.mxu0 0
        %1958 = vmatmul.mubr.bf16.gmra.mrb[0].mxu0 %v1891
        %v1959 = vpop.f32.mrb[0].mxu0
        %v1960 = vadd.f32 %v1847, %v1959
        %v1961 = vpop.f32.mrb[0].mxu0
        %v1962 = vpop.f32.mrb[0].mxu0
        %v1963 = vadd.f32 %v1850, %v1962
        %v1964 = vpop.f32.mrb[0].mxu0
        %1965 = vdwg.mxu0
        %1966 = vrot.lane.b32.xlu0 %v1658, 9
        %v1967 = vpop.permute.xlu0 %1966
        %1968 = vrot.lane.b32.xlu0 %v1659, 9
        %v1969 = vpop.permute.xlu0 %1968
        %1970 = vrot.lane.b32.xlu0 %v1660, 9
        %v1971 = vpop.permute.xlu0 %1970
        %1972 = vrot.lane.b32.xlu0 %v1661, 9
        %v1973 = vpop.permute.xlu0 %1972
        %1974 = vrot.lane.b32.xlu0 %v1662, 9
        %v1975 = vpop.permute.xlu0 %1974
        %1976 = vrot.lane.b32.xlu0 %v1663, 9
        %v1977 = vpop.permute.xlu0 %1976
        %1978 = vrot.lane.b32.xlu0 %v1664, 9
        %v1979 = vpop.permute.xlu0 %1978
        %1980 = vrot.lane.b32.xlu0 %v1665, 9
        %v1981 = vpop.permute.xlu0 %1980
        %1982 = vrot.lane.b32.xlu0 %v1666, 9
        %v1983 = vpop.permute.xlu0 %1982
        %1984 = vrot.lane.b32.xlu0 %v1667, 9
        %v1985 = vpop.permute.xlu0 %1984
        %s1986 = scalar_lea.vmem %s2, 80
        %v1987 = vld [vmem:[%s1986] sm:$0xf]
        %v1988 = vld [vmem:[%s1986 + $0x4] sm:$0xf]
        %v1989 = vld [vmem:[%s1986 + $0x8] sm:$0xf]
        %v1990 = vld [vmem:[%s1986 + $0xc] sm:$0xf]
        %v1991 = vld [vmem:[%s1986 + $0x10] sm:$0xf]
        %v1992 = vld [vmem:[%s1986 + $0x14] sm:$0xf]
        %v1993 = vld [vmem:[%s1986 + $0x18] sm:$0xf]
        %v1994 = vld [vmem:[%s1986 + $0x1c] sm:$0xf]
        %v1995 = vld [vmem:[%s1986 + $0x20] sm:$0xf]
        %v1996 = vld [vmem:[%s1986 + $0x24] sm:$0xf]
        %v1997 = vpack.c.bf16 %v1969, %v1967
        %v1998 = vpack.c.bf16 %v1973, %v1971
        %v1999 = vpack.c.bf16 %v1977, %v1975
        %v2000 = vpack.c.bf16 %v1981, %v1979
        %v2001 = vpack.c.bf16 %v1985, %v1983
        %v2012 = vunpack.c.l.b16 %v1987
        %v2013 = vunpack.c.l.b16 %v1988
        %v2014 = vunpack.c.l.b16 %v1989
        %v2015 = vunpack.c.l.b16 %v1990
        %v2016 = vunpack.c.l.b16 %v1991
        %v2017 = vunpack.c.l.b16 %v1992
        %v2018 = vunpack.c.l.b16 %v1993
        %v2019 = vunpack.c.l.b16 %v1994
        %v2020 = vunpack.c.l.b16 %v1995
        %v2021 = vunpack.c.l.b16 %v1996
        %v2022 = vpack.c.b16 %v2013, %v2012
        %v2023 = vpack.c.b16 %v2015, %v2014
        %v2024 = vpack.c.b16 %v2017, %v2016
        %v2025 = vpack.c.b16 %v2019, %v2018
        %v2026 = vpack.c.b16 %v2021, %v2020
        %v2028 = vsel %vm1764, %v2022, 0
        %v2031 = vsel %vm1764, %v2023, 0
        %v2034 = vsel %vm1764, %v2024, 0
        %v2037 = vsel %vm1764, %v2025, 0
        %v2040 = vsel %vm1764, %v2026, 0
        %2042 = vmatprep.subr.bf16.mxu0 0
        %2043 = vmatpush1.bf16.msra.mxu0 %v1997
        %2044 = vmatprep.subr.bf16.mxu0 0
        %2045 = vmatpush1.bf16.msra.mxu0 %v1998
        %2046 = vmatprep.subr.bf16.mxu0 0
        %2047 = vmatpush1.bf16.msra.mxu0 %v1999
        %2048 = vmatprep.subr.bf16.mxu0 0
        %2049 = vmatpush1.bf16.msra.mxu0 %v2000
        %2050 = vmatprep.subr.bf16.mxu0 0
        %2051 = vmatpush1.bf16.msra.mxu0 %v2001
        %2052 = vmatprep.subr.bf16.mxu0 0
        %2053 = vmatpush1.bf16.msra.mxu0 0
        %2054 = vmatprep.subr.bf16.mxu0 0
        %2055 = vmatpush1.bf16.msra.mxu0 0
        %2056 = vmatprep.subr.bf16.mxu0 0
        %2057 = vmatpush1.bf16.msra.mxu0 0
        %2058 = vmatprep.subr.bf16.mxu0 0
        %2059 = vmatpush1.bf16.msra.mxu0 0
        %2060 = vmatprep.subr.bf16.mxu0 0
        %2061 = vmatpush1.bf16.msra.mxu0 0
        %2062 = vmatprep.subr.bf16.mxu0 0
        %2063 = vmatpush1.bf16.msra.mxu0 0
        %2064 = vmatprep.subr.bf16.mxu0 0
        %2065 = vmatpush1.bf16.msra.mxu0 0
        %2066 = vmatprep.subr.bf16.mxu0 0
        %2067 = vmatpush1.bf16.msra.mxu0 0
        %2068 = vmatprep.subr.bf16.mxu0 0
        %2069 = vmatpush1.bf16.msra.mxu0 0
        %2070 = vmatprep.subr.bf16.mxu0 0
        %2071 = vmatpush1.bf16.msra.mxu0 0
        %2072 = vmatprep.subr.bf16.mxu0 0
        %2073 = vmatpush1.bf16.msra.mxu0 0
        %2074 = vmatprep.mubr.bf16.mxu0 0
        %2075 = vmatmul.mubr.bf16.gmra.mrb[0].mxu0 %v2028
        %v2076 = vpop.f32.mrb[0].mxu0
        %v2077 = vadd.f32 0.0, %v2076
        %v2078 = vpop.f32.mrb[0].mxu0
        %v2079 = vpop.f32.mrb[0].mxu0
        %v2080 = vadd.f32 0.0, %v2079
        %v2081 = vpop.f32.mrb[0].mxu0
        %2082 = vmatprep.mubr.bf16.mxu0 0
        %2083 = vmatmul.mubr.bf16.gmra.mrb[0].mxu0 %v2031
        %v2084 = vpop.f32.mrb[0].mxu0
        %v2085 = vadd.f32 0.0, %v2084
        %v2086 = vpop.f32.mrb[0].mxu0
        %v2087 = vpop.f32.mrb[0].mxu0
        %v2088 = vadd.f32 0.0, %v2087
        %v2089 = vpop.f32.mrb[0].mxu0
        %2090 = vmatprep.mubr.bf16.mxu0 0
        %2091 = vmatmul.mubr.bf16.gmra.mrb[0].mxu0 %v2034
        %v2092 = vpop.f32.mrb[0].mxu0
        %v2093 = vadd.f32 0.0, %v2092
        %v2094 = vpop.f32.mrb[0].mxu0
        %v2095 = vpop.f32.mrb[0].mxu0
        %v2096 = vadd.f32 0.0, %v2095
        %v2097 = vpop.f32.mrb[0].mxu0
        %2098 = vmatprep.mubr.bf16.mxu0 0
        %2099 = vmatmul.mubr.bf16.gmra.mrb[0].mxu0 %v2037
        %v2100 = vpop.f32.mrb[0].mxu0
        %v2101 = vadd.f32 0.0, %v2100
        %v2102 = vpop.f32.mrb[0].mxu0
        %v2103 = vpop.f32.mrb[0].mxu0
        %v2104 = vadd.f32 0.0, %v2103
        %v2105 = vpop.f32.mrb[0].mxu0
        %2106 = vmatprep.mubr.bf16.mxu0 0
        %2107 = vmatmul.mubr.bf16.gmra.mrb[0].mxu0 %v2040
        %v2108 = vpop.f32.mrb[0].mxu0
        %v2109 = vadd.f32 0.0, %v2108
        %v2110 = vpop.f32.mrb[0].mxu0
        %v2111 = vpop.f32.mrb[0].mxu0
        %v2112 = vadd.f32 0.0, %v2111
        %v2113 = vpop.f32.mrb[0].mxu0
        %2114 = vdwg.mxu0
        %v2115 = vadd.f32 %v1928, %v2077
        %v2116 = vadd.f32 %v1931, %v2080
        %v2117 = vadd.f32 %v1936, %v2085
        %v2118 = vadd.f32 %v1939, %v2088
        %v2119 = vadd.f32 %v1944, %v2093
        %v2120 = vadd.f32 %v1947, %v2096
        %v2121 = vadd.f32 %v1952, %v2101
        %v2122 = vadd.f32 %v1955, %v2104
        %v2123 = vadd.f32 %v1960, %v2109
        %v2124 = vadd.f32 %v1963, %v2112
        %2125 = vrot.lane.b32.xlu0 %v1658, 1
        %v2126 = vpop.permute.xlu0 %2125
        %2127 = vrot.lane.b32.xlu0 %v1659, 1
        %v2128 = vpop.permute.xlu0 %2127
        %2129 = vrot.lane.b32.xlu0 %v1660, 1
        %v2130 = vpop.permute.xlu0 %2129
        %2131 = vrot.lane.b32.xlu0 %v1661, 1
        %v2132 = vpop.permute.xlu0 %2131
        %2133 = vrot.lane.b32.xlu0 %v1662, 1
        %v2134 = vpop.permute.xlu0 %2133
        %2135 = vrot.lane.b32.xlu0 %v1663, 1
        %v2136 = vpop.permute.xlu0 %2135
        %2137 = vrot.lane.b32.xlu0 %v1664, 1
        %v2138 = vpop.permute.xlu0 %2137
        %2139 = vrot.lane.b32.xlu0 %v1665, 1
        %v2140 = vpop.permute.xlu0 %2139
        %2141 = vrot.lane.b32.xlu0 %v1666, 1
        %v2142 = vpop.permute.xlu0 %2141
        %2143 = vrot.lane.b32.xlu0 %v1667, 1
        %v2144 = vpop.permute.xlu0 %2143
        %s2145 = scalar_lea.vmem %s2, 120
        %v2146 = vld [vmem:[%s2145] sm:$0xf]
        %v2147 = vld [vmem:[%s2145 + $0x4] sm:$0xf]
        %v2148 = vld [vmem:[%s2145 + $0x8] sm:$0xf]
        %v2149 = vld [vmem:[%s2145 + $0xc] sm:$0xf]
        %v2150 = vld [vmem:[%s2145 + $0x10] sm:$0xf]
        %v2151 = vld [vmem:[%s2145 + $0x14] sm:$0xf]
        %v2152 = vld [vmem:[%s2145 + $0x18] sm:$0xf]
        %v2153 = vld [vmem:[%s2145 + $0x1c] sm:$0xf]
        %v2154 = vld [vmem:[%s2145 + $0x20] sm:$0xf]
        %v2155 = vld [vmem:[%s2145 + $0x24] sm:$0xf]
        %v2156 = vpack.c.bf16 %v2128, %v2126
        %v2157 = vpack.c.bf16 %v2132, %v2130
        %v2158 = vpack.c.bf16 %v2136, %v2134
        %v2159 = vpack.c.bf16 %v2140, %v2138
        %v2160 = vpack.c.bf16 %v2144, %v2142
        %v2171 = vunpack.c.l.b16 %v2146
        %v2172 = vunpack.c.l.b16 %v2147
        %v2173 = vunpack.c.l.b16 %v2148
        %v2174 = vunpack.c.l.b16 %v2149
        %v2175 = vunpack.c.l.b16 %v2150
        %v2176 = vunpack.c.l.b16 %v2151
        %v2177 = vunpack.c.l.b16 %v2152
        %v2178 = vunpack.c.l.b16 %v2153
        %v2179 = vunpack.c.l.b16 %v2154
        %v2180 = vunpack.c.l.b16 %v2155
        %v2181 = vpack.c.b16 %v2172, %v2171
        %v2182 = vpack.c.b16 %v2174, %v2173
        %v2183 = vpack.c.b16 %v2176, %v2175
        %v2184 = vpack.c.b16 %v2178, %v2177
        %v2185 = vpack.c.b16 %v2180, %v2179
        %v2187 = vsel %vm1764, %v2181, 0
        %v2190 = vsel %vm1764, %v2182, 0
        %v2193 = vsel %vm1764, %v2183, 0
        %v2196 = vsel %vm1764, %v2184, 0
        %v2199 = vsel %vm1764, %v2185, 0
        %2201 = vmatprep.subr.bf16.mxu0 0
        %2202 = vmatpush1.bf16.msra.mxu0 %v2156
        %2203 = vmatprep.subr.bf16.mxu0 0
        %2204 = vmatpush1.bf16.msra.mxu0 %v2157
        %2205 = vmatprep.subr.bf16.mxu0 0
        %2206 = vmatpush1.bf16.msra.mxu0 %v2158
        %2207 = vmatprep.subr.bf16.mxu0 0
        %2208 = vmatpush1.bf16.msra.mxu0 %v2159
        %2209 = vmatprep.subr.bf16.mxu0 0
        %2210 = vmatpush1.bf16.msra.mxu0 %v2160
        %2211 = vmatprep.subr.bf16.mxu0 0
        %2212 = vmatpush1.bf16.msra.mxu0 0
        %2213 = vmatprep.subr.bf16.mxu0 0
        %2214 = vmatpush1.bf16.msra.mxu0 0
        %2215 = vmatprep.subr.bf16.mxu0 0
        %2216 = vmatpush1.bf16.msra.mxu0 0
        %2217 = vmatprep.subr.bf16.mxu0 0
        %2218 = vmatpush1.bf16.msra.mxu0 0
        %2219 = vmatprep.subr.bf16.mxu0 0
        %2220 = vmatpush1.bf16.msra.mxu0 0
        %2221 = vmatprep.subr.bf16.mxu0 0
        %2222 = vmatpush1.bf16.msra.mxu0 0
        %2223 = vmatprep.subr.bf16.mxu0 0
        %2224 = vmatpush1.bf16.msra.mxu0 0
        %2225 = vmatprep.subr.bf16.mxu0 0
        %2226 = vmatpush1.bf16.msra.mxu0 0
        %2227 = vmatprep.subr.bf16.mxu0 0
        %2228 = vmatpush1.bf16.msra.mxu0 0
        %2229 = vmatprep.subr.bf16.mxu0 0
        %2230 = vmatpush1.bf16.msra.mxu0 0
        %2231 = vmatprep.subr.bf16.mxu0 0
        %2232 = vmatpush1.bf16.msra.mxu0 0
        %2233 = vmatprep.mubr.bf16.mxu0 0
        %2234 = vmatmul.mubr.bf16.gmra.mrb[0].mxu0 %v2187
        %v2235 = vpop.f32.mrb[0].mxu0
        %v2236 = vadd.f32 0.0, %v2235
        %v2237 = vpop.f32.mrb[0].mxu0
        %v2238 = vpop.f32.mrb[0].mxu0
        %v2239 = vadd.f32 0.0, %v2238
        %v2240 = vpop.f32.mrb[0].mxu0
        %2241 = vmatprep.mubr.bf16.mxu0 0
        %2242 = vmatmul.mubr.bf16.gmra.mrb[0].mxu0 %v2190
        %v2243 = vpop.f32.mrb[0].mxu0
        %v2244 = vadd.f32 0.0, %v2243
        %v2245 = vpop.f32.mrb[0].mxu0
        %v2246 = vpop.f32.mrb[0].mxu0
        %v2247 = vadd.f32 0.0, %v2246
        %v2248 = vpop.f32.mrb[0].mxu0
        %2249 = vmatprep.mubr.bf16.mxu0 0
        %2250 = vmatmul.mubr.bf16.gmra.mrb[0].mxu0 %v2193
        %v2251 = vpop.f32.mrb[0].mxu0
        %v2252 = vadd.f32 0.0, %v2251
        %v2253 = vpop.f32.mrb[0].mxu0
        %v2254 = vpop.f32.mrb[0].mxu0
        %v2255 = vadd.f32 0.0, %v2254
        %v2256 = vpop.f32.mrb[0].mxu0
        %2257 = vmatprep.mubr.bf16.mxu0 0
        %2258 = vmatmul.mubr.bf16.gmra.mrb[0].mxu0 %v2196
        %v2259 = vpop.f32.mrb[0].mxu0
        %v2260 = vadd.f32 0.0, %v2259
        %v2261 = vpop.f32.mrb[0].mxu0
        %v2262 = vpop.f32.mrb[0].mxu0
        %v2263 = vadd.f32 0.0, %v2262
        %v2264 = vpop.f32.mrb[0].mxu0
        %2265 = vmatprep.mubr.bf16.mxu0 0
        %2266 = vmatmul.mubr.bf16.gmra.mrb[0].mxu0 %v2199
        %v2267 = vpop.f32.mrb[0].mxu0
        %v2268 = vadd.f32 0.0, %v2267
        %v2269 = vpop.f32.mrb[0].mxu0
        %v2270 = vpop.f32.mrb[0].mxu0
        %v2271 = vadd.f32 0.0, %v2270
        %v2272 = vpop.f32.mrb[0].mxu0
        %2273 = vdwg.mxu0
        %v2274 = vadd.f32 %v2115, %v2236
        %v2275 = vadd.f32 %v2116, %v2239
        %v2276 = vadd.f32 %v2117, %v2244
        %v2277 = vadd.f32 %v2118, %v2247
        %v2278 = vadd.f32 %v2119, %v2252
        %v2279 = vadd.f32 %v2120, %v2255
        %v2280 = vadd.f32 %v2121, %v2260
        %v2281 = vadd.f32 %v2122, %v2263
        %v2282 = vadd.f32 %v2123, %v2268
        %v2283 = vadd.f32 %v2124, %v2271
        %s2284 = scalar_lea.vmem %s2, 160
        %v2285 = vld [vmem:[%s2284] sm:$0xf]
        %v2286 = vld [vmem:[%s2284 + $0x4] sm:$0xf]
        %v2287 = vld [vmem:[%s2284 + $0x8] sm:$0xf]
        %v2288 = vld [vmem:[%s2284 + $0xc] sm:$0xf]
        %v2289 = vld [vmem:[%s2284 + $0x10] sm:$0xf]
        %v2290 = vld [vmem:[%s2284 + $0x14] sm:$0xf]
        %v2291 = vld [vmem:[%s2284 + $0x18] sm:$0xf]
        %v2292 = vld [vmem:[%s2284 + $0x1c] sm:$0xf]
        %v2293 = vld [vmem:[%s2284 + $0x20] sm:$0xf]
        %v2294 = vld [vmem:[%s2284 + $0x24] sm:$0xf]
        %v2295 = vpack.c.bf16 %v1659, %v1658
        %v2296 = vpack.c.bf16 %v1661, %v1660
        %v2297 = vpack.c.bf16 %v1663, %v1662
        %v2298 = vpack.c.bf16 %v1665, %v1664
        %v2299 = vpack.c.bf16 %v1667, %v1666
        %v2310 = vunpack.c.l.b16 %v2285
        %v2311 = vunpack.c.l.b16 %v2286
        %v2312 = vunpack.c.l.b16 %v2287
        %v2313 = vunpack.c.l.b16 %v2288
        %v2314 = vunpack.c.l.b16 %v2289
        %v2315 = vunpack.c.l.b16 %v2290
        %v2316 = vunpack.c.l.b16 %v2291
        %v2317 = vunpack.c.l.b16 %v2292
        %v2318 = vunpack.c.l.b16 %v2293
        %v2319 = vunpack.c.l.b16 %v2294
        %v2320 = vpack.c.b16 %v2311, %v2310
        %v2321 = vpack.c.b16 %v2313, %v2312
        %v2322 = vpack.c.b16 %v2315, %v2314
        %v2323 = vpack.c.b16 %v2317, %v2316
        %v2324 = vpack.c.b16 %v2319, %v2318
        %v2326 = vsel %vm1764, %v2320, 0
        %v2329 = vsel %vm1764, %v2321, 0
        %v2332 = vsel %vm1764, %v2322, 0
        %v2335 = vsel %vm1764, %v2323, 0
        %v2338 = vsel %vm1764, %v2324, 0
        %2340 = vmatprep.subr.bf16.mxu0 0
        %2341 = vmatpush1.bf16.msra.mxu0 %v2295
        %2342 = vmatprep.subr.bf16.mxu0 0
        %2343 = vmatpush1.bf16.msra.mxu0 %v2296
        %2344 = vmatprep.subr.bf16.mxu0 0
        %2345 = vmatpush1.bf16.msra.mxu0 %v2297
        %2346 = vmatprep.subr.bf16.mxu0 0
        %2347 = vmatpush1.bf16.msra.mxu0 %v2298
        %2348 = vmatprep.subr.bf16.mxu0 0
        %2349 = vmatpush1.bf16.msra.mxu0 %v2299
        %2350 = vmatprep.subr.bf16.mxu0 0
        %2351 = vmatpush1.bf16.msra.mxu0 0
        %2352 = vmatprep.subr.bf16.mxu0 0
        %2353 = vmatpush1.bf16.msra.mxu0 0
        %2354 = vmatprep.subr.bf16.mxu0 0
        %2355 = vmatpush1.bf16.msra.mxu0 0
        %2356 = vmatprep.subr.bf16.mxu0 0
        %2357 = vmatpush1.bf16.msra.mxu0 0
        %2358 = vmatprep.subr.bf16.mxu0 0
        %2359 = vmatpush1.bf16.msra.mxu0 0
        %2360 = vmatprep.subr.bf16.mxu0 0
        %2361 = vmatpush1.bf16.msra.mxu0 0
        %2362 = vmatprep.subr.bf16.mxu0 0
        %2363 = vmatpush1.bf16.msra.mxu0 0
        %2364 = vmatprep.subr.bf16.mxu0 0
        %2365 = vmatpush1.bf16.msra.mxu0 0
        %2366 = vmatprep.subr.bf16.mxu0 0
        %2367 = vmatpush1.bf16.msra.mxu0 0
        %2368 = vmatprep.subr.bf16.mxu0 0
        %2369 = vmatpush1.bf16.msra.mxu0 0
        %2370 = vmatprep.subr.bf16.mxu0 0
        %2371 = vmatpush1.bf16.msra.mxu0 0
        %2372 = vmatprep.mubr.bf16.mxu0 0
        %2373 = vmatmul.mubr.bf16.gmra.mrb[0].mxu0 %v2326
        %v2374 = vpop.f32.mrb[0].mxu0
        %v2375 = vadd.f32 0.0, %v2374
        %v2376 = vpop.f32.mrb[0].mxu0
        %v2377 = vpop.f32.mrb[0].mxu0
        %v2378 = vadd.f32 0.0, %v2377
        %v2379 = vpop.f32.mrb[0].mxu0
        %2380 = vmatprep.mubr.bf16.mxu0 0
        %2381 = vmatmul.mubr.bf16.gmra.mrb[0].mxu0 %v2329
        %v2382 = vpop.f32.mrb[0].mxu0
        %v2383 = vadd.f32 0.0, %v2382
        %v2384 = vpop.f32.mrb[0].mxu0
        %v2385 = vpop.f32.mrb[0].mxu0
        %v2386 = vadd.f32 0.0, %v2385
        %v2387 = vpop.f32.mrb[0].mxu0
        %2388 = vmatprep.mubr.bf16.mxu0 0
        %2389 = vmatmul.mubr.bf16.gmra.mrb[0].mxu0 %v2332
        %v2390 = vpop.f32.mrb[0].mxu0
        %v2391 = vadd.f32 0.0, %v2390
        %v2392 = vpop.f32.mrb[0].mxu0
        %v2393 = vpop.f32.mrb[0].mxu0
        %v2394 = vadd.f32 0.0, %v2393
        %v2395 = vpop.f32.mrb[0].mxu0
        %2396 = vmatprep.mubr.bf16.mxu0 0
        %2397 = vmatmul.mubr.bf16.gmra.mrb[0].mxu0 %v2335
        %v2398 = vpop.f32.mrb[0].mxu0
        %v2399 = vadd.f32 0.0, %v2398
        %v2400 = vpop.f32.mrb[0].mxu0
        %v2401 = vpop.f32.mrb[0].mxu0
        %v2402 = vadd.f32 0.0, %v2401
        %v2403 = vpop.f32.mrb[0].mxu0
        %2404 = vmatprep.mubr.bf16.mxu0 0
        %2405 = vmatmul.mubr.bf16.gmra.mrb[0].mxu0 %v2338
        %v2406 = vpop.f32.mrb[0].mxu0
        %v2407 = vadd.f32 0.0, %v2406
        %v2408 = vpop.f32.mrb[0].mxu0
        %v2409 = vpop.f32.mrb[0].mxu0
        %v2410 = vadd.f32 0.0, %v2409
        %v2411 = vpop.f32.mrb[0].mxu0
        %2412 = vdwg.mxu0
        %v2413 = vadd.f32 %v2274, %v2375
        %v2414 = vadd.f32 %v2275, %v2378
        %v2415 = vadd.f32 %v2276, %v2383
        %v2416 = vadd.f32 %v2277, %v2386
        %v2417 = vadd.f32 %v2278, %v2391
        %v2418 = vadd.f32 %v2279, %v2394
        %v2419 = vadd.f32 %v2280, %v2399
        %v2420 = vadd.f32 %v2281, %v2402
        %v2421 = vadd.f32 %v2282, %v2407
        %v2422 = vadd.f32 %v2283, %v2410
        %2423 = vrot.lane.b32.xlu0 %v1658, 127
        %v2424 = vpop.permute.xlu0 %2423
        %2425 = vrot.lane.b32.xlu0 %v1659, 127
        %v2426 = vpop.permute.xlu0 %2425
        %2427 = vrot.lane.b32.xlu0 %v1660, 127
        %v2428 = vpop.permute.xlu0 %2427
        %2429 = vrot.lane.b32.xlu0 %v1661, 127
        %v2430 = vpop.permute.xlu0 %2429
        %2431 = vrot.lane.b32.xlu0 %v1662, 127
        %v2432 = vpop.permute.xlu0 %2431
        %2433 = vrot.lane.b32.xlu0 %v1663, 127
        %v2434 = vpop.permute.xlu0 %2433
        %2435 = vrot.lane.b32.xlu0 %v1664, 127
        %v2436 = vpop.permute.xlu0 %2435
        %2437 = vrot.lane.b32.xlu0 %v1665, 127
        %v2438 = vpop.permute.xlu0 %2437
        %2439 = vrot.lane.b32.xlu0 %v1666, 127
        %v2440 = vpop.permute.xlu0 %2439
        %2441 = vrot.lane.b32.xlu0 %v1667, 127
        %v2442 = vpop.permute.xlu0 %2441
        %s2443 = scalar_lea.vmem %s2, 200
        %v2444 = vld [vmem:[%s2443] sm:$0xf]
        %v2445 = vld [vmem:[%s2443 + $0x4] sm:$0xf]
        %v2446 = vld [vmem:[%s2443 + $0x8] sm:$0xf]
        %v2447 = vld [vmem:[%s2443 + $0xc] sm:$0xf]
        %v2448 = vld [vmem:[%s2443 + $0x10] sm:$0xf]
        %v2449 = vld [vmem:[%s2443 + $0x14] sm:$0xf]
        %v2450 = vld [vmem:[%s2443 + $0x18] sm:$0xf]
        %v2451 = vld [vmem:[%s2443 + $0x1c] sm:$0xf]
        %v2452 = vld [vmem:[%s2443 + $0x20] sm:$0xf]
        %v2453 = vld [vmem:[%s2443 + $0x24] sm:$0xf]
        %v2454 = vpack.c.bf16 %v2426, %v2424
        %v2455 = vpack.c.bf16 %v2430, %v2428
        %v2456 = vpack.c.bf16 %v2434, %v2432
        %v2457 = vpack.c.bf16 %v2438, %v2436
        %v2458 = vpack.c.bf16 %v2442, %v2440
        %v2469 = vunpack.c.l.b16 %v2444
        %v2470 = vunpack.c.l.b16 %v2445
        %v2471 = vunpack.c.l.b16 %v2446
        %v2472 = vunpack.c.l.b16 %v2447
        %v2473 = vunpack.c.l.b16 %v2448
        %v2474 = vunpack.c.l.b16 %v2449
        %v2475 = vunpack.c.l.b16 %v2450
        %v2476 = vunpack.c.l.b16 %v2451
        %v2477 = vunpack.c.l.b16 %v2452
        %v2478 = vunpack.c.l.b16 %v2453
        %v2479 = vpack.c.b16 %v2470, %v2469
        %v2480 = vpack.c.b16 %v2472, %v2471
        %v2481 = vpack.c.b16 %v2474, %v2473
        %v2482 = vpack.c.b16 %v2476, %v2475
        %v2483 = vpack.c.b16 %v2478, %v2477
        %v2485 = vsel %vm1764, %v2479, 0
        %v2488 = vsel %vm1764, %v2480, 0
        %v2491 = vsel %vm1764, %v2481, 0
        %v2494 = vsel %vm1764, %v2482, 0
        %v2497 = vsel %vm1764, %v2483, 0
        %2499 = vmatprep.subr.bf16.mxu0 0
        %2500 = vmatpush1.bf16.msra.mxu0 %v2454
        %2501 = vmatprep.subr.bf16.mxu0 0
        %2502 = vmatpush1.bf16.msra.mxu0 %v2455
        %2503 = vmatprep.subr.bf16.mxu0 0
        %2504 = vmatpush1.bf16.msra.mxu0 %v2456
        %2505 = vmatprep.subr.bf16.mxu0 0
        %2506 = vmatpush1.bf16.msra.mxu0 %v2457
        %2507 = vmatprep.subr.bf16.mxu0 0
        %2508 = vmatpush1.bf16.msra.mxu0 %v2458
        %2509 = vmatprep.subr.bf16.mxu0 0
        %2510 = vmatpush1.bf16.msra.mxu0 0
        %2511 = vmatprep.subr.bf16.mxu0 0
        %2512 = vmatpush1.bf16.msra.mxu0 0
        %2513 = vmatprep.subr.bf16.mxu0 0
        %2514 = vmatpush1.bf16.msra.mxu0 0
        %2515 = vmatprep.subr.bf16.mxu0 0
        %2516 = vmatpush1.bf16.msra.mxu0 0
        %2517 = vmatprep.subr.bf16.mxu0 0
        %2518 = vmatpush1.bf16.msra.mxu0 0
        %2519 = vmatprep.subr.bf16.mxu0 0
        %2520 = vmatpush1.bf16.msra.mxu0 0
        %2521 = vmatprep.subr.bf16.mxu0 0
        %2522 = vmatpush1.bf16.msra.mxu0 0
        %2523 = vmatprep.subr.bf16.mxu0 0
        %2524 = vmatpush1.bf16.msra.mxu0 0
        %2525 = vmatprep.subr.bf16.mxu0 0
        %2526 = vmatpush1.bf16.msra.mxu0 0
        %2527 = vmatprep.subr.bf16.mxu0 0
        %2528 = vmatpush1.bf16.msra.mxu0 0
        %2529 = vmatprep.subr.bf16.mxu0 0
        %2530 = vmatpush1.bf16.msra.mxu0 0
        %2531 = vmatprep.mubr.bf16.mxu0 0
        %2532 = vmatmul.mubr.bf16.gmra.mrb[0].mxu0 %v2485
        %v2533 = vpop.f32.mrb[0].mxu0
        %v2534 = vadd.f32 0.0, %v2533
        %v2535 = vpop.f32.mrb[0].mxu0
        %v2536 = vpop.f32.mrb[0].mxu0
        %v2537 = vadd.f32 0.0, %v2536
        %v2538 = vpop.f32.mrb[0].mxu0
        %2539 = vmatprep.mubr.bf16.mxu0 0
        %2540 = vmatmul.mubr.bf16.gmra.mrb[0].mxu0 %v2488
        %v2541 = vpop.f32.mrb[0].mxu0
        %v2542 = vadd.f32 0.0, %v2541
        %v2543 = vpop.f32.mrb[0].mxu0
        %v2544 = vpop.f32.mrb[0].mxu0
        %v2545 = vadd.f32 0.0, %v2544
        %v2546 = vpop.f32.mrb[0].mxu0
        %2547 = vmatprep.mubr.bf16.mxu0 0
        %2548 = vmatmul.mubr.bf16.gmra.mrb[0].mxu0 %v2491
        %v2549 = vpop.f32.mrb[0].mxu0
        %v2550 = vadd.f32 0.0, %v2549
        %v2551 = vpop.f32.mrb[0].mxu0
        %v2552 = vpop.f32.mrb[0].mxu0
        %v2553 = vadd.f32 0.0, %v2552
        %v2554 = vpop.f32.mrb[0].mxu0
        %2555 = vmatprep.mubr.bf16.mxu0 0
        %2556 = vmatmul.mubr.bf16.gmra.mrb[0].mxu0 %v2494
        %v2557 = vpop.f32.mrb[0].mxu0
        %v2558 = vadd.f32 0.0, %v2557
        %v2559 = vpop.f32.mrb[0].mxu0
        %v2560 = vpop.f32.mrb[0].mxu0
        %v2561 = vadd.f32 0.0, %v2560
        %v2562 = vpop.f32.mrb[0].mxu0
        %2563 = vmatprep.mubr.bf16.mxu0 0
        %2564 = vmatmul.mubr.bf16.gmra.mrb[0].mxu0 %v2497
        %v2565 = vpop.f32.mrb[0].mxu0
        %v2566 = vadd.f32 0.0, %v2565
        %v2567 = vpop.f32.mrb[0].mxu0
        %v2568 = vpop.f32.mrb[0].mxu0
        %v2569 = vadd.f32 0.0, %v2568
        %v2570 = vpop.f32.mrb[0].mxu0
        %2571 = vdwg.mxu0
        %v2572 = vadd.f32 %v2413, %v2534
        %v2573 = vadd.f32 %v2414, %v2537
        %v2574 = vadd.f32 %v2415, %v2542
        %v2575 = vadd.f32 %v2416, %v2545
        %v2576 = vadd.f32 %v2417, %v2550
        %v2577 = vadd.f32 %v2418, %v2553
        %v2578 = vadd.f32 %v2419, %v2558
        %v2579 = vadd.f32 %v2420, %v2561
        %v2580 = vadd.f32 %v2421, %v2566
        %v2581 = vadd.f32 %v2422, %v2569
        %2582 = vrot.lane.b32.xlu0 %v1658, 119
        %v2583 = vpop.permute.xlu0 %2582
        %2584 = vrot.lane.b32.xlu0 %v1659, 119
        %v2585 = vpop.permute.xlu0 %2584
        %2586 = vrot.lane.b32.xlu0 %v1660, 119
        %v2587 = vpop.permute.xlu0 %2586
        %2588 = vrot.lane.b32.xlu0 %v1661, 119
        %v2589 = vpop.permute.xlu0 %2588
        %2590 = vrot.lane.b32.xlu0 %v1662, 119
        %v2591 = vpop.permute.xlu0 %2590
        %2592 = vrot.lane.b32.xlu0 %v1663, 119
        %v2593 = vpop.permute.xlu0 %2592
        %2594 = vrot.lane.b32.xlu0 %v1664, 119
        %v2595 = vpop.permute.xlu0 %2594
        %2596 = vrot.lane.b32.xlu0 %v1665, 119
        %v2597 = vpop.permute.xlu0 %2596
        %2598 = vrot.lane.b32.xlu0 %v1666, 119
        %v2599 = vpop.permute.xlu0 %2598
        %2600 = vrot.lane.b32.xlu0 %v1667, 119
        %v2601 = vpop.permute.xlu0 %2600
        %s2602 = scalar_lea.vmem %s2, 240
        %v2603 = vld [vmem:[%s2602] sm:$0xf]
        %v2604 = vld [vmem:[%s2602 + $0x4] sm:$0xf]
        %v2605 = vld [vmem:[%s2602 + $0x8] sm:$0xf]
        %v2606 = vld [vmem:[%s2602 + $0xc] sm:$0xf]
        %v2607 = vld [vmem:[%s2602 + $0x10] sm:$0xf]
        %v2608 = vld [vmem:[%s2602 + $0x14] sm:$0xf]
        %v2609 = vld [vmem:[%s2602 + $0x18] sm:$0xf]
        %v2610 = vld [vmem:[%s2602 + $0x1c] sm:$0xf]
        %v2611 = vld [vmem:[%s2602 + $0x20] sm:$0xf]
        %v2612 = vld [vmem:[%s2602 + $0x24] sm:$0xf]
        %v2613 = vpack.c.bf16 %v2585, %v2583
        %v2614 = vpack.c.bf16 %v2589, %v2587
        %v2615 = vpack.c.bf16 %v2593, %v2591
        %v2616 = vpack.c.bf16 %v2597, %v2595
        %v2617 = vpack.c.bf16 %v2601, %v2599
        %v2628 = vunpack.c.l.b16 %v2603
        %v2629 = vunpack.c.l.b16 %v2604
        %v2630 = vunpack.c.l.b16 %v2605
        %v2631 = vunpack.c.l.b16 %v2606
        %v2632 = vunpack.c.l.b16 %v2607
        %v2633 = vunpack.c.l.b16 %v2608
        %v2634 = vunpack.c.l.b16 %v2609
        %v2635 = vunpack.c.l.b16 %v2610
        %v2636 = vunpack.c.l.b16 %v2611
        %v2637 = vunpack.c.l.b16 %v2612
        %v2638 = vpack.c.b16 %v2629, %v2628
        %v2639 = vpack.c.b16 %v2631, %v2630
        %v2640 = vpack.c.b16 %v2633, %v2632
        %v2641 = vpack.c.b16 %v2635, %v2634
        %v2642 = vpack.c.b16 %v2637, %v2636
        %v2644 = vsel %vm1764, %v2638, 0
        %v2647 = vsel %vm1764, %v2639, 0
        %v2650 = vsel %vm1764, %v2640, 0
        %v2653 = vsel %vm1764, %v2641, 0
        %v2656 = vsel %vm1764, %v2642, 0
        %2658 = vmatprep.subr.bf16.mxu0 0
        %2659 = vmatpush1.bf16.msra.mxu0 %v2613
        %2660 = vmatprep.subr.bf16.mxu0 0
        %2661 = vmatpush1.bf16.msra.mxu0 %v2614
        %2662 = vmatprep.subr.bf16.mxu0 0
        %2663 = vmatpush1.bf16.msra.mxu0 %v2615
        %2664 = vmatprep.subr.bf16.mxu0 0
        %2665 = vmatpush1.bf16.msra.mxu0 %v2616
        %2666 = vmatprep.subr.bf16.mxu0 0
        %2667 = vmatpush1.bf16.msra.mxu0 %v2617
        %2668 = vmatprep.subr.bf16.mxu0 0
        %2669 = vmatpush1.bf16.msra.mxu0 0
        %2670 = vmatprep.subr.bf16.mxu0 0
        %2671 = vmatpush1.bf16.msra.mxu0 0
        %2672 = vmatprep.subr.bf16.mxu0 0
        %2673 = vmatpush1.bf16.msra.mxu0 0
        %2674 = vmatprep.subr.bf16.mxu0 0
        %2675 = vmatpush1.bf16.msra.mxu0 0
        %2676 = vmatprep.subr.bf16.mxu0 0
        %2677 = vmatpush1.bf16.msra.mxu0 0
        %2678 = vmatprep.subr.bf16.mxu0 0
        %2679 = vmatpush1.bf16.msra.mxu0 0
        %2680 = vmatprep.subr.bf16.mxu0 0
        %2681 = vmatpush1.bf16.msra.mxu0 0
        %2682 = vmatprep.subr.bf16.mxu0 0
        %2683 = vmatpush1.bf16.msra.mxu0 0
        %2684 = vmatprep.subr.bf16.mxu0 0
        %2685 = vmatpush1.bf16.msra.mxu0 0
        %2686 = vmatprep.subr.bf16.mxu0 0
        %2687 = vmatpush1.bf16.msra.mxu0 0
        %2688 = vmatprep.subr.bf16.mxu0 0
        %2689 = vmatpush1.bf16.msra.mxu0 0
        %2690 = vmatprep.mubr.bf16.mxu0 0
        %2691 = vmatmul.mubr.bf16.gmra.mrb[0].mxu0 %v2644
        %v2692 = vpop.f32.mrb[0].mxu0
        %v2693 = vadd.f32 0.0, %v2692
        %v2694 = vpop.f32.mrb[0].mxu0
        %v2695 = vpop.f32.mrb[0].mxu0
        %v2696 = vadd.f32 0.0, %v2695
        %v2697 = vpop.f32.mrb[0].mxu0
        %2698 = vmatprep.mubr.bf16.mxu0 0
        %2699 = vmatmul.mubr.bf16.gmra.mrb[0].mxu0 %v2647
        %v2700 = vpop.f32.mrb[0].mxu0
        %v2701 = vadd.f32 0.0, %v2700
        %v2702 = vpop.f32.mrb[0].mxu0
        %v2703 = vpop.f32.mrb[0].mxu0
        %v2704 = vadd.f32 0.0, %v2703
        %v2705 = vpop.f32.mrb[0].mxu0
        %2706 = vmatprep.mubr.bf16.mxu0 0
        %2707 = vmatmul.mubr.bf16.gmra.mrb[0].mxu0 %v2650
        %v2708 = vpop.f32.mrb[0].mxu0
        %v2709 = vadd.f32 0.0, %v2708
        %v2710 = vpop.f32.mrb[0].mxu0
        %v2711 = vpop.f32.mrb[0].mxu0
        %v2712 = vadd.f32 0.0, %v2711
        %v2713 = vpop.f32.mrb[0].mxu0
        %2714 = vmatprep.mubr.bf16.mxu0 0
        %2715 = vmatmul.mubr.bf16.gmra.mrb[0].mxu0 %v2653
        %v2716 = vpop.f32.mrb[0].mxu0
        %v2717 = vadd.f32 0.0, %v2716
        %v2718 = vpop.f32.mrb[0].mxu0
        %v2719 = vpop.f32.mrb[0].mxu0
        %v2720 = vadd.f32 0.0, %v2719
        %v2721 = vpop.f32.mrb[0].mxu0
        %2722 = vmatprep.mubr.bf16.mxu0 0
        %2723 = vmatmul.mubr.bf16.gmra.mrb[0].mxu0 %v2656
        %v2724 = vpop.f32.mrb[0].mxu0
        %v2725 = vadd.f32 0.0, %v2724
        %v2726 = vpop.f32.mrb[0].mxu0
        %v2727 = vpop.f32.mrb[0].mxu0
        %v2728 = vadd.f32 0.0, %v2727
        %v2729 = vpop.f32.mrb[0].mxu0
        %2730 = vdwg.mxu0
        %v2731 = vadd.f32 %v2572, %v2693
        %v2732 = vadd.f32 %v2573, %v2696
        %v2733 = vadd.f32 %v2574, %v2701
        %v2734 = vadd.f32 %v2575, %v2704
        %v2735 = vadd.f32 %v2576, %v2709
        %v2736 = vadd.f32 %v2577, %v2712
        %v2737 = vadd.f32 %v2578, %v2717
        %v2738 = vadd.f32 %v2579, %v2720
        %v2739 = vadd.f32 %v2580, %v2725
        %v2740 = vadd.f32 %v2581, %v2728
        %2741 = vrot.lane.b32.xlu0 %v1658, 118
        %v2742 = vpop.permute.xlu0 %2741
        %2743 = vrot.lane.b32.xlu0 %v1659, 118
        %v2744 = vpop.permute.xlu0 %2743
        %2745 = vrot.lane.b32.xlu0 %v1660, 118
        %v2746 = vpop.permute.xlu0 %2745
        %2747 = vrot.lane.b32.xlu0 %v1661, 118
        %v2748 = vpop.permute.xlu0 %2747
        %2749 = vrot.lane.b32.xlu0 %v1662, 118
        %v2750 = vpop.permute.xlu0 %2749
        %2751 = vrot.lane.b32.xlu0 %v1663, 118
        %v2752 = vpop.permute.xlu0 %2751
        %2753 = vrot.lane.b32.xlu0 %v1664, 118
        %v2754 = vpop.permute.xlu0 %2753
        %2755 = vrot.lane.b32.xlu0 %v1665, 118
        %v2756 = vpop.permute.xlu0 %2755
        %2757 = vrot.lane.b32.xlu0 %v1666, 118
        %v2758 = vpop.permute.xlu0 %2757
        %2759 = vrot.lane.b32.xlu0 %v1667, 118
        %v2760 = vpop.permute.xlu0 %2759
        %s2761 = scalar_lea.vmem %s2, 280
        %v2762 = vld [vmem:[%s2761] sm:$0xf]
        %v2763 = vld [vmem:[%s2761 + $0x4] sm:$0xf]
        %v2764 = vld [vmem:[%s2761 + $0x8] sm:$0xf]
        %v2765 = vld [vmem:[%s2761 + $0xc] sm:$0xf]
        %v2766 = vld [vmem:[%s2761 + $0x10] sm:$0xf]
        %v2767 = vld [vmem:[%s2761 + $0x14] sm:$0xf]
        %v2768 = vld [vmem:[%s2761 + $0x18] sm:$0xf]
        %v2769 = vld [vmem:[%s2761 + $0x1c] sm:$0xf]
        %v2770 = vld [vmem:[%s2761 + $0x20] sm:$0xf]
        %v2771 = vld [vmem:[%s2761 + $0x24] sm:$0xf]
        %v2772 = vpack.c.bf16 %v2744, %v2742
        %v2773 = vpack.c.bf16 %v2748, %v2746
        %v2774 = vpack.c.bf16 %v2752, %v2750
        %v2775 = vpack.c.bf16 %v2756, %v2754
        %v2776 = vpack.c.bf16 %v2760, %v2758
        %v2787 = vunpack.c.l.b16 %v2762
        %v2788 = vunpack.c.l.b16 %v2763
        %v2789 = vunpack.c.l.b16 %v2764
        %v2790 = vunpack.c.l.b16 %v2765
        %v2791 = vunpack.c.l.b16 %v2766
        %v2792 = vunpack.c.l.b16 %v2767
        %v2793 = vunpack.c.l.b16 %v2768
        %v2794 = vunpack.c.l.b16 %v2769
        %v2795 = vunpack.c.l.b16 %v2770
        %v2796 = vunpack.c.l.b16 %v2771
        %v2797 = vpack.c.b16 %v2788, %v2787
        %v2798 = vpack.c.b16 %v2790, %v2789
        %v2799 = vpack.c.b16 %v2792, %v2791
        %v2800 = vpack.c.b16 %v2794, %v2793
        %v2801 = vpack.c.b16 %v2796, %v2795
        %v2803 = vsel %vm1764, %v2797, 0
        %v2806 = vsel %vm1764, %v2798, 0
        %v2809 = vsel %vm1764, %v2799, 0
        %v2812 = vsel %vm1764, %v2800, 0
        %v2815 = vsel %vm1764, %v2801, 0
        %2817 = vmatprep.subr.bf16.mxu0 0
        %2818 = vmatpush1.bf16.msra.mxu0 %v2772
        %2819 = vmatprep.subr.bf16.mxu0 0
        %2820 = vmatpush1.bf16.msra.mxu0 %v2773
        %2821 = vmatprep.subr.bf16.mxu0 0
        %2822 = vmatpush1.bf16.msra.mxu0 %v2774
        %2823 = vmatprep.subr.bf16.mxu0 0
        %2824 = vmatpush1.bf16.msra.mxu0 %v2775
        %2825 = vmatprep.subr.bf16.mxu0 0
        %2826 = vmatpush1.bf16.msra.mxu0 %v2776
        %2827 = vmatprep.subr.bf16.mxu0 0
        %2828 = vmatpush1.bf16.msra.mxu0 0
        %2829 = vmatprep.subr.bf16.mxu0 0
        %2830 = vmatpush1.bf16.msra.mxu0 0
        %2831 = vmatprep.subr.bf16.mxu0 0
        %2832 = vmatpush1.bf16.msra.mxu0 0
        %2833 = vmatprep.subr.bf16.mxu0 0
        %2834 = vmatpush1.bf16.msra.mxu0 0
        %2835 = vmatprep.subr.bf16.mxu0 0
        %2836 = vmatpush1.bf16.msra.mxu0 0
        %2837 = vmatprep.subr.bf16.mxu0 0
        %2838 = vmatpush1.bf16.msra.mxu0 0
        %2839 = vmatprep.subr.bf16.mxu0 0
        %2840 = vmatpush1.bf16.msra.mxu0 0
        %2841 = vmatprep.subr.bf16.mxu0 0
        %2842 = vmatpush1.bf16.msra.mxu0 0
        %2843 = vmatprep.subr.bf16.mxu0 0
        %2844 = vmatpush1.bf16.msra.mxu0 0
        %2845 = vmatprep.subr.bf16.mxu0 0
        %2846 = vmatpush1.bf16.msra.mxu0 0
        %2847 = vmatprep.subr.bf16.mxu0 0
        %2848 = vmatpush1.bf16.msra.mxu0 0
        %2849 = vmatprep.mubr.bf16.mxu0 0
        %2850 = vmatmul.mubr.bf16.gmra.mrb[0].mxu0 %v2803
        %v2851 = vpop.f32.mrb[0].mxu0
        %v2852 = vadd.f32 0.0, %v2851
        %v2853 = vpop.f32.mrb[0].mxu0
        %v2854 = vpop.f32.mrb[0].mxu0
        %v2855 = vadd.f32 0.0, %v2854
        %v2856 = vpop.f32.mrb[0].mxu0
        %2857 = vmatprep.mubr.bf16.mxu0 0
        %2858 = vmatmul.mubr.bf16.gmra.mrb[0].mxu0 %v2806
        %v2859 = vpop.f32.mrb[0].mxu0
        %v2860 = vadd.f32 0.0, %v2859
        %v2861 = vpop.f32.mrb[0].mxu0
        %v2862 = vpop.f32.mrb[0].mxu0
        %v2863 = vadd.f32 0.0, %v2862
        %v2864 = vpop.f32.mrb[0].mxu0
        %2865 = vmatprep.mubr.bf16.mxu0 0
        %2866 = vmatmul.mubr.bf16.gmra.mrb[0].mxu0 %v2809
        %v2867 = vpop.f32.mrb[0].mxu0
        %v2868 = vadd.f32 0.0, %v2867
        %v2869 = vpop.f32.mrb[0].mxu0
        %v2870 = vpop.f32.mrb[0].mxu0
        %v2871 = vadd.f32 0.0, %v2870
        %v2872 = vpop.f32.mrb[0].mxu0
        %2873 = vmatprep.mubr.bf16.mxu0 0
        %2874 = vmatmul.mubr.bf16.gmra.mrb[0].mxu0 %v2812
        %v2875 = vpop.f32.mrb[0].mxu0
        %v2876 = vadd.f32 0.0, %v2875
        %v2877 = vpop.f32.mrb[0].mxu0
        %v2878 = vpop.f32.mrb[0].mxu0
        %v2879 = vadd.f32 0.0, %v2878
        %v2880 = vpop.f32.mrb[0].mxu0
        %2881 = vmatprep.mubr.bf16.mxu0 0
        %2882 = vmatmul.mubr.bf16.gmra.mrb[0].mxu0 %v2815
        %v2883 = vpop.f32.mrb[0].mxu0
        %v2884 = vadd.f32 0.0, %v2883
        %v2885 = vpop.f32.mrb[0].mxu0
        %v2886 = vpop.f32.mrb[0].mxu0
        %v2887 = vadd.f32 0.0, %v2886
        %v2888 = vpop.f32.mrb[0].mxu0
        %2889 = vdwg.mxu0
        %v2890 = vadd.f32 %v2731, %v2852
        %v2891 = vadd.f32 %v2732, %v2855
        %v2892 = vadd.f32 %v2733, %v2860
        %v2893 = vadd.f32 %v2734, %v2863
        %v2894 = vadd.f32 %v2735, %v2868
        %v2895 = vadd.f32 %v2736, %v2871
        %v2896 = vadd.f32 %v2737, %v2876
        %v2897 = vadd.f32 %v2738, %v2879
        %v2898 = vadd.f32 %v2739, %v2884
        %v2899 = vadd.f32 %v2740, %v2887
        %2900 = vrot.lane.b32.xlu0 %v1658, 117
        %v2901 = vpop.permute.xlu0 %2900
        %2902 = vrot.lane.b32.xlu0 %v1659, 117
        %v2903 = vpop.permute.xlu0 %2902
        %2904 = vrot.lane.b32.xlu0 %v1660, 117
        %v2905 = vpop.permute.xlu0 %2904
        %2906 = vrot.lane.b32.xlu0 %v1661, 117
        %v2907 = vpop.permute.xlu0 %2906
        %2908 = vrot.lane.b32.xlu0 %v1662, 117
        %v2909 = vpop.permute.xlu0 %2908
        %2910 = vrot.lane.b32.xlu0 %v1663, 117
        %v2911 = vpop.permute.xlu0 %2910
        %2912 = vrot.lane.b32.xlu0 %v1664, 117
        %v2913 = vpop.permute.xlu0 %2912
        %2914 = vrot.lane.b32.xlu0 %v1665, 117
        %v2915 = vpop.permute.xlu0 %2914
        %2916 = vrot.lane.b32.xlu0 %v1666, 117
        %v2917 = vpop.permute.xlu0 %2916
        %2918 = vrot.lane.b32.xlu0 %v1667, 117
        %v2919 = vpop.permute.xlu0 %2918
        %s2920 = scalar_lea.vmem %s2, 320
        %v2921 = vld [vmem:[%s2920] sm:$0xf]
        %v2922 = vld [vmem:[%s2920 + $0x4] sm:$0xf]
        %v2923 = vld [vmem:[%s2920 + $0x8] sm:$0xf]
        %v2924 = vld [vmem:[%s2920 + $0xc] sm:$0xf]
        %v2925 = vld [vmem:[%s2920 + $0x10] sm:$0xf]
        %v2926 = vld [vmem:[%s2920 + $0x14] sm:$0xf]
        %v2927 = vld [vmem:[%s2920 + $0x18] sm:$0xf]
        %v2928 = vld [vmem:[%s2920 + $0x1c] sm:$0xf]
        %v2929 = vld [vmem:[%s2920 + $0x20] sm:$0xf]
        %v2930 = vld [vmem:[%s2920 + $0x24] sm:$0xf]
        %v2931 = vpack.c.bf16 %v2903, %v2901
        %v2932 = vpack.c.bf16 %v2907, %v2905
        %v2933 = vpack.c.bf16 %v2911, %v2909
        %v2934 = vpack.c.bf16 %v2915, %v2913
        %v2935 = vpack.c.bf16 %v2919, %v2917
        %v2946 = vunpack.c.l.b16 %v2921
        %v2947 = vunpack.c.l.b16 %v2922
        %v2948 = vunpack.c.l.b16 %v2923
        %v2949 = vunpack.c.l.b16 %v2924
        %v2950 = vunpack.c.l.b16 %v2925
        %v2951 = vunpack.c.l.b16 %v2926
        %v2952 = vunpack.c.l.b16 %v2927
        %v2953 = vunpack.c.l.b16 %v2928
        %v2954 = vunpack.c.l.b16 %v2929
        %v2955 = vunpack.c.l.b16 %v2930
        %v2956 = vpack.c.b16 %v2947, %v2946
        %v2957 = vpack.c.b16 %v2949, %v2948
        %v2958 = vpack.c.b16 %v2951, %v2950
        %v2959 = vpack.c.b16 %v2953, %v2952
        %v2960 = vpack.c.b16 %v2955, %v2954
        %v2962 = vsel %vm1764, %v2956, 0
        %v2965 = vsel %vm1764, %v2957, 0
        %v2968 = vsel %vm1764, %v2958, 0
        %v2971 = vsel %vm1764, %v2959, 0
        %v2974 = vsel %vm1764, %v2960, 0
        %2976 = vmatprep.subr.bf16.mxu0 0
        %2977 = vmatpush1.bf16.msra.mxu0 %v2931
        %2978 = vmatprep.subr.bf16.mxu0 0
        %2979 = vmatpush1.bf16.msra.mxu0 %v2932
        %2980 = vmatprep.subr.bf16.mxu0 0
        %2981 = vmatpush1.bf16.msra.mxu0 %v2933
        %2982 = vmatprep.subr.bf16.mxu0 0
        %2983 = vmatpush1.bf16.msra.mxu0 %v2934
        %2984 = vmatprep.subr.bf16.mxu0 0
        %2985 = vmatpush1.bf16.msra.mxu0 %v2935
        %2986 = vmatprep.subr.bf16.mxu0 0
        %2987 = vmatpush1.bf16.msra.mxu0 0
        %2988 = vmatprep.subr.bf16.mxu0 0
        %2989 = vmatpush1.bf16.msra.mxu0 0
        %2990 = vmatprep.subr.bf16.mxu0 0
        %2991 = vmatpush1.bf16.msra.mxu0 0
        %2992 = vmatprep.subr.bf16.mxu0 0
        %2993 = vmatpush1.bf16.msra.mxu0 0
        %2994 = vmatprep.subr.bf16.mxu0 0
        %2995 = vmatpush1.bf16.msra.mxu0 0
        %2996 = vmatprep.subr.bf16.mxu0 0
        %2997 = vmatpush1.bf16.msra.mxu0 0
        %2998 = vmatprep.subr.bf16.mxu0 0
        %2999 = vmatpush1.bf16.msra.mxu0 0
        %3000 = vmatprep.subr.bf16.mxu0 0
        %3001 = vmatpush1.bf16.msra.mxu0 0
        %3002 = vmatprep.subr.bf16.mxu0 0
        %3003 = vmatpush1.bf16.msra.mxu0 0
        %3004 = vmatprep.subr.bf16.mxu0 0
        %3005 = vmatpush1.bf16.msra.mxu0 0
        %3006 = vmatprep.subr.bf16.mxu0 0
        %3007 = vmatpush1.bf16.msra.mxu0 0
        %3008 = vmatprep.mubr.bf16.mxu0 0
        %3009 = vmatmul.mubr.bf16.gmra.mrb[0].mxu0 %v2962
        %v3010 = vpop.f32.mrb[0].mxu0
        %v3011 = vadd.f32 0.0, %v3010
        %v3012 = vpop.f32.mrb[0].mxu0
        %v3013 = vpop.f32.mrb[0].mxu0
        %v3014 = vadd.f32 0.0, %v3013
        %v3015 = vpop.f32.mrb[0].mxu0
        %3016 = vmatprep.mubr.bf16.mxu0 0
        %3017 = vmatmul.mubr.bf16.gmra.mrb[0].mxu0 %v2965
        %v3018 = vpop.f32.mrb[0].mxu0
        %v3019 = vadd.f32 0.0, %v3018
        %v3020 = vpop.f32.mrb[0].mxu0
        %v3021 = vpop.f32.mrb[0].mxu0
        %v3022 = vadd.f32 0.0, %v3021
        %v3023 = vpop.f32.mrb[0].mxu0
        %3024 = vmatprep.mubr.bf16.mxu0 0
        %3025 = vmatmul.mubr.bf16.gmra.mrb[0].mxu0 %v2968
        %v3026 = vpop.f32.mrb[0].mxu0
        %v3027 = vadd.f32 0.0, %v3026
        %v3028 = vpop.f32.mrb[0].mxu0
        %v3029 = vpop.f32.mrb[0].mxu0
        %v3030 = vadd.f32 0.0, %v3029
        %v3031 = vpop.f32.mrb[0].mxu0
        %3032 = vmatprep.mubr.bf16.mxu0 0
        %3033 = vmatmul.mubr.bf16.gmra.mrb[0].mxu0 %v2971
        %v3034 = vpop.f32.mrb[0].mxu0
        %v3035 = vadd.f32 0.0, %v3034
        %v3036 = vpop.f32.mrb[0].mxu0
        %v3037 = vpop.f32.mrb[0].mxu0
        %v3038 = vadd.f32 0.0, %v3037
        %v3039 = vpop.f32.mrb[0].mxu0
        %3040 = vmatprep.mubr.bf16.mxu0 0
        %3041 = vmatmul.mubr.bf16.gmra.mrb[0].mxu0 %v2974
        %v3042 = vpop.f32.mrb[0].mxu0
        %v3043 = vadd.f32 0.0, %v3042
        %v3044 = vpop.f32.mrb[0].mxu0
        %v3045 = vpop.f32.mrb[0].mxu0
        %v3046 = vadd.f32 0.0, %v3045
        %v3047 = vpop.f32.mrb[0].mxu0
        %3048 = vdwg.mxu0
        %v3049 = vadd.f32 %v2890, %v3011
        %v3050 = vadd.f32 %v2891, %v3014
        %v3051 = vadd.f32 %v2892, %v3019
        %v3052 = vadd.f32 %v2893, %v3022
        %v3053 = vadd.f32 %v2894, %v3027
        %v3054 = vadd.f32 %v2895, %v3030
        %v3055 = vadd.f32 %v2896, %v3035
        %v3056 = vadd.f32 %v2897, %v3038
        %v3057 = vadd.f32 %v2898, %v3043
        %v3058 = vadd.f32 %v2899, %v3046
        %v3059 = vmul.f32 %v3049, %v197
        %v3060 = vmul.f32 %v3050, %v198
        %v3061 = vmul.f32 %v3051, %v199
        %v3062 = vmul.f32 %v3052, %v200
        %v3063 = vmul.f32 %v3053, %v201
        %v3064 = vmul.f32 %v3054, %v202
        %v3065 = vmul.f32 %v3055, %v203
        %v3066 = vmul.f32 %v3056, %v204
        %v3067 = vmul.f32 %v3057, %v205
        %v3068 = vmul.f32 %v3058, %v206
        %3069 = vadd.xlane.f32.xlu0 %v3059
        %v3070 = vpop.xlane.xlu0 %3069
        %3071 = vadd.xlane.f32.xlu0 %v3060
        %v3072 = vpop.xlane.xlu0 %3071
        %3073 = vadd.xlane.f32.xlu0 %v3061
        %v3074 = vpop.xlane.xlu0 %3073
        %3075 = vadd.xlane.f32.xlu0 %v3062
        %v3076 = vpop.xlane.xlu0 %3075
        %3077 = vadd.xlane.f32.xlu0 %v3063
        %v3078 = vpop.xlane.xlu0 %3077
        %3079 = vadd.xlane.f32.xlu0 %v3064
        %v3080 = vpop.xlane.xlu0 %3079
        %3081 = vadd.xlane.f32.xlu0 %v3065
        %v3082 = vpop.xlane.xlu0 %3081
        %3083 = vadd.xlane.f32.xlu0 %v3066
        %v3084 = vpop.xlane.xlu0 %3083
        %3085 = vadd.xlane.f32.xlu0 %v3067
        %v3086 = vpop.xlane.xlu0 %3085
        %3087 = vadd.xlane.f32.xlu0 %v3068
        %v3088 = vpop.xlane.xlu0 %3087
        %v3089 = vmul.f32 %v3059, %v3059
        %v3090 = vmul.f32 %v3060, %v3060
        %v3091 = vmul.f32 %v3061, %v3061
        %v3092 = vmul.f32 %v3062, %v3062
        %v3093 = vmul.f32 %v3063, %v3063
        %v3094 = vmul.f32 %v3064, %v3064
        %v3095 = vmul.f32 %v3065, %v3065
        %v3096 = vmul.f32 %v3066, %v3066
        %v3097 = vmul.f32 %v3067, %v3067
        %v3098 = vmul.f32 %v3068, %v3068
        %3099 = vadd.xlane.f32.xlu0 %v3089
        %v3100 = vpop.xlane.xlu0 %3099
        %3101 = vadd.xlane.f32.xlu0 %v3090
        %v3102 = vpop.xlane.xlu0 %3101
        %3103 = vadd.xlane.f32.xlu0 %v3091
        %v3104 = vpop.xlane.xlu0 %3103
        %3105 = vadd.xlane.f32.xlu0 %v3092
        %v3106 = vpop.xlane.xlu0 %3105
        %3107 = vadd.xlane.f32.xlu0 %v3093
        %v3108 = vpop.xlane.xlu0 %3107
        %3109 = vadd.xlane.f32.xlu0 %v3094
        %v3110 = vpop.xlane.xlu0 %3109
        %3111 = vadd.xlane.f32.xlu0 %v3095
        %v3112 = vpop.xlane.xlu0 %3111
        %3113 = vadd.xlane.f32.xlu0 %v3096
        %v3114 = vpop.xlane.xlu0 %3113
        %3115 = vadd.xlane.f32.xlu0 %v3097
        %v3116 = vpop.xlane.xlu0 %3115
        %3117 = vadd.xlane.f32.xlu0 %v3098
        %v3118 = vpop.xlane.xlu0 %3117
        %v3119 = vadd.f32 %v3070, %v3072
        %v3120 = vadd.f32 %v3100, %v3102
        %v3121 = vadd.f32 %v3119, %v3074
        %v3122 = vadd.f32 %v3120, %v3104
        %v3123 = vadd.f32 %v3121, %v3076
        %v3124 = vadd.f32 %v3122, %v3106
        %v3125 = vadd.f32 %v3123, %v3078
        %v3126 = vadd.f32 %v3124, %v3108
        %v3127 = vadd.f32 %v3125, %v3080
        %v3128 = vadd.f32 %v3126, %v3110
        %v3129 = vadd.f32 %v3127, %v3082
        %v3130 = vadd.f32 %v3128, %v3112
        %v3131 = vadd.f32 %v3129, %v3084
        %v3132 = vadd.f32 %v3130, %v3114
        %v3133 = vadd.f32 %v3131, %v3086
        %v3134 = vadd.f32 %v3132, %v3116
        %v3135 = vadd.f32 %v3133, %v3088
        %v3136 = vadd.f32 %v3134, %v3118
        %v3137 = vmul.f32 %v3135, 0.001953125
        %v3138 = vmul.f32 %v3136, 0.001953125
        %v3139 = vmul.f32 %v3137, %v3137
        %v3140 = vsub.f32 %v3138, %v3139
        %v3141 = vmax.f32 %v3140, 0.0
        %v3142 = vadd.f32 %v3141, 1e-05
        %v3143 = vrsqrt.pop %v3142
        %3145 = vset.pattern.permute.xlu0 0
        %3146 = vperm.xlu0 %3145, %v3137
        %v3147 = vpop.permute.xlu0 %3146
        %v3149 = vsub.f32 %v3059, %v3147
        %v3150 = vsub.f32 %v3060, %v3147
        %v3151 = vsub.f32 %v3061, %v3147
        %v3152 = vsub.f32 %v3062, %v3147
        %v3153 = vsub.f32 %v3063, %v3147
        %v3154 = vsub.f32 %v3064, %v3147
        %v3155 = vsub.f32 %v3065, %v3147
        %v3156 = vsub.f32 %v3066, %v3147
        %v3157 = vsub.f32 %v3067, %v3147
        %v3158 = vsub.f32 %v3068, %v3147
        %3160 = vset.pattern.permute.xlu0 0
        %3161 = vperm.xlu0 %3160, %v3143
        %v3162 = vpop.permute.xlu0 %3161
        %v3164 = vmul.f32 %v3149, %v3162
        %v3165 = vmul.f32 %v3150, %v3162
        %v3166 = vmul.f32 %v3151, %v3162
        %v3167 = vmul.f32 %v3152, %v3162
        %v3168 = vmul.f32 %v3153, %v3162
        %v3169 = vmul.f32 %v3154, %v3162
        %v3170 = vmul.f32 %v3155, %v3162
        %v3171 = vmul.f32 %v3156, %v3162
        %v3172 = vmul.f32 %v3157, %v3162
        %v3173 = vmul.f32 %v3158, %v3162
        %v3174 = vmax.f32 %v3164, 0.0
        %v3175 = vmax.f32 %v3165, 0.0
        %v3176 = vmax.f32 %v3166, 0.0
        %v3177 = vmax.f32 %v3167, 0.0
        %v3178 = vmax.f32 %v3168, 0.0
        %v3179 = vmax.f32 %v3169, 0.0
        %v3180 = vmax.f32 %v3170, 0.0
        %v3181 = vmax.f32 %v3171, 0.0
        %v3182 = vmax.f32 %v3172, 0.0
        %v3183 = vmax.f32 %v3173, 0.0
        %v3184 = vmul.f32 %v3174, %v197
        %v3185 = vmul.f32 %v3175, %v198
        %v3186 = vmul.f32 %v3176, %v199
        %v3187 = vmul.f32 %v3177, %v200
        %v3188 = vmul.f32 %v3178, %v201
        %v3189 = vmul.f32 %v3179, %v202
        %v3190 = vmul.f32 %v3180, %v203
        %v3191 = vmul.f32 %v3181, %v204
        %v3192 = vmul.f32 %v3182, %v205
        %v3193 = vmul.f32 %v3183, %v206
        %3194 = vst [vmem:[%s190] sm:$0xff] %v3184
        %3195 = vst [vmem:[%s190 + $0x8] sm:$0xff] %v3185
        %3196 = vst [vmem:[%s190 + $0x10] sm:$0xff] %v3186
        %3197 = vst [vmem:[%s190 + $0x18] sm:$0xff] %v3187
        %3198 = vst [vmem:[%s190 + $0x20] sm:$0xff] %v3188
        %3199 = vst [vmem:[%s190 + $0x28] sm:$0xff] %v3189
        %3200 = vst [vmem:[%s190 + $0x30] sm:$0xff] %v3190
        %3201 = vst [vmem:[%s190 + $0x38] sm:$0xff] %v3191
        %3202 = vst [vmem:[%s190 + $0x40] sm:$0xff] %v3192
        %3203 = vst [vmem:[%s190 + $0x48] sm:$0xff] %v3193
        %s3204 = sand.u32 %s115, 1
        %s3205 = scalar_lea.sflag [#allocation3], %s3204
        %s3206 = sand.u32 %s115, 1
        %s3207 = smul.addr %s3206, 80
        %s3208 = scalar_lea.vmem [#allocation2], %s3207
        // Predicated region
        $region37: #{tpu_custom_call.1} parent=35 // pred_check
          %p3209 = pneg %p125
        $region38: #{tpu_custom_call.1} parent=35 // pred_check_branch
          %3211 = sbr.rel (%p3209) target = $region40
        $region39: #{tpu_custom_call.1} parent=35 // pred_region
          %s3213 = ssub.s32 1280, 1280
          %3214 = vsyncadd %s3205, %s3213
          %s3215 = smul.addr %s18, 10
          %s3216 = smul.addr %s3215, 128
          %s3217 = scalar_lea.hbm %s4, %s3216
          %s3218 = sshll.u32 %s3208, 4
          %s3219 = int_to_ptr.vmem [resolvable:$true] %s3218
          %3224 = dma.vmem_to_hbm [thread:$0]  %s3219, 1280, %s3217, %s3205, 128, 128, 8
        $region40: #{tpu_custom_call.1} parent=35 // pred_fallthru
          _
      $region36: #{tpu_custom_call.1} parent=5 // pred_fallthru
        _
      %p3225 = scmp.le.s32.totalorder 2, %s13
      // Predicated region
      $region41: #{tpu_custom_call.1} parent=5 // pred_check
        %p3226 = pneg %p3225
      $region42: #{tpu_custom_call.1} parent=5 // pred_check_branch
        %3228 = sbr.rel (%p3226) target = $region44
      $region43: #{tpu_custom_call.1} parent=5 // pred_region
        %s3229 = ssub.s32 %s13, 2
        // Predicated region
        $region45: #{tpu_custom_call.1} parent=43 // pred_check
          %p3230 = pneg %p131
        $region46: #{tpu_custom_call.1} parent=43 // pred_check_branch
          %3232 = sbr.rel (%p3230) target = $region48
        $region47: #{tpu_custom_call.1} parent=43 // pred_region
          %s3233 = sand.u32 %s116, 1
          %s3234 = scalar_lea.sflag [#allocation3], %s3233
          %s3235 = sand.u32 %s116, 1
          %s3236 = smul.addr %s3235, 80
          %s3237 = scalar_lea.vmem [#allocation2], %s3236
          %3238 = dma.done %s3234, 1280
        $region48: #{tpu_custom_call.1} parent=43 // pred_fallthru
          _
      $region44: #{tpu_custom_call.1} parent=5 // pred_fallthru
        _
    $region6: #{tpu_custom_call.1} parent=1 // loop_footer
      %s17 = sadd.s32 1, %s13
    $region7: #{tpu_custom_call.1} parent=1 // loop_footer_branch
      %12 = sbr.rel target = $region3
    $region8: #{tpu_custom_call.1} parent=1 // loop_exit
      _
    %3239 = vsyncpa [#allocation3], 1
    %s3240 = scalar_lea.sflag [#allocation3], 1
    %3241 = vsyncpa %s3240, 1

</llo_original>
